<compile_context>
chip_gen: v7x
topology: tpu7x:2x2x1
jax: 0.10.0
libtpu: 0.0.40
codegen_flags: <defaults>
</compile_context>

<pallas_src>
import jax
import jax.numpy as jnp
from jax import lax
from jax.experimental import pallas as pl
from jax.experimental.pallas import tpu as pltpu

BOARD = 16                    # board_size
HIST = 4                      # history_length (= conv input channels)
COUT = 16                     # conv output channels
UNITS = 128                   # liquid layer units
HW = BOARD * BOARD            # 256 board positions
CIN9 = HIST * 9               # 36 im2col features per position
NPOL = BOARD * BOARD          # 256 policy logits
NHEAD = 384                   # policy(256) + value(1), lane-padded to 3*128


# ----------------------------------------------------------------------------
# Fused kernel: conv3x3 (channel-major matmul) + Mish -> liquid step -> heads
# One grid step == one batch element.
# ----------------------------------------------------------------------------
def go_fused_kernel(p_ref, wc_ref, bc_ref, wl_ref, bcomb_ref, tau_ref,
                    wh_ref, bh_ref, policy_ref, value_ref):
    # p_ref : (CIN9, HW) bf16 im2col patches for this batch element
    # wc_ref: (COUT, CIN9) bf16   bc_ref: (COUT, 1) f32
    # wl_ref: (COUT, HW, UNITS) bf16 (w_in rearranged so WL[c,p,u]=w_in[u,c*HW+p])
    # bcomb_ref, tau_ref: (1, UNITS) f32
    # wh_ref: (UNITS, NHEAD) bf16 (policy cols 0..255, value col 256, rest 0)
    # bh_ref: (1, NHEAD) f32
    # policy_ref: (1, NPOL) f32   value_ref: (1, 1) f32

    # --- 3x3 conv as a channel-major matmul: (COUT,36) @ (36,HW) -> (COUT,HW)
    conv = jnp.dot(wc_ref[...], p_ref[...], preferred_element_type=jnp.float32)
    conv = conv + bc_ref[...]                       # per-channel bias (lane bcast)

    # --- Mish(x) = x * tanh(softplus(x)), numerically stable softplus
    sp = jnp.maximum(conv, 0.0) + jnp.log(1.0 + jnp.exp(-jnp.abs(conv)))
    feat = conv * jnp.tanh(sp)                      # (COUT, HW) f32, (co,y,x) order

    # --- Liquid layer, single step from h0 = 0:
    #       h = tau * tanh(sum_{c,p} feat[c,p] * WL[c,p,:] + b_in + b_rec + bias)
    #     contraction decomposed over conv channels -> 16 rank-2 MXU matmuls
    acc = bcomb_ref[...]                            # (1, UNITS) f32
    for c in range(COUT):
        acc = acc + jnp.dot(feat[c:c + 1, :].astype(jnp.bfloat16), wl_ref[c],
                            preferred_element_type=jnp.float32)
    h = (tau_ref[...] * jnp.tanh(acc)).astype(jnp.bfloat16)   # (1, UNITS)

    # --- Fused policy + value heads: (1,UNITS) @ (UNITS,NHEAD)
    out = jnp.dot(h, wh_ref[...], preferred_element_type=jnp.float32) + bh_ref[...]
    policy_ref[...] = out[:, :NPOL]
    value_ref[...] = jnp.tanh(out[:, NPOL:NPOL + 1])


# ----------------------------------------------------------------------------
# One-time parameter preparation (layout permutes / transposes / bf16 casts)
# ----------------------------------------------------------------------------
def prepare_params(p):
    # WL[c, p, u] = w_in[u, c*HW + p]  (PyTorch (co, y, x) flatten order)
    wl = p["w_in"].reshape(UNITS, COUT, HW).transpose(1, 2, 0)       # (COUT,HW,UNITS)
    b_comb = (p["b_in"] + p["b_rec"] + p["liq_bias"]).reshape(1, UNITS)

    w_heads = jnp.zeros((UNITS, NHEAD), jnp.float32)
    w_heads = w_heads.at[:, :NPOL].set(p["w_p"].T)                   # policy columns
    w_heads = w_heads.at[:, NPOL].set(p["w_v"][0])                   # value column
    b_heads = jnp.zeros((1, NHEAD), jnp.float32)
    b_heads = b_heads.at[0, :NPOL].set(p["b_p"])
    b_heads = b_heads.at[0, NPOL].set(p["b_v"][0])

    return dict(
        w_conv=p["conv_w"].reshape(COUT, CIN9).astype(jnp.bfloat16), # (COUT, CIN9)
        b_conv=p["conv_b"].reshape(COUT, 1).astype(jnp.float32),     # (COUT, 1)
        wl=wl.astype(jnp.bfloat16),                                  # (COUT,HW,UNITS)
        b_comb=b_comb.astype(jnp.float32),                           # (1, UNITS)
        tau=p["tau"].reshape(1, UNITS).astype(jnp.float32),          # (1, UNITS)
        w_heads=w_heads.astype(jnp.bfloat16),                        # (UNITS, NHEAD)
        b_heads=b_heads,                                             # (1, NHEAD)
    )


# ----------------------------------------------------------------------------
# Forward pass wrapper
# ----------------------------------------------------------------------------
def go_model_forward(x, prep, valid_moves_mask=None):
    B, cin, bs, _ = x.shape
    assert cin == HIST, "Input channels must match history_length"
    assert bs == BOARD, "Board size mismatch with kernel constants"

    # im2col, channel-major patches [B, CIN9, HW] (data movement only).
    xpad = jnp.pad(x, ((0, 0), (0, 0), (1, 1), (1, 1)))
    taps = jnp.stack([xpad[:, :, ky:ky + bs, kx:kx + bs]
                      for ky in range(3) for kx in range(3)], axis=2)  # (B,HIST,9,bs,bs)
    patches = taps.reshape(B, CIN9, HW).astype(jnp.bfloat16)

    flops = 2 * B * (COUT * CIN9 * HW + COUT * HW * UNITS + UNITS * NHEAD)
    transcendentals = B * (2 * COUT * HW + UNITS + 1)
    weight_bytes = (prep["w_conv"].size * 2 + prep["b_conv"].size * 4
                    + prep["wl"].size * 2 + prep["b_comb"].size * 4
                    + prep["tau"].size * 4 + prep["w_heads"].size * 2
                    + prep["b_heads"].size * 4)
    act_bytes = B * (CIN9 * HW * 2 + (NPOL + 1) * 4)
    cost = pl.CostEstimate(flops=int(flops), transcendentals=int(transcendentals),
                           bytes_accessed=int(weight_bytes + act_bytes))

    policy3, value3 = pl.pallas_call(
        go_fused_kernel,
        out_shape=(jax.ShapeDtypeStruct((B, 1, NPOL), jnp.float32),
                   jax.ShapeDtypeStruct((B, 1, 1), jnp.float32)),
        grid=(B,),
        in_specs=[
            pl.BlockSpec((None, CIN9, HW), lambda b: (b, 0, 0)),     # patches (per b)
            pl.BlockSpec((COUT, CIN9), lambda b: (0, 0)),            # conv weights
            pl.BlockSpec((COUT, 1), lambda b: (0, 0)),               # conv bias
            pl.BlockSpec((COUT, HW, UNITS), lambda b: (0, 0, 0)),    # liquid weights
            pl.BlockSpec((1, UNITS), lambda b: (0, 0)),              # combined bias
            pl.BlockSpec((1, UNITS), lambda b: (0, 0)),              # tau
            pl.BlockSpec((UNITS, NHEAD), lambda b: (0, 0)),          # heads weights
            pl.BlockSpec((1, NHEAD), lambda b: (0, 0)),              # heads bias
        ],
        out_specs=(pl.BlockSpec((None, 1, NPOL), lambda b: (b, 0, 0)),
                   pl.BlockSpec((None, 1, 1), lambda b: (b, 0, 0))),
        compiler_params=pltpu.CompilerParams(dimension_semantics=("parallel",)),
        cost_estimate=cost,
    )(patches, prep["w_conv"], prep["b_conv"], prep["wl"],
      prep["b_comb"], prep["tau"], prep["w_heads"], prep["b_heads"])

    policy = policy3.reshape(B, NPOL)
    value = value3.reshape(B, 1)
    if valid_moves_mask is not None:                # masked_fill(~mask, -1e9)
        policy = jnp.where(valid_moves_mask, policy, -1e9)
    return policy, value


# ----------------------------------------------------------------------------
# Pure-JAX f32 reference (for correctness check)
# ----------------------------------------------------------------------------
def reference_forward(x, p, valid_moves_mask=None):
    B = x.shape[0]
    y = lax.conv_general_dilated(x, p["conv_w"], (1, 1), ((1, 1), (1, 1)),
                                 dimension_numbers=("NCHW", "OIHW", "NCHW"))
    y = y + p["conv_b"][None, :, None, None]
    sp = jnp.maximum(y, 0.0) + jnp.log(1.0 + jnp.exp(-jnp.abs(y)))
    y = y * jnp.tanh(sp)                                        # Mish
    feat = y.reshape(B, -1)                                     # (co, y, x) order
    pre = feat @ p["w_in"].T + p["b_in"] + p["b_rec"] + p["liq_bias"]
    h = p["tau"] * jnp.tanh(pre)
    policy = h @ p["w_p"].T + p["b_p"]
    if valid_moves_mask is not None:
        policy = jnp.where(valid_moves_mask, policy, -1e9)
    value = jnp.tanh(h @ p["w_v"].T + p["b_v"])
    return policy, value


def init_params(key):
    ks = jax.random.split(key, 8)
    feat_size = COUT * BOARD * BOARD
    # NOTE: the LiquidLayer recurrent weight matrix (128x128) is never used in
    # this forward pass (single time step with h0 = 0); only its bias matters.
    return dict(
        conv_w=0.05 * jax.random.normal(ks[0], (COUT, HIST, 3, 3), jnp.float32),
        conv_b=0.05 * jax.random.normal(ks[1], (COUT,), jnp.float32),
        tau=jax.random.normal(ks[2], (UNITS,), jnp.float32),          # time_constants
        w_in=0.02 * jax.random.normal(ks[3], (UNITS, feat_size), jnp.float32),
        b_in=0.02 * jax.random.normal(ks[4], (UNITS,), jnp.float32),
        b_rec=0.02 * jax.random.normal(ks[5], (UNITS,), jnp.float32),
        liq_bias=jnp.zeros((UNITS,), jnp.float32),
        w_p=0.05 * jax.random.normal(ks[6], (BOARD * BOARD, UNITS), jnp.float32),
        b_p=jnp.zeros((BOARD * BOARD,), jnp.float32),
        w_v=0.05 * jax.random.normal(ks[7], (1, UNITS), jnp.float32),
        b_v=jnp.zeros((1,), jnp.float32),
    )


if __name__ == "__main__":
    key = jax.random.PRNGKey(0)
    pkey, xkey = jax.random.split(key)
    params = init_params(pkey)
    prep = jax.tree_util.tree_map(jax.block_until_ready, prepare_params(params))
    x = jax.random.normal(xkey, (2, HIST, BOARD, BOARD), jnp.float32)

    fwd = jax.jit(go_model_forward)
    policy, value = fwd(x, prep)
    jax.block_until_ready((policy, value))

    assert policy.shape == (2, BOARD * BOARD) and value.shape == (2, 1)

    ref_p, ref_v = reference_forward(x, params)
    err_p = float(jnp.max(jnp.abs(policy - ref_p)))
    err_v = float(jnp.max(jnp.abs(value - ref_v)))
    # bf16 MXU inputs vs f32 reference -> expect ~1e-3 level differences.
    assert err_p < 5e-2 and err_v < 5e-2, (err_p, err_v)

    print("KERNEL_OK")
</pallas_src>

<mosaic_0001>
module attributes {stable_mosaic.version = 11 : i64} {
  func.func @go_fused_kernel(%arg0: i32, %arg1: memref<1x36x256xbf16, #tpu.memory_space<vmem>>, %arg2: memref<16x36xbf16, #tpu.memory_space<vmem>>, %arg3: memref<16x1xf32, #tpu.memory_space<vmem>>, %arg4: memref<16x256x128xbf16, #tpu.memory_space<vmem>>, %arg5: memref<1x128xf32, #tpu.memory_space<vmem>>, %arg6: memref<1x128xf32, #tpu.memory_space<vmem>>, %arg7: memref<128x384xbf16, #tpu.memory_space<vmem>>, %arg8: memref<1x384xf32, #tpu.memory_space<vmem>>, %arg9: memref<1x1x256xf32, #tpu.memory_space<vmem>>, %arg10: memref<1x1x1xf32, #tpu.memory_space<vmem>>) attributes {dimension_semantics = [#tpu.dimension_semantics<parallel>], iteration_bounds = array<i64: 2>, scalar_prefetch = 0 : i64, scratch_operands = 0 : i64, tpu.core_type = #tpu.core_type<tc>, window_params = [{transform_indices = @transform_0, window_bounds = array<i64: 1, 36, 256>}, {pipeline_mode = #tpu.pipeline_mode<synchronous>, transform_indices = @transform_1, window_bounds = array<i64: 16, 36>}, {pipeline_mode = #tpu.pipeline_mode<synchronous>, transform_indices = @transform_2, window_bounds = array<i64: 16, 1>}, {pipeline_mode = #tpu.pipeline_mode<synchronous>, transform_indices = @transform_3, window_bounds = array<i64: 16, 256, 128>}, {pipeline_mode = #tpu.pipeline_mode<synchronous>, transform_indices = @transform_4, window_bounds = array<i64: 1, 128>}, {pipeline_mode = #tpu.pipeline_mode<synchronous>, transform_indices = @transform_5, window_bounds = array<i64: 1, 128>}, {pipeline_mode = #tpu.pipeline_mode<synchronous>, transform_indices = @transform_6, window_bounds = array<i64: 128, 384>}, {pipeline_mode = #tpu.pipeline_mode<synchronous>, transform_indices = @transform_7, window_bounds = array<i64: 1, 384>}, {transform_indices = @transform_8, window_bounds = array<i64: 1, 1, 256>}, {transform_indices = @transform_9, window_bounds = array<i64: 1, 1, 1>}]} {
    %c0 = arith.constant 0 : index
    %c0_0 = arith.constant 0 : index
    %0 = vector.load %arg2[%c0, %c0_0] : memref<16x36xbf16, #tpu.memory_space<vmem>>, vector<16x36xbf16>
    %c0_1 = arith.constant 0 : index
    %c0_2 = arith.constant 0 : index
    %c0_3 = arith.constant 0 : index
    %1 = vector.load %arg1[%c0_1, %c0_2, %c0_3] : memref<1x36x256xbf16, #tpu.memory_space<vmem>>, vector<1x36x256xbf16>
    %2 = vector.shape_cast %1 : vector<1x36x256xbf16> to vector<36x256xbf16>
    %cst = arith.constant dense<0.000000e+00> : vector<16x256xf32>
    %3 = tpu.matmul %0, %2, %cst {dimension_numbers = #tpu.dot_dimension_numbers<[1], [0], [0], [1], [0, 0, 1, 1], [], []>} : vector<16x36xbf16>, vector<36x256xbf16>, vector<16x256xf32> -> vector<16x256xf32>
    %c0_4 = arith.constant 0 : index
    %c0_5 = arith.constant 0 : index
    %4 = vector.load %arg3[%c0_4, %c0_5] : memref<16x1xf32, #tpu.memory_space<vmem>>, vector<16x1xf32>
    %5 = vector.broadcast %4 : vector<16x1xf32> to vector<16x256xf32>
    %6 = arith.addf %3, %5 : vector<16x256xf32>
    %cst_6 = arith.constant 0.000000e+00 : f32
    %7 = vector.broadcast %cst_6 : f32 to vector<16x256xf32>
    %8 = arith.maximumf %6, %7 : vector<16x256xf32>
    %9 = math.absf %6 : vector<16x256xf32>
    %cst_7 = arith.constant 0.000000e+00 : f32
    %10 = vector.broadcast %cst_7 : f32 to vector<16x256xf32>
    %11 = arith.subf %10, %9 : vector<16x256xf32>
    %12 = math.exp %11 : vector<16x256xf32>
    %cst_8 = arith.constant 1.000000e+00 : f32
    %13 = vector.broadcast %cst_8 : f32 to vector<16x256xf32>
    %14 = arith.addf %13, %12 : vector<16x256xf32>
    %15 = math.log %14 : vector<16x256xf32>
    %16 = arith.addf %8, %15 : vector<16x256xf32>
    %17 = math.tanh %16 : vector<16x256xf32>
    %18 = arith.mulf %6, %17 : vector<16x256xf32>
    %c0_9 = arith.constant 0 : index
    %c0_10 = arith.constant 0 : index
    %19 = vector.load %arg5[%c0_9, %c0_10] : memref<1x128xf32, #tpu.memory_space<vmem>>, vector<1x128xf32>
    %20 = vector.extract_strided_slice %18 {offsets = [0, 0], sizes = [1, 256], strides = [1, 1]} : vector<16x256xf32> to vector<1x256xf32>
    %21 = arith.truncf %20 : vector<1x256xf32> to vector<1x256xbf16>
    %c0_11 = arith.constant 0 : index
    %c0_12 = arith.constant 0 : index
    %c0_13 = arith.constant 0 : index
    %22 = vector.load %arg4[%c0_11, %c0_12, %c0_13] : memref<16x256x128xbf16, #tpu.memory_space<vmem>>, vector<1x256x128xbf16>
    %23 = vector.shape_cast %22 : vector<1x256x128xbf16> to vector<256x128xbf16>
    %cst_14 = arith.constant dense<0.000000e+00> : vector<1x128xf32>
    %24 = tpu.matmul %21, %23, %cst_14 {dimension_numbers = #tpu.dot_dimension_numbers<[1], [0], [0], [1], [0, 0, 1, 1], [], []>} : vector<1x256xbf16>, vector<256x128xbf16>, vector<1x128xf32> -> vector<1x128xf32>
    %25 = arith.addf %19, %24 : vector<1x128xf32>
    %26 = vector.extract_strided_slice %18 {offsets = [1, 0], sizes = [1, 256], strides = [1, 1]} : vector<16x256xf32> to vector<1x256xf32>
    %27 = arith.truncf %26 : vector<1x256xf32> to vector<1x256xbf16>
    %c1 = arith.constant 1 : index
    %c0_15 = arith.constant 0 : index
    %c0_16 = arith.constant 0 : index
    %28 = vector.load %arg4[%c1, %c0_15, %c0_16] : memref<16x256x128xbf16, #tpu.memory_space<vmem>>, vector<1x256x128xbf16>
    %29 = vector.shape_cast %28 : vector<1x256x128xbf16> to vector<256x128xbf16>
    %cst_17 = arith.constant dense<0.000000e+00> : vector<1x128xf32>
    %30 = tpu.matmul %27, %29, %cst_17 {dimension_numbers = #tpu.dot_dimension_numbers<[1], [0], [0], [1], [0, 0, 1, 1], [], []>} : vector<1x256xbf16>, vector<256x128xbf16>, vector<1x128xf32> -> vector<1x128xf32>
    %31 = arith.addf %25, %30 : vector<1x128xf32>
    %32 = vector.extract_strided_slice %18 {offsets = [2, 0], sizes = [1, 256], strides = [1, 1]} : vector<16x256xf32> to vector<1x256xf32>
    %33 = arith.truncf %32 : vector<1x256xf32> to vector<1x256xbf16>
    %c2 = arith.constant 2 : index
    %c0_18 = arith.constant 0 : index
    %c0_19 = arith.constant 0 : index
    %34 = vector.load %arg4[%c2, %c0_18, %c0_19] : memref<16x256x128xbf16, #tpu.memory_space<vmem>>, vector<1x256x128xbf16>
    %35 = vector.shape_cast %34 : vector<1x256x128xbf16> to vector<256x128xbf16>
    %cst_20 = arith.constant dense<0.000000e+00> : vector<1x128xf32>
    %36 = tpu.matmul %33, %35, %cst_20 {dimension_numbers = #tpu.dot_dimension_numbers<[1], [0], [0], [1], [0, 0, 1, 1], [], []>} : vector<1x256xbf16>, vector<256x128xbf16>, vector<1x128xf32> -> vector<1x128xf32>
    %37 = arith.addf %31, %36 : vector<1x128xf32>
    %38 = vector.extract_strided_slice %18 {offsets = [3, 0], sizes = [1, 256], strides = [1, 1]} : vector<16x256xf32> to vector<1x256xf32>
    %39 = arith.truncf %38 : vector<1x256xf32> to vector<1x256xbf16>
    %c3 = arith.constant 3 : index
    %c0_21 = arith.constant 0 : index
    %c0_22 = arith.constant 0 : index
    %40 = vector.load %arg4[%c3, %c0_21, %c0_22] : memref<16x256x128xbf16, #tpu.memory_space<vmem>>, vector<1x256x128xbf16>
    %41 = vector.shape_cast %40 : vector<1x256x128xbf16> to vector<256x128xbf16>
    %cst_23 = arith.constant dense<0.000000e+00> : vector<1x128xf32>
    %42 = tpu.matmul %39, %41, %cst_23 {dimension_numbers = #tpu.dot_dimension_numbers<[1], [0], [0], [1], [0, 0, 1, 1], [], []>} : vector<1x256xbf16>, vector<256x128xbf16>, vector<1x128xf32> -> vector<1x128xf32>
    %43 = arith.addf %37, %42 : vector<1x128xf32>
    %44 = vector.extract_strided_slice %18 {offsets = [4, 0], sizes = [1, 256], strides = [1, 1]} : vector<16x256xf32> to vector<1x256xf32>
    %45 = arith.truncf %44 : vector<1x256xf32> to vector<1x256xbf16>
    %c4 = arith.constant 4 : index
    %c0_24 = arith.constant 0 : index
    %c0_25 = arith.constant 0 : index
    %46 = vector.load %arg4[%c4, %c0_24, %c0_25] : memref<16x256x128xbf16, #tpu.memory_space<vmem>>, vector<1x256x128xbf16>
    %47 = vector.shape_cast %46 : vector<1x256x128xbf16> to vector<256x128xbf16>
    %cst_26 = arith.constant dense<0.000000e+00> : vector<1x128xf32>
    %48 = tpu.matmul %45, %47, %cst_26 {dimension_numbers = #tpu.dot_dimension_numbers<[1], [0], [0], [1], [0, 0, 1, 1], [], []>} : vector<1x256xbf16>, vector<256x128xbf16>, vector<1x128xf32> -> vector<1x128xf32>
    %49 = arith.addf %43, %48 : vector<1x128xf32>
    %50 = vector.extract_strided_slice %18 {offsets = [5, 0], sizes = [1, 256], strides = [1, 1]} : vector<16x256xf32> to vector<1x256xf32>
    %51 = arith.truncf %50 : vector<1x256xf32> to vector<1x256xbf16>
    %c5 = arith.constant 5 : index
    %c0_27 = arith.constant 0 : index
    %c0_28 = arith.constant 0 : index
    %52 = vector.load %arg4[%c5, %c0_27, %c0_28] : memref<16x256x128xbf16, #tpu.memory_space<vmem>>, vector<1x256x128xbf16>
    %53 = vector.shape_cast %52 : vector<1x256x128xbf16> to vector<256x128xbf16>
    %cst_29 = arith.constant dense<0.000000e+00> : vector<1x128xf32>
    %54 = tpu.matmul %51, %53, %cst_29 {dimension_numbers = #tpu.dot_dimension_numbers<[1], [0], [0], [1], [0, 0, 1, 1], [], []>} : vector<1x256xbf16>, vector<256x128xbf16>, vector<1x128xf32> -> vector<1x128xf32>
    %55 = arith.addf %49, %54 : vector<1x128xf32>
    %56 = vector.extract_strided_slice %18 {offsets = [6, 0], sizes = [1, 256], strides = [1, 1]} : vector<16x256xf32> to vector<1x256xf32>
    %57 = arith.truncf %56 : vector<1x256xf32> to vector<1x256xbf16>
    %c6 = arith.constant 6 : index
    %c0_30 = arith.constant 0 : index
    %c0_31 = arith.constant 0 : index
    %58 = vector.load %arg4[%c6, %c0_30, %c0_31] : memref<16x256x128xbf16, #tpu.memory_space<vmem>>, vector<1x256x128xbf16>
    %59 = vector.shape_cast %58 : vector<1x256x128xbf16> to vector<256x128xbf16>
    %cst_32 = arith.constant dense<0.000000e+00> : vector<1x128xf32>
    %60 = tpu.matmul %57, %59, %cst_32 {dimension_numbers = #tpu.dot_dimension_numbers<[1], [0], [0], [1], [0, 0, 1, 1], [], []>} : vector<1x256xbf16>, vector<256x128xbf16>, vector<1x128xf32> -> vector<1x128xf32>
    %61 = arith.addf %55, %60 : vector<1x128xf32>
    %62 = vector.extract_strided_slice %18 {offsets = [7, 0], sizes = [1, 256], strides = [1, 1]} : vector<16x256xf32> to vector<1x256xf32>
    %63 = arith.truncf %62 : vector<1x256xf32> to vector<1x256xbf16>
    %c7 = arith.constant 7 : index
    %c0_33 = arith.constant 0 : index
    %c0_34 = arith.constant 0 : index
    %64 = vector.load %arg4[%c7, %c0_33, %c0_34] : memref<16x256x128xbf16, #tpu.memory_space<vmem>>, vector<1x256x128xbf16>
    %65 = vector.shape_cast %64 : vector<1x256x128xbf16> to vector<256x128xbf16>
    %cst_35 = arith.constant dense<0.000000e+00> : vector<1x128xf32>
    %66 = tpu.matmul %63, %65, %cst_35 {dimension_numbers = #tpu.dot_dimension_numbers<[1], [0], [0], [1], [0, 0, 1, 1], [], []>} : vector<1x256xbf16>, vector<256x128xbf16>, vector<1x128xf32> -> vector<1x128xf32>
    %67 = arith.addf %61, %66 : vector<1x128xf32>
    %68 = vector.extract_strided_slice %18 {offsets = [8, 0], sizes = [1, 256], strides = [1, 1]} : vector<16x256xf32> to vector<1x256xf32>
    %69 = arith.truncf %68 : vector<1x256xf32> to vector<1x256xbf16>
    %c8 = arith.constant 8 : index
    %c0_36 = arith.constant 0 : index
    %c0_37 = arith.constant 0 : index
    %70 = vector.load %arg4[%c8, %c0_36, %c0_37] : memref<16x256x128xbf16, #tpu.memory_space<vmem>>, vector<1x256x128xbf16>
    %71 = vector.shape_cast %70 : vector<1x256x128xbf16> to vector<256x128xbf16>
    %cst_38 = arith.constant dense<0.000000e+00> : vector<1x128xf32>
    %72 = tpu.matmul %69, %71, %cst_38 {dimension_numbers = #tpu.dot_dimension_numbers<[1], [0], [0], [1], [0, 0, 1, 1], [], []>} : vector<1x256xbf16>, vector<256x128xbf16>, vector<1x128xf32> -> vector<1x128xf32>
    %73 = arith.addf %67, %72 : vector<1x128xf32>
    %74 = vector.extract_strided_slice %18 {offsets = [9, 0], sizes = [1, 256], strides = [1, 1]} : vector<16x256xf32> to vector<1x256xf32>
    %75 = arith.truncf %74 : vector<1x256xf32> to vector<1x256xbf16>
    %c9 = arith.constant 9 : index
    %c0_39 = arith.constant 0 : index
    %c0_40 = arith.constant 0 : index
    %76 = vector.load %arg4[%c9, %c0_39, %c0_40] : memref<16x256x128xbf16, #tpu.memory_space<vmem>>, vector<1x256x128xbf16>
    %77 = vector.shape_cast %76 : vector<1x256x128xbf16> to vector<256x128xbf16>
    %cst_41 = arith.constant dense<0.000000e+00> : vector<1x128xf32>
    %78 = tpu.matmul %75, %77, %cst_41 {dimension_numbers = #tpu.dot_dimension_numbers<[1], [0], [0], [1], [0, 0, 1, 1], [], []>} : vector<1x256xbf16>, vector<256x128xbf16>, vector<1x128xf32> -> vector<1x128xf32>
    %79 = arith.addf %73, %78 : vector<1x128xf32>
    %80 = vector.extract_strided_slice %18 {offsets = [10, 0], sizes = [1, 256], strides = [1, 1]} : vector<16x256xf32> to vector<1x256xf32>
    %81 = arith.truncf %80 : vector<1x256xf32> to vector<1x256xbf16>
    %c10 = arith.constant 10 : index
    %c0_42 = arith.constant 0 : index
    %c0_43 = arith.constant 0 : index
    %82 = vector.load %arg4[%c10, %c0_42, %c0_43] : memref<16x256x128xbf16, #tpu.memory_space<vmem>>, vector<1x256x128xbf16>
    %83 = vector.shape_cast %82 : vector<1x256x128xbf16> to vector<256x128xbf16>
    %cst_44 = arith.constant dense<0.000000e+00> : vector<1x128xf32>
    %84 = tpu.matmul %81, %83, %cst_44 {dimension_numbers = #tpu.dot_dimension_numbers<[1], [0], [0], [1], [0, 0, 1, 1], [], []>} : vector<1x256xbf16>, vector<256x128xbf16>, vector<1x128xf32> -> vector<1x128xf32>
    %85 = arith.addf %79, %84 : vector<1x128xf32>
    %86 = vector.extract_strided_slice %18 {offsets = [11, 0], sizes = [1, 256], strides = [1, 1]} : vector<16x256xf32> to vector<1x256xf32>
    %87 = arith.truncf %86 : vector<1x256xf32> to vector<1x256xbf16>
    %c11 = arith.constant 11 : index
    %c0_45 = arith.constant 0 : index
    %c0_46 = arith.constant 0 : index
    %88 = vector.load %arg4[%c11, %c0_45, %c0_46] : memref<16x256x128xbf16, #tpu.memory_space<vmem>>, vector<1x256x128xbf16>
    %89 = vector.shape_cast %88 : vector<1x256x128xbf16> to vector<256x128xbf16>
    %cst_47 = arith.constant dense<0.000000e+00> : vector<1x128xf32>
    %90 = tpu.matmul %87, %89, %cst_47 {dimension_numbers = #tpu.dot_dimension_numbers<[1], [0], [0], [1], [0, 0, 1, 1], [], []>} : vector<1x256xbf16>, vector<256x128xbf16>, vector<1x128xf32> -> vector<1x128xf32>
    %91 = arith.addf %85, %90 : vector<1x128xf32>
    %92 = vector.extract_strided_slice %18 {offsets = [12, 0], sizes = [1, 256], strides = [1, 1]} : vector<16x256xf32> to vector<1x256xf32>
    %93 = arith.truncf %92 : vector<1x256xf32> to vector<1x256xbf16>
    %c12 = arith.constant 12 : index
    %c0_48 = arith.constant 0 : index
    %c0_49 = arith.constant 0 : index
    %94 = vector.load %arg4[%c12, %c0_48, %c0_49] : memref<16x256x128xbf16, #tpu.memory_space<vmem>>, vector<1x256x128xbf16>
    %95 = vector.shape_cast %94 : vector<1x256x128xbf16> to vector<256x128xbf16>
    %cst_50 = arith.constant dense<0.000000e+00> : vector<1x128xf32>
    %96 = tpu.matmul %93, %95, %cst_50 {dimension_numbers = #tpu.dot_dimension_numbers<[1], [0], [0], [1], [0, 0, 1, 1], [], []>} : vector<1x256xbf16>, vector<256x128xbf16>, vector<1x128xf32> -> vector<1x128xf32>
    %97 = arith.addf %91, %96 : vector<1x128xf32>
    %98 = vector.extract_strided_slice %18 {offsets = [13, 0], sizes = [1, 256], strides = [1, 1]} : vector<16x256xf32> to vector<1x256xf32>
    %99 = arith.truncf %98 : vector<1x256xf32> to vector<1x256xbf16>
    %c13 = arith.constant 13 : index
    %c0_51 = arith.constant 0 : index
    %c0_52 = arith.constant 0 : index
    %100 = vector.load %arg4[%c13, %c0_51, %c0_52] : memref<16x256x128xbf16, #tpu.memory_space<vmem>>, vector<1x256x128xbf16>
    %101 = vector.shape_cast %100 : vector<1x256x128xbf16> to vector<256x128xbf16>
    %cst_53 = arith.constant dense<0.000000e+00> : vector<1x128xf32>
    %102 = tpu.matmul %99, %101, %cst_53 {dimension_numbers = #tpu.dot_dimension_numbers<[1], [0], [0], [1], [0, 0, 1, 1], [], []>} : vector<1x256xbf16>, vector<256x128xbf16>, vector<1x128xf32> -> vector<1x128xf32>
    %103 = arith.addf %97, %102 : vector<1x128xf32>
    %104 = vector.extract_strided_slice %18 {offsets = [14, 0], sizes = [1, 256], strides = [1, 1]} : vector<16x256xf32> to vector<1x256xf32>
    %105 = arith.truncf %104 : vector<1x256xf32> to vector<1x256xbf16>
    %c14 = arith.constant 14 : index
    %c0_54 = arith.constant 0 : index
    %c0_55 = arith.constant 0 : index
    %106 = vector.load %arg4[%c14, %c0_54, %c0_55] : memref<16x256x128xbf16, #tpu.memory_space<vmem>>, vector<1x256x128xbf16>
    %107 = vector.shape_cast %106 : vector<1x256x128xbf16> to vector<256x128xbf16>
    %cst_56 = arith.constant dense<0.000000e+00> : vector<1x128xf32>
    %108 = tpu.matmul %105, %107, %cst_56 {dimension_numbers = #tpu.dot_dimension_numbers<[1], [0], [0], [1], [0, 0, 1, 1], [], []>} : vector<1x256xbf16>, vector<256x128xbf16>, vector<1x128xf32> -> vector<1x128xf32>
    %109 = arith.addf %103, %108 : vector<1x128xf32>
    %110 = vector.extract_strided_slice %18 {offsets = [15, 0], sizes = [1, 256], strides = [1, 1]} : vector<16x256xf32> to vector<1x256xf32>
    %111 = arith.truncf %110 : vector<1x256xf32> to vector<1x256xbf16>
    %c15 = arith.constant 15 : index
    %c0_57 = arith.constant 0 : index
    %c0_58 = arith.constant 0 : index
    %112 = vector.load %arg4[%c15, %c0_57, %c0_58] : memref<16x256x128xbf16, #tpu.memory_space<vmem>>, vector<1x256x128xbf16>
    %113 = vector.shape_cast %112 : vector<1x256x128xbf16> to vector<256x128xbf16>
    %cst_59 = arith.constant dense<0.000000e+00> : vector<1x128xf32>
    %114 = tpu.matmul %111, %113, %cst_59 {dimension_numbers = #tpu.dot_dimension_numbers<[1], [0], [0], [1], [0, 0, 1, 1], [], []>} : vector<1x256xbf16>, vector<256x128xbf16>, vector<1x128xf32> -> vector<1x128xf32>
    %115 = arith.addf %109, %114 : vector<1x128xf32>
    %c0_60 = arith.constant 0 : index
    %c0_61 = arith.constant 0 : index
    %116 = vector.load %arg6[%c0_60, %c0_61] : memref<1x128xf32, #tpu.memory_space<vmem>>, vector<1x128xf32>
    %117 = math.tanh %115 : vector<1x128xf32>
    %118 = arith.mulf %116, %117 : vector<1x128xf32>
    %119 = arith.truncf %118 : vector<1x128xf32> to vector<1x128xbf16>
    %c0_62 = arith.constant 0 : index
    %c0_63 = arith.constant 0 : index
    %120 = vector.load %arg7[%c0_62, %c0_63] : memref<128x384xbf16, #tpu.memory_space<vmem>>, vector<128x384xbf16>
    %cst_64 = arith.constant dense<0.000000e+00> : vector<1x384xf32>
    %121 = tpu.matmul %119, %120, %cst_64 {dimension_numbers = #tpu.dot_dimension_numbers<[1], [0], [0], [1], [0, 0, 1, 1], [], []>} : vector<1x128xbf16>, vector<128x384xbf16>, vector<1x384xf32> -> vector<1x384xf32>
    %c0_65 = arith.constant 0 : index
    %c0_66 = arith.constant 0 : index
    %122 = vector.load %arg8[%c0_65, %c0_66] : memref<1x384xf32, #tpu.memory_space<vmem>>, vector<1x384xf32>
    %123 = arith.addf %121, %122 : vector<1x384xf32>
    %124 = vector.extract_strided_slice %123 {offsets = [0, 0], sizes = [1, 256], strides = [1, 1]} : vector<1x384xf32> to vector<1x256xf32>
    %c0_67 = arith.constant 0 : index
    %c0_68 = arith.constant 0 : index
    %c0_69 = arith.constant 0 : index
    %125 = vector.load %arg9[%c0_67, %c0_68, %c0_69] : memref<1x1x256xf32, #tpu.memory_space<vmem>>, vector<1x1x256xf32>
    %126 = vector.shape_cast %125 : vector<1x1x256xf32> to vector<1x256xf32>
    %127 = vector.shape_cast %124 : vector<1x256xf32> to vector<1x1x256xf32>
    tpu.vector_store %arg9[%c0_67, %c0_68, %c0_69], %127 {strides = array<i32>} : memref<1x1x256xf32, #tpu.memory_space<vmem>>, vector<1x1x256xf32>,
    %128 = vector.extract_strided_slice %123 {offsets = [0, 256], sizes = [1, 1], strides = [1, 1]} : vector<1x384xf32> to vector<1x1xf32>
    %129 = math.tanh %128 : vector<1x1xf32>
    %c0_70 = arith.constant 0 : index
    %c0_71 = arith.constant 0 : index
    %c0_72 = arith.constant 0 : index
    %130 = vector.load %arg10[%c0_70, %c0_71, %c0_72] : memref<1x1x1xf32, #tpu.memory_space<vmem>>, vector<1x1x1xf32>
    %131 = vector.shape_cast %130 : vector<1x1x1xf32> to vector<1x1xf32>
    %132 = vector.shape_cast %129 : vector<1x1xf32> to vector<1x1x1xf32>
    tpu.vector_store %arg10[%c0_70, %c0_71, %c0_72], %132 {strides = array<i32>} : memref<1x1x1xf32, #tpu.memory_space<vmem>>, vector<1x1x1xf32>,
    return
  }
  func.func @transform_0(%arg0: i32) -> (i32, i32, i32) {
    %c0_i32 = arith.constant 0 : i32
    %c0_i32_0 = arith.constant 0 : i32
    %c0_i32_1 = arith.constant 0 : i32
    return %arg0, %c0_i32, %c0_i32_0 : i32, i32, i32
  }
  func.func @transform_1(%arg0: i32) -> (i32, i32) {
    %c0_i32 = arith.constant 0 : i32
    %c0_i32_0 = arith.constant 0 : i32
    %c0_i32_1 = arith.constant 0 : i32
    return %c0_i32, %c0_i32_0 : i32, i32
  }
  func.func @transform_2(%arg0: i32) -> (i32, i32) {
    %c0_i32 = arith.constant 0 : i32
    %c0_i32_0 = arith.constant 0 : i32
    %c0_i32_1 = arith.constant 0 : i32
    return %c0_i32, %c0_i32_0 : i32, i32
  }
  func.func @transform_3(%arg0: i32) -> (i32, i32, i32) {
    %c0_i32 = arith.constant 0 : i32
    %c0_i32_0 = arith.constant 0 : i32
    %c0_i32_1 = arith.constant 0 : i32
    %c0_i32_2 = arith.constant 0 : i32
    return %c0_i32, %c0_i32_0, %c0_i32_1 : i32, i32, i32
  }
  func.func @transform_4(%arg0: i32) -> (i32, i32) {
    %c0_i32 = arith.constant 0 : i32
    %c0_i32_0 = arith.constant 0 : i32
    %c0_i32_1 = arith.constant 0 : i32
    return %c0_i32, %c0_i32_0 : i32, i32
  }
  func.func @transform_5(%arg0: i32) -> (i32, i32) {
    %c0_i32 = arith.constant 0 : i32
    %c0_i32_0 = arith.constant 0 : i32
    %c0_i32_1 = arith.constant 0 : i32
    return %c0_i32, %c0_i32_0 : i32, i32
  }
  func.func @transform_6(%arg0: i32) -> (i32, i32) {
    %c0_i32 = arith.constant 0 : i32
    %c0_i32_0 = arith.constant 0 : i32
    %c0_i32_1 = arith.constant 0 : i32
    return %c0_i32, %c0_i32_0 : i32, i32
  }
  func.func @transform_7(%arg0: i32) -> (i32, i32) {
    %c0_i32 = arith.constant 0 : i32
    %c0_i32_0 = arith.constant 0 : i32
    %c0_i32_1 = arith.constant 0 : i32
    return %c0_i32, %c0_i32_0 : i32, i32
  }
  func.func @transform_8(%arg0: i32) -> (i32, i32, i32) {
    %c0_i32 = arith.constant 0 : i32
    %c0_i32_0 = arith.constant 0 : i32
    %c0_i32_1 = arith.constant 0 : i32
    return %arg0, %c0_i32, %c0_i32_0 : i32, i32, i32
  }
  func.func @transform_9(%arg0: i32) -> (i32, i32, i32) {
    %c0_i32 = arith.constant 0 : i32
    %c0_i32_0 = arith.constant 0 : i32
    %c0_i32_1 = arith.constant 0 : i32
    return %arg0, %c0_i32, %c0_i32_0 : i32, i32, i32
  }
}

</mosaic_0001>

<llo_original>
// kernel: go_model_forward.1
$region0: #{go_model_forward.1}
  #allocation0 [shape = 'u32[]', space=smem, size = 0x4, offset = 0x4, fixed_abs, tag = 'smem constant byte address 0x4 - core index']
  #allocation1 [shape = 'u32[144,128]{1,0:T(1,128)}', space=vmem, size = 0x12000, scoped, tag = 'internal scratch']
  %s0 = inlined_call_operand.vmem [shape: bf16[2,36,256], index: 0, kind: input, shape index: {}]
  %s1 = inlined_call_operand.vmem [shape: bf16[16,36], index: 1, kind: input, shape index: {}]
  %s2 = inlined_call_operand.vmem [shape: f32[16,1], index: 2, kind: input, shape index: {}]
  %s3 = inlined_call_operand.vmem [shape: bf16[16,256,128], index: 3, kind: input, shape index: {}]
  %s4 = inlined_call_operand.vmem [shape: f32[1,128], index: 4, kind: input, shape index: {}]
  %s5 = inlined_call_operand.vmem [shape: f32[1,128], index: 5, kind: input, shape index: {}]
  %s6 = inlined_call_operand.vmem [shape: bf16[128,384], index: 6, kind: input, shape index: {}]
  %s7 = inlined_call_operand.vmem [shape: f32[1,384], index: 7, kind: input, shape index: {}]
  %s8 = inlined_call_operand.vmem [shape: f32[2,1,256], index: 8, kind: output, shape index: {0}]
  %s9 = inlined_call_operand.vmem [shape: f32[2,1,1], index: 9, kind: output, shape index: {1}]
  %10 = xla_tuple %s8, %s9
  %s11 = sld [smem:[#allocation0]]
  $region73: #{go_model_forward.1} parent=0
    _
  %s13 = ssub.s32 1, %s11
  %s14 = scalar_select 0, %s13, %s11
  loop: start=0, step=1, limit=4
  $region2: #{go_model_forward.1} parent=0 // loop_pre_header
    _
  $region3: #{go_model_forward.1} parent=0 // loop_header
    %s16 = sphi 0, %s20
    %p17 = scmp.ge.s32.totalorder %s16, 4
    %s26 = sphi 0, %s28
    %s29 = sphi 0, %s26
    %s30 = sphi 0, %s29
    %s46 = sphi 0, %s30
    %s50 = sphi 0, %s50
    %s52 = sphi 0, %s50
    %s53 = sphi 0, %s52
    %s67 = sphi 0, %s53
    %s71 = sphi 0, %s71
    %s73 = sphi 0, %s71
    %s74 = sphi 0, %s73
    %s88 = sphi 0, %s74
    %s92 = sphi 0, %s92
    %s94 = sphi 0, %s92
    %s95 = sphi 0, %s94
    %s109 = sphi 0, %s95
    %s113 = sphi 0, %s113
    %s115 = sphi 0, %s113
    %s116 = sphi 0, %s115
    %s130 = sphi 0, %s116
    %s134 = sphi 0, %s134
    %s136 = sphi 0, %s134
    %s137 = sphi 0, %s136
    %s151 = sphi 0, %s137
    %s155 = sphi 0, %s155
    %s157 = sphi 0, %s155
    %s158 = sphi 0, %s157
    %s172 = sphi 0, %s158
    %s176 = sphi 0, %s176
    %s178 = sphi 0, %s176
    %s179 = sphi 0, %s178
    %s193 = sphi 0, %s179
    %s199 = sphi 0, %s201
    %s202 = sphi 0, %s199
    %s203 = sphi 0, %s202
    %s219 = sphi 0, %s203
    %s225 = sphi 0, %s227
    %s228 = sphi 0, %s225
    %s229 = sphi 0, %s228
    %s245 = sphi 0, %s229
  $region4: #{go_model_forward.1} parent=0 // loop_header_branch
    %19 = sbr.rel (%p17) target = $region8
  $region5: #{go_model_forward.1} parent=0 // loop_body
    %s21 = ssub.s32 %s16, 1
    %s22 = ssub.s32 %s16, 2
    %s23 = sadd.s32 %s16, 1
    %s24 = ssub.s32 %s16, %s23
    %p25 = scmp.eq.s32.totalorder %s24, 0
    %s27 = sadd.s32 %s26, 1
    %s28 = scalar_select %p25, %s26, %s27
    %p31 = pneg %p25
    %p32 = scmp.eq.s32.totalorder %s16, 1
    %p33 = por %p31, %p32
    %p34 = scmp.ne.s32.totalorder %s26, %s29
    %p35 = scmp.eq.s32.totalorder %s16, 0
    %p36 = por %p34, %p35
    %p37 = scmp.ne.s32.totalorder %s26, %s29
    %p38 = scmp.eq.s32.totalorder %s21, 1
    %p39 = por %p37, %p38
    %p40 = scmp.ne.s32.totalorder %s29, %s30
    %p41 = scmp.eq.s32.totalorder %s21, 0
    %p42 = por %p40, %p41
    %p43 = scmp.ne.s32.totalorder %s29, %s30
    %p44 = scmp.eq.s32.totalorder %s22, 1
    %p45 = por %p43, %p44
    %p47 = scmp.ne.s32.totalorder %s30, %s46
    %p48 = scmp.eq.s32.totalorder %s22, 0
    %p49 = por %p47, %p48
    %s51 = sadd.s32 %s50, 1
    %p54 = scmp.eq.s32.totalorder %s16, 1
    %p55 = scmp.ne.s32.totalorder %s50, %s52
    %p56 = scmp.eq.s32.totalorder %s16, 0
    %p57 = por %p55, %p56
    %p58 = scmp.ne.s32.totalorder %s50, %s52
    %p59 = scmp.eq.s32.totalorder %s21, 1
    %p60 = por %p58, %p59
    %p61 = scmp.ne.s32.totalorder %s52, %s53
    %p62 = scmp.eq.s32.totalorder %s21, 0
    %p63 = por %p61, %p62
    %p64 = scmp.ne.s32.totalorder %s52, %s53
    %p65 = scmp.eq.s32.totalorder %s22, 1
    %p66 = por %p64, %p65
    %p68 = scmp.ne.s32.totalorder %s53, %s67
    %p69 = scmp.eq.s32.totalorder %s22, 0
    %p70 = por %p68, %p69
    %s72 = sadd.s32 %s71, 1
    %p75 = scmp.eq.s32.totalorder %s16, 1
    %p76 = scmp.ne.s32.totalorder %s71, %s73
    %p77 = scmp.eq.s32.totalorder %s16, 0
    %p78 = por %p76, %p77
    %p79 = scmp.ne.s32.totalorder %s71, %s73
    %p80 = scmp.eq.s32.totalorder %s21, 1
    %p81 = por %p79, %p80
    %p82 = scmp.ne.s32.totalorder %s73, %s74
    %p83 = scmp.eq.s32.totalorder %s21, 0
    %p84 = por %p82, %p83
    %p85 = scmp.ne.s32.totalorder %s73, %s74
    %p86 = scmp.eq.s32.totalorder %s22, 1
    %p87 = por %p85, %p86
    %p89 = scmp.ne.s32.totalorder %s74, %s88
    %p90 = scmp.eq.s32.totalorder %s22, 0
    %p91 = por %p89, %p90
    %s93 = sadd.s32 %s92, 1
    %p96 = scmp.eq.s32.totalorder %s16, 1
    %p97 = scmp.ne.s32.totalorder %s92, %s94
    %p98 = scmp.eq.s32.totalorder %s16, 0
    %p99 = por %p97, %p98
    %p100 = scmp.ne.s32.totalorder %s92, %s94
    %p101 = scmp.eq.s32.totalorder %s21, 1
    %p102 = por %p100, %p101
    %p103 = scmp.ne.s32.totalorder %s94, %s95
    %p104 = scmp.eq.s32.totalorder %s21, 0
    %p105 = por %p103, %p104
    %p106 = scmp.ne.s32.totalorder %s94, %s95
    %p107 = scmp.eq.s32.totalorder %s22, 1
    %p108 = por %p106, %p107
    %p110 = scmp.ne.s32.totalorder %s95, %s109
    %p111 = scmp.eq.s32.totalorder %s22, 0
    %p112 = por %p110, %p111
    %s114 = sadd.s32 %s113, 1
    %p117 = scmp.eq.s32.totalorder %s16, 1
    %p118 = scmp.ne.s32.totalorder %s113, %s115
    %p119 = scmp.eq.s32.totalorder %s16, 0
    %p120 = por %p118, %p119
    %p121 = scmp.ne.s32.totalorder %s113, %s115
    %p122 = scmp.eq.s32.totalorder %s21, 1
    %p123 = por %p121, %p122
    %p124 = scmp.ne.s32.totalorder %s115, %s116
    %p125 = scmp.eq.s32.totalorder %s21, 0
    %p126 = por %p124, %p125
    %p127 = scmp.ne.s32.totalorder %s115, %s116
    %p128 = scmp.eq.s32.totalorder %s22, 1
    %p129 = por %p127, %p128
    %p131 = scmp.ne.s32.totalorder %s116, %s130
    %p132 = scmp.eq.s32.totalorder %s22, 0
    %p133 = por %p131, %p132
    %s135 = sadd.s32 %s134, 1
    %p138 = scmp.eq.s32.totalorder %s16, 1
    %p139 = scmp.ne.s32.totalorder %s134, %s136
    %p140 = scmp.eq.s32.totalorder %s16, 0
    %p141 = por %p139, %p140
    %p142 = scmp.ne.s32.totalorder %s134, %s136
    %p143 = scmp.eq.s32.totalorder %s21, 1
    %p144 = por %p142, %p143
    %p145 = scmp.ne.s32.totalorder %s136, %s137
    %p146 = scmp.eq.s32.totalorder %s21, 0
    %p147 = por %p145, %p146
    %p148 = scmp.ne.s32.totalorder %s136, %s137
    %p149 = scmp.eq.s32.totalorder %s22, 1
    %p150 = por %p148, %p149
    %p152 = scmp.ne.s32.totalorder %s137, %s151
    %p153 = scmp.eq.s32.totalorder %s22, 0
    %p154 = por %p152, %p153
    %s156 = sadd.s32 %s155, 1
    %p159 = scmp.eq.s32.totalorder %s16, 1
    %p160 = scmp.ne.s32.totalorder %s155, %s157
    %p161 = scmp.eq.s32.totalorder %s16, 0
    %p162 = por %p160, %p161
    %p163 = scmp.ne.s32.totalorder %s155, %s157
    %p164 = scmp.eq.s32.totalorder %s21, 1
    %p165 = por %p163, %p164
    %p166 = scmp.ne.s32.totalorder %s157, %s158
    %p167 = scmp.eq.s32.totalorder %s21, 0
    %p168 = por %p166, %p167
    %p169 = scmp.ne.s32.totalorder %s157, %s158
    %p170 = scmp.eq.s32.totalorder %s22, 1
    %p171 = por %p169, %p170
    %p173 = scmp.ne.s32.totalorder %s158, %s172
    %p174 = scmp.eq.s32.totalorder %s22, 0
    %p175 = por %p173, %p174
    %s177 = sadd.s32 %s176, 1
    %p180 = scmp.eq.s32.totalorder %s16, 1
    %p181 = scmp.ne.s32.totalorder %s176, %s178
    %p182 = scmp.eq.s32.totalorder %s16, 0
    %p183 = por %p181, %p182
    %p184 = scmp.ne.s32.totalorder %s176, %s178
    %p185 = scmp.eq.s32.totalorder %s21, 1
    %p186 = por %p184, %p185
    %p187 = scmp.ne.s32.totalorder %s178, %s179
    %p188 = scmp.eq.s32.totalorder %s21, 0
    %p189 = por %p187, %p188
    %p190 = scmp.ne.s32.totalorder %s178, %s179
    %p191 = scmp.eq.s32.totalorder %s22, 1
    %p192 = por %p190, %p191
    %p194 = scmp.ne.s32.totalorder %s179, %s193
    %p195 = scmp.eq.s32.totalorder %s22, 0
    %p196 = por %p194, %p195
    %s197 = ssub.s32 %s16, %s23
    %p198 = scmp.eq.s32.totalorder %s197, 0
    %s200 = sadd.s32 %s199, 1
    %s201 = scalar_select %p198, %s199, %s200
    %p204 = pneg %p198
    %p205 = scmp.eq.s32.totalorder %s16, 1
    %p206 = por %p204, %p205
    %p207 = scmp.ne.s32.totalorder %s199, %s202
    %p208 = scmp.eq.s32.totalorder %s16, 0
    %p209 = por %p207, %p208
    %p210 = scmp.ne.s32.totalorder %s199, %s202
    %p211 = scmp.eq.s32.totalorder %s21, 1
    %p212 = por %p210, %p211
    %p213 = scmp.ne.s32.totalorder %s202, %s203
    %p214 = scmp.eq.s32.totalorder %s21, 0
    %p215 = por %p213, %p214
    %p216 = scmp.ne.s32.totalorder %s202, %s203
    %p217 = scmp.eq.s32.totalorder %s22, 1
    %p218 = por %p216, %p217
    %p220 = scmp.ne.s32.totalorder %s203, %s219
    %p221 = scmp.eq.s32.totalorder %s22, 0
    %p222 = por %p220, %p221
    %s223 = ssub.s32 %s16, %s23
    %p224 = scmp.eq.s32.totalorder %s223, 0
    %s226 = sadd.s32 %s225, 1
    %s227 = scalar_select %p224, %s225, %s226
    %p230 = pneg %p224
    %p231 = scmp.eq.s32.totalorder %s16, 1
    %p232 = por %p230, %p231
    %p233 = scmp.ne.s32.totalorder %s225, %s228
    %p234 = scmp.eq.s32.totalorder %s16, 0
    %p235 = por %p233, %p234
    %p236 = scmp.ne.s32.totalorder %s225, %s228
    %p237 = scmp.eq.s32.totalorder %s21, 1
    %p238 = por %p236, %p237
    %p239 = scmp.ne.s32.totalorder %s228, %s229
    %p240 = scmp.eq.s32.totalorder %s21, 0
    %p241 = por %p239, %p240
    %p242 = scmp.ne.s32.totalorder %s228, %s229
    %p243 = scmp.eq.s32.totalorder %s22, 1
    %p244 = por %p242, %p243
    %p246 = scmp.ne.s32.totalorder %s229, %s245
    %p247 = scmp.eq.s32.totalorder %s22, 0
    %p248 = por %p246, %p247
    %p249 = scmp.le.s32.totalorder 1, %s16
    %p250 = scmp.lt.s32.totalorder %s16, 3
    %p251 = pnand %p249, %p250
    %p252 = pneg %p251
    // Predicated region
    $region9: #{go_model_forward.1} parent=5 // pred_check
      _
    $region10: #{go_model_forward.1} parent=5 // pred_check_branch
      %254 = sbr.rel (%p251) target = $region12
    $region11: #{go_model_forward.1} parent=5 // pred_region
      %s255 = ssub.s32 %s16, 1
      // Predicated region
      $region13: #{go_model_forward.1} parent=11 // pred_check
        %p256 = pneg %p63
      $region14: #{go_model_forward.1} parent=11 // pred_check_branch
        %258 = sbr.rel (%p256) target = $region16
      $region15: #{go_model_forward.1} parent=11 // pred_region
        _
      $region16: #{go_model_forward.1} parent=11 // pred_fallthru
        _
      // Predicated region
      $region17: #{go_model_forward.1} parent=11 // pred_check
        %p259 = pneg %p84
      $region18: #{go_model_forward.1} parent=11 // pred_check_branch
        %261 = sbr.rel (%p259) target = $region20
      $region19: #{go_model_forward.1} parent=11 // pred_region
        _
      $region20: #{go_model_forward.1} parent=11 // pred_fallthru
        _
      // Predicated region
      $region21: #{go_model_forward.1} parent=11 // pred_check
        %p262 = pneg %p105
      $region22: #{go_model_forward.1} parent=11 // pred_check_branch
        %264 = sbr.rel (%p262) target = $region24
      $region23: #{go_model_forward.1} parent=11 // pred_region
        _
      $region24: #{go_model_forward.1} parent=11 // pred_fallthru
        _
      // Predicated region
      $region25: #{go_model_forward.1} parent=11 // pred_check
        %p265 = pneg %p126
      $region26: #{go_model_forward.1} parent=11 // pred_check_branch
        %267 = sbr.rel (%p265) target = $region28
      $region27: #{go_model_forward.1} parent=11 // pred_region
        _
      $region28: #{go_model_forward.1} parent=11 // pred_fallthru
        _
      // Predicated region
      $region29: #{go_model_forward.1} parent=11 // pred_check
        %p268 = pneg %p147
      $region30: #{go_model_forward.1} parent=11 // pred_check_branch
        %270 = sbr.rel (%p268) target = $region32
      $region31: #{go_model_forward.1} parent=11 // pred_region
        _
      $region32: #{go_model_forward.1} parent=11 // pred_fallthru
        _
      // Predicated region
      $region33: #{go_model_forward.1} parent=11 // pred_check
        %p271 = pneg %p168
      $region34: #{go_model_forward.1} parent=11 // pred_check_branch
        %273 = sbr.rel (%p271) target = $region36
      $region35: #{go_model_forward.1} parent=11 // pred_region
        _
      $region36: #{go_model_forward.1} parent=11 // pred_fallthru
        _
      // Predicated region
      $region37: #{go_model_forward.1} parent=11 // pred_check
        %p274 = pneg %p189
      $region38: #{go_model_forward.1} parent=11 // pred_check_branch
        %276 = sbr.rel (%p274) target = $region40
      $region39: #{go_model_forward.1} parent=11 // pred_region
        _
      $region40: #{go_model_forward.1} parent=11 // pred_fallthru
        _
    $region12: #{go_model_forward.1} parent=5 // pred_fallthru
      _
    %p277 = scmp.lt.s32.totalorder %s16, 2
    // Predicated region
    $region41: #{go_model_forward.1} parent=5 // pred_check
      %p278 = pneg %p277
    $region42: #{go_model_forward.1} parent=5 // pred_check_branch
      %280 = sbr.rel (%p278) target = $region44
    $region43: #{go_model_forward.1} parent=5 // pred_region
      // Predicated region
      $region45: #{go_model_forward.1} parent=43 // pred_check
        %p281 = pneg %p36
      $region46: #{go_model_forward.1} parent=43 // pred_check_branch
        %283 = sbr.rel (%p281) target = $region48
      $region47: #{go_model_forward.1} parent=43 // pred_region
        %p284 = scmp.lt.s32.totalorder %s16, 1
        %s285 = scalar_select %p284, %s16, 1
        %s286 = smul.addr %s285, 10
        %s287 = smul.addr %s286, 4
        %s288 = scalar_lea.vmem %s0, %s287
      $region48: #{go_model_forward.1} parent=43 // pred_fallthru
        _
    $region44: #{go_model_forward.1} parent=5 // pred_fallthru
      _
    %p289 = scmp.le.s32.totalorder 1, %s16
    %p290 = scmp.lt.s32.totalorder %s16, 3
    %p291 = pnand %p289, %p290
    %p292 = pneg %p291
    // Predicated region
    $region49: #{go_model_forward.1} parent=5 // pred_check
      _
    $region50: #{go_model_forward.1} parent=5 // pred_check_branch
      %294 = sbr.rel (%p291) target = $region52
    $region51: #{go_model_forward.1} parent=5 // pred_region
      %s295 = ssub.s32 %s16, 1
      %p296 = scmp.lt.s32.totalorder %s21, 1
      %s297 = scalar_select %p296, %s21, 1
      %s298 = smul.addr %s297, 10
      %s299 = smul.addr %s298, 4
      %s300 = scalar_lea.vmem %s0, %s299
      %p301 = pneg %p42
      %p302 = pneg %p39
      %p303 = pneg %p63
      %p304 = pneg %p60
      %p305 = pneg %p84
      %p306 = pneg %p81
      %p307 = pneg %p105
      %p308 = pneg %p102
      %p309 = pneg %p126
      %p310 = pneg %p123
      %p311 = pneg %p147
      %p312 = pneg %p144
      %p313 = pneg %p168
      %p314 = pneg %p165
      %p315 = pneg %p189
      %p316 = pneg %p186
      %p317 = pneg %p215
      %p318 = pneg %p212
      %p319 = scmp.lt.s32.totalorder %s21, 1
      %s320 = scalar_select %p319, %s21, 1
      %s321 = smul.addr %s320, 2
      %s322 = scalar_lea.vmem %s8, %s321
      %p323 = pneg %p241
      %p324 = pneg %p238
      %p325 = scmp.lt.s32.totalorder %s21, 1
      %s326 = scalar_select %p325, %s21, 1
      %s327 = scalar_lea.vmem %s9, %s326
      %p328 = scmp.lt.s32.totalorder %s21, 1
      %s329 = scalar_select %p328, %s21, 1
      %s330 = smul.addr %s329, 10
      %s331 = smul.addr %s330, 4
      %s332 = scalar_lea.vmem %s0, %s331
      %p333 = scmp.lt.s32.totalorder %s21, 1
      %s334 = scalar_select %p333, %s21, 1
      %s335 = smul.addr %s334, 2
      %s336 = scalar_lea.vmem %s8, %s335
      %p337 = scmp.lt.s32.totalorder %s21, 1
      %s338 = scalar_select %p337, %s21, 1
      %s339 = scalar_lea.vmem %s9, %s338
      %v341 = vld [vmem:[%s1] sm:$0xf]
      %v342 = vld [vmem:[%s1 + $0x4] sm:$0xf]
      %v343 = vld [vmem:[%s332] sm:$0xff]
      %v344 = vld [vmem:[%s332 + $0x8] sm:$0xff]
      %v345 = vld [vmem:[%s332 + $0x10] sm:$0xff]
      %v346 = vld [vmem:[%s332 + $0x18] sm:$0xff]
      %v347 = vld [vmem:[%s332 + $0x20] sm:$0x33]
      %v348 = vld [vmem:[%s2] sm:$0xff]
      %v349 = vld [vmem:[%s2 + $0x8] sm:$0xff]
      %351 = vset.pattern.permute.xlu0 0
      %352 = vperm.xlu0 %351, %v348
      %v353 = vpop.permute.xlu0 %352
      %356 = vset.pattern.permute.xlu0 0
      %357 = vperm.xlu0 %356, %v349
      %v358 = vpop.permute.xlu0 %357
      %v362 = vunpack.c.l.b16 %v341
      %v363 = vunpack.c.l.b16 %v342
      %v364 = vpack.c.b16 %v363, %v362
      %v370 = vunpack.c.l.b16 %v343
      %v371 = vunpack.c.h.b16 %v343
      %v372 = vunpack.c.l.b16 %v344
      %v373 = vunpack.c.h.b16 %v344
      %v374 = vunpack.c.l.b16 %v345
      %v375 = vunpack.c.h.b16 %v345
      %v376 = vunpack.c.l.b16 %v346
      %v377 = vunpack.c.h.b16 %v346
      %v378 = vunpack.c.l.b16 %v347
      %v379 = vunpack.c.h.b16 %v347
      %v380 = vpack.c.b16 %v372, %v370
      %v381 = vpack.c.b16 %v373, %v371
      %v382 = vpack.c.b16 %v376, %v374
      %v383 = vpack.c.b16 %v377, %v375
      %v384 = vpack.c.b16 %v378, %v378
      %v385 = vpack.c.b16 %v379, %v379
      %vm390 = vcmask 293888
      %v392 = vsel %vm390, %v364, 0
      %vm394 = vcmask 1041408
      %v396 = vsel %vm394, %v384, 0
      %v399 = vsel %vm394, %v385, 0
      %401 = vmatprep.subr.bf16.mxu0 %v381
      %402 = vmatpush1.bf16.msra.mxu0 %v380
      %403 = vmatprep.subr.bf16.mxu0 %v383
      %404 = vmatpush1.bf16.msra.mxu0 %v382
      %405 = vmatprep.subr.bf16.mxu0 %v399
      %406 = vmatpush1.bf16.msra.mxu0 %v396
      %407 = vmatprep.subr.bf16.mxu0 0
      %408 = vmatpush1.bf16.msra.mxu0 0
      %409 = vmatprep.subr.bf16.mxu0 0
      %410 = vmatpush1.bf16.msra.mxu0 0
      %411 = vmatprep.subr.bf16.mxu0 0
      %412 = vmatpush1.bf16.msra.mxu0 0
      %413 = vmatprep.subr.bf16.mxu0 0
      %414 = vmatpush1.bf16.msra.mxu0 0
      %415 = vmatprep.subr.bf16.mxu0 0
      %416 = vmatpush1.bf16.msra.mxu0 0
      %417 = vmatprep.subr.bf16.mxu0 0
      %418 = vmatpush1.bf16.msra.mxu0 0
      %419 = vmatprep.subr.bf16.mxu0 0
      %420 = vmatpush1.bf16.msra.mxu0 0
      %421 = vmatprep.subr.bf16.mxu0 0
      %422 = vmatpush1.bf16.msra.mxu0 0
      %423 = vmatprep.subr.bf16.mxu0 0
      %424 = vmatpush1.bf16.msra.mxu0 0
      %425 = vmatprep.subr.bf16.mxu0 0
      %426 = vmatpush1.bf16.msra.mxu0 0
      %427 = vmatprep.subr.bf16.mxu0 0
      %428 = vmatpush1.bf16.msra.mxu0 0
      %429 = vmatprep.subr.bf16.mxu0 0
      %430 = vmatpush1.bf16.msra.mxu0 0
      %431 = vmatprep.subr.bf16.mxu0 0
      %432 = vmatpush1.bf16.msra.mxu0 0
      %433 = vmatprep.mubr.bf16.mxu0 0
      %434 = vmatmul.mubr.bf16.gmra.mrb[0].mxu0 %v392
      %v435 = vpop.f32.mrb[0].mxu0
      %v436 = vadd.f32 %v353, %v435
      %v437 = vpop.f32.mrb[0].mxu0
      %v438 = vadd.f32 %v353, %v437
      %v439 = vpop.f32.mrb[0].mxu0
      %v440 = vadd.f32 %v358, %v439
      %v441 = vpop.f32.mrb[0].mxu0
      %v442 = vadd.f32 %v358, %v441
      %443 = vdwg.mxu0
      %v444 = vmax.f32 %v436, 0.0
      %v445 = vmax.f32 %v438, 0.0
      %v446 = vmax.f32 %v440, 0.0
      %v447 = vmax.f32 %v442, 0.0
      %v448 = vand.u32 2147483647, %v436
      %v449 = vand.u32 2147483647, %v438
      %v450 = vand.u32 2147483647, %v440
      %v451 = vand.u32 2147483647, %v442
      %v452 = vsub.f32 0.0, %v448
      %v453 = vsub.f32 0.0, %v449
      %v454 = vsub.f32 0.0, %v450
      %v455 = vsub.f32 0.0, %v451
      %v456 = vmul.f32 %v452, 1.442695
      %v457 = vpow.pop %v456
      %v458 = vmul.f32 %v453, 1.442695
      %v459 = vpow.pop %v458
      %v460 = vmul.f32 %v454, 1.442695
      %v461 = vpow.pop %v460
      %v462 = vmul.f32 %v455, 1.442695
      %v463 = vpow.pop %v462
      %v464 = vadd.f32 %v457, 1.0
      %v465 = vadd.f32 %v459, 1.0
      %v466 = vadd.f32 %v461, 1.0
      %v467 = vadd.f32 %v463, 1.0
      %v468 = vlog2.pop %v464
      %v469 = vmul.f32 %v468, 0.6931472
      %v470 = vlog2.pop %v465
      %v471 = vmul.f32 %v470, 0.6931472
      %v472 = vlog2.pop %v466
      %v473 = vmul.f32 %v472, 0.6931472
      %v474 = vlog2.pop %v467
      %v475 = vmul.f32 %v474, 0.6931472
      %v476 = vadd.f32 %v444, %v469
      %v477 = vadd.f32 %v445, %v471
      %v478 = vadd.f32 %v446, %v473
      %v479 = vadd.f32 %v447, %v475
      %v480 = vtanh.pop %v476
      %v481 = vtanh.pop %v477
      %v482 = vtanh.pop %v478
      %v483 = vtanh.pop %v479
      %v484 = vmul.f32 %v436, %v480
      %v485 = vmul.f32 %v438, %v481
      %v486 = vmul.f32 %v440, %v482
      %v487 = vmul.f32 %v442, %v483
      %v488 = vld [vmem:[%s4] sm:$0x1]
      %v489 = vpack.c.bf16 %v484, %v484
      %v490 = vpack.c.bf16 %v485, %v485
      %v491 = vld [vmem:[%s3] sm:$0xf]
      %v492 = vld [vmem:[%s3 + $0x4] sm:$0xf]
      %v493 = vld [vmem:[%s3 + $0x8] sm:$0xf]
      %v494 = vld [vmem:[%s3 + $0xc] sm:$0xf]
      %v495 = vld [vmem:[%s3 + $0x10] sm:$0xf]
      %v496 = vld [vmem:[%s3 + $0x14] sm:$0xf]
      %v497 = vld [vmem:[%s3 + $0x18] sm:$0xf]
      %v498 = vld [vmem:[%s3 + $0x1c] sm:$0xf]
      %v499 = vld [vmem:[%s3 + $0x20] sm:$0xf]
      %v500 = vld [vmem:[%s3 + $0x24] sm:$0xf]
      %v501 = vld [vmem:[%s3 + $0x28] sm:$0xf]
      %v502 = vld [vmem:[%s3 + $0x2c] sm:$0xf]
      %v503 = vld [vmem:[%s3 + $0x30] sm:$0xf]
      %v504 = vld [vmem:[%s3 + $0x34] sm:$0xf]
      %v505 = vld [vmem:[%s3 + $0x38] sm:$0xf]
      %v506 = vld [vmem:[%s3 + $0x3c] sm:$0xf]
      %v507 = vld [vmem:[%s3 + $0x40] sm:$0xf]
      %v508 = vld [vmem:[%s3 + $0x44] sm:$0xf]
      %v509 = vld [vmem:[%s3 + $0x48] sm:$0xf]
      %v510 = vld [vmem:[%s3 + $0x4c] sm:$0xf]
      %v511 = vld [vmem:[%s3 + $0x50] sm:$0xf]
      %v512 = vld [vmem:[%s3 + $0x54] sm:$0xf]
      %v513 = vld [vmem:[%s3 + $0x58] sm:$0xf]
      %v514 = vld [vmem:[%s3 + $0x5c] sm:$0xf]
      %v515 = vld [vmem:[%s3 + $0x60] sm:$0xf]
      %v516 = vld [vmem:[%s3 + $0x64] sm:$0xf]
      %v517 = vld [vmem:[%s3 + $0x68] sm:$0xf]
      %v518 = vld [vmem:[%s3 + $0x6c] sm:$0xf]
      %v519 = vld [vmem:[%s3 + $0x70] sm:$0xf]
      %v520 = vld [vmem:[%s3 + $0x74] sm:$0xf]
      %v521 = vld [vmem:[%s3 + $0x78] sm:$0xf]
      %v522 = vld [vmem:[%s3 + $0x7c] sm:$0xf]
      %v555 = vunpack.c.l.b16 %v491
      %v556 = vunpack.c.l.b16 %v492
      %v557 = vunpack.c.l.b16 %v493
      %v558 = vunpack.c.l.b16 %v494
      %v559 = vunpack.c.l.b16 %v495
      %v560 = vunpack.c.l.b16 %v496
      %v561 = vunpack.c.l.b16 %v497
      %v562 = vunpack.c.l.b16 %v498
      %v563 = vunpack.c.l.b16 %v499
      %v564 = vunpack.c.l.b16 %v500
      %v565 = vunpack.c.l.b16 %v501
      %v566 = vunpack.c.l.b16 %v502
      %v567 = vunpack.c.l.b16 %v503
      %v568 = vunpack.c.l.b16 %v504
      %v569 = vunpack.c.l.b16 %v505
      %v570 = vunpack.c.l.b16 %v506
      %v571 = vunpack.c.l.b16 %v507
      %v572 = vunpack.c.l.b16 %v508
      %v573 = vunpack.c.l.b16 %v509
      %v574 = vunpack.c.l.b16 %v510
      %v575 = vunpack.c.l.b16 %v511
      %v576 = vunpack.c.l.b16 %v512
      %v577 = vunpack.c.l.b16 %v513
      %v578 = vunpack.c.l.b16 %v514
      %v579 = vunpack.c.l.b16 %v515
      %v580 = vunpack.c.l.b16 %v516
      %v581 = vunpack.c.l.b16 %v517
      %v582 = vunpack.c.l.b16 %v518
      %v583 = vunpack.c.l.b16 %v519
      %v584 = vunpack.c.l.b16 %v520
      %v585 = vunpack.c.l.b16 %v521
      %v586 = vunpack.c.l.b16 %v522
      %v587 = vpack.c.b16 %v556, %v555
      %v588 = vpack.c.b16 %v558, %v557
      %v589 = vpack.c.b16 %v560, %v559
      %v590 = vpack.c.b16 %v562, %v561
      %v591 = vpack.c.b16 %v564, %v563
      %v592 = vpack.c.b16 %v566, %v565
      %v593 = vpack.c.b16 %v568, %v567
      %v594 = vpack.c.b16 %v570, %v569
      %v595 = vpack.c.b16 %v572, %v571
      %v596 = vpack.c.b16 %v574, %v573
      %v597 = vpack.c.b16 %v576, %v575
      %v598 = vpack.c.b16 %v578, %v577
      %v599 = vpack.c.b16 %v580, %v579
      %v600 = vpack.c.b16 %v582, %v581
      %v601 = vpack.c.b16 %v584, %v583
      %v602 = vpack.c.b16 %v586, %v585
      %619 = vmatprep.subr.bf16.mxu0 0
      %620 = vmatpush1.bf16.msra.mxu0 %v587
      %621 = vmatprep.subr.bf16.mxu0 0
      %622 = vmatpush1.bf16.msra.mxu0 %v588
      %623 = vmatprep.subr.bf16.mxu0 0
      %624 = vmatpush1.bf16.msra.mxu0 %v589
      %625 = vmatprep.subr.bf16.mxu0 0
      %626 = vmatpush1.bf16.msra.mxu0 %v590
      %627 = vmatprep.subr.bf16.mxu0 0
      %628 = vmatpush1.bf16.msra.mxu0 %v591
      %629 = vmatprep.subr.bf16.mxu0 0
      %630 = vmatpush1.bf16.msra.mxu0 %v592
      %631 = vmatprep.subr.bf16.mxu0 0
      %632 = vmatpush1.bf16.msra.mxu0 %v593
      %633 = vmatprep.subr.bf16.mxu0 0
      %634 = vmatpush1.bf16.msra.mxu0 %v594
      %635 = vmatprep.subr.bf16.mxu0 0
      %636 = vmatpush1.bf16.msra.mxu0 %v595
      %637 = vmatprep.subr.bf16.mxu0 0
      %638 = vmatpush1.bf16.msra.mxu0 %v596
      %639 = vmatprep.subr.bf16.mxu0 0
      %640 = vmatpush1.bf16.msra.mxu0 %v597
      %641 = vmatprep.subr.bf16.mxu0 0
      %642 = vmatpush1.bf16.msra.mxu0 %v598
      %643 = vmatprep.subr.bf16.mxu0 0
      %644 = vmatpush1.bf16.msra.mxu0 %v599
      %645 = vmatprep.subr.bf16.mxu0 0
      %646 = vmatpush1.bf16.msra.mxu0 %v600
      %647 = vmatprep.subr.bf16.mxu0 0
      %648 = vmatpush1.bf16.msra.mxu0 %v601
      %649 = vmatprep.subr.bf16.mxu0 0
      %650 = vmatpush1.bf16.msra.mxu0 %v602
      %651 = vmatprep.mubr.bf16.mxu0 %v490
      %652 = vmatmul.mubr.bf16.gmra.mrb[0].mxu0 %v489
      %v653 = vpop.f32.mrb[0].mxu0
      %v654 = vadd.f32 0.0, %v653
      %v655 = vpop.f32.mrb[0].mxu0
      %v656 = vpop.f32.mrb[0].mxu0
      %v657 = vpop.f32.mrb[0].mxu0
      %658 = vdwg.mxu0
      %v659 = vadd.f32 %v488, %v654
      %s660 = scalar_lea.vmem %s3, 128
      %v661 = vld [vmem:[%s660] sm:$0xf]
      %v662 = vld [vmem:[%s660 + $0x4] sm:$0xf]
      %v663 = vld [vmem:[%s660 + $0x8] sm:$0xf]
      %v664 = vld [vmem:[%s660 + $0xc] sm:$0xf]
      %v665 = vld [vmem:[%s660 + $0x10] sm:$0xf]
      %v666 = vld [vmem:[%s660 + $0x14] sm:$0xf]
      %v667 = vld [vmem:[%s660 + $0x18] sm:$0xf]
      %v668 = vld [vmem:[%s660 + $0x1c] sm:$0xf]
      %v669 = vld [vmem:[%s660 + $0x20] sm:$0xf]
      %v670 = vld [vmem:[%s660 + $0x24] sm:$0xf]
      %v671 = vld [vmem:[%s660 + $0x28] sm:$0xf]
      %v672 = vld [vmem:[%s660 + $0x2c] sm:$0xf]
      %v673 = vld [vmem:[%s660 + $0x30] sm:$0xf]
      %v674 = vld [vmem:[%s660 + $0x34] sm:$0xf]
      %v675 = vld [vmem:[%s660 + $0x38] sm:$0xf]
      %v676 = vld [vmem:[%s660 + $0x3c] sm:$0xf]
      %v677 = vld [vmem:[%s660 + $0x40] sm:$0xf]
      %v678 = vld [vmem:[%s660 + $0x44] sm:$0xf]
      %v679 = vld [vmem:[%s660 + $0x48] sm:$0xf]
      %v680 = vld [vmem:[%s660 + $0x4c] sm:$0xf]
      %v681 = vld [vmem:[%s660 + $0x50] sm:$0xf]
      %v682 = vld [vmem:[%s660 + $0x54] sm:$0xf]
      %v683 = vld [vmem:[%s660 + $0x58] sm:$0xf]
      %v684 = vld [vmem:[%s660 + $0x5c] sm:$0xf]
      %v685 = vld [vmem:[%s660 + $0x60] sm:$0xf]
      %v686 = vld [vmem:[%s660 + $0x64] sm:$0xf]
      %v687 = vld [vmem:[%s660 + $0x68] sm:$0xf]
      %v688 = vld [vmem:[%s660 + $0x6c] sm:$0xf]
      %v689 = vld [vmem:[%s660 + $0x70] sm:$0xf]
      %v690 = vld [vmem:[%s660 + $0x74] sm:$0xf]
      %v691 = vld [vmem:[%s660 + $0x78] sm:$0xf]
      %v692 = vld [vmem:[%s660 + $0x7c] sm:$0xf]
      %v694 = vshrl.u32 %v489, 16
      %v697 = vshrl.u32 %v490, 16
      %v733 = vunpack.c.l.b16 %v661
      %v734 = vunpack.c.l.b16 %v662
      %v735 = vunpack.c.l.b16 %v663
      %v736 = vunpack.c.l.b16 %v664
      %v737 = vunpack.c.l.b16 %v665
      %v738 = vunpack.c.l.b16 %v666
      %v739 = vunpack.c.l.b16 %v667
      %v740 = vunpack.c.l.b16 %v668
      %v741 = vunpack.c.l.b16 %v669
      %v742 = vunpack.c.l.b16 %v670
      %v743 = vunpack.c.l.b16 %v671
      %v744 = vunpack.c.l.b16 %v672
      %v745 = vunpack.c.l.b16 %v673
      %v746 = vunpack.c.l.b16 %v674
      %v747 = vunpack.c.l.b16 %v675
      %v748 = vunpack.c.l.b16 %v676
      %v749 = vunpack.c.l.b16 %v677
      %v750 = vunpack.c.l.b16 %v678
      %v751 = vunpack.c.l.b16 %v679
      %v752 = vunpack.c.l.b16 %v680
      %v753 = vunpack.c.l.b16 %v681
      %v754 = vunpack.c.l.b16 %v682
      %v755 = vunpack.c.l.b16 %v683
      %v756 = vunpack.c.l.b16 %v684
      %v757 = vunpack.c.l.b16 %v685
      %v758 = vunpack.c.l.b16 %v686
      %v759 = vunpack.c.l.b16 %v687
      %v760 = vunpack.c.l.b16 %v688
      %v761 = vunpack.c.l.b16 %v689
      %v762 = vunpack.c.l.b16 %v690
      %v763 = vunpack.c.l.b16 %v691
      %v764 = vunpack.c.l.b16 %v692
      %v765 = vpack.c.b16 %v734, %v733
      %v766 = vpack.c.b16 %v736, %v735
      %v767 = vpack.c.b16 %v738, %v737
      %v768 = vpack.c.b16 %v740, %v739
      %v769 = vpack.c.b16 %v742, %v741
      %v770 = vpack.c.b16 %v744, %v743
      %v771 = vpack.c.b16 %v746, %v745
      %v772 = vpack.c.b16 %v748, %v747
      %v773 = vpack.c.b16 %v750, %v749
      %v774 = vpack.c.b16 %v752, %v751
      %v775 = vpack.c.b16 %v754, %v753
      %v776 = vpack.c.b16 %v756, %v755
      %v777 = vpack.c.b16 %v758, %v757
      %v778 = vpack.c.b16 %v760, %v759
      %v779 = vpack.c.b16 %v762, %v761
      %v780 = vpack.c.b16 %v764, %v763
      %797 = vmatprep.subr.bf16.mxu0 0
      %798 = vmatpush1.bf16.msra.mxu0 %v765
      %799 = vmatprep.subr.bf16.mxu0 0
      %800 = vmatpush1.bf16.msra.mxu0 %v766
      %801 = vmatprep.subr.bf16.mxu0 0
      %802 = vmatpush1.bf16.msra.mxu0 %v767
      %803 = vmatprep.subr.bf16.mxu0 0
      %804 = vmatpush1.bf16.msra.mxu0 %v768
      %805 = vmatprep.subr.bf16.mxu0 0
      %806 = vmatpush1.bf16.msra.mxu0 %v769
      %807 = vmatprep.subr.bf16.mxu0 0
      %808 = vmatpush1.bf16.msra.mxu0 %v770
      %809 = vmatprep.subr.bf16.mxu0 0
      %810 = vmatpush1.bf16.msra.mxu0 %v771
      %811 = vmatprep.subr.bf16.mxu0 0
      %812 = vmatpush1.bf16.msra.mxu0 %v772
      %813 = vmatprep.subr.bf16.mxu0 0
      %814 = vmatpush1.bf16.msra.mxu0 %v773
      %815 = vmatprep.subr.bf16.mxu0 0
      %816 = vmatpush1.bf16.msra.mxu0 %v774
      %817 = vmatprep.subr.bf16.mxu0 0
      %818 = vmatpush1.bf16.msra.mxu0 %v775
      %819 = vmatprep.subr.bf16.mxu0 0
      %820 = vmatpush1.bf16.msra.mxu0 %v776
      %821 = vmatprep.subr.bf16.mxu0 0
      %822 = vmatpush1.bf16.msra.mxu0 %v777
      %823 = vmatprep.subr.bf16.mxu0 0
      %824 = vmatpush1.bf16.msra.mxu0 %v778
      %825 = vmatprep.subr.bf16.mxu0 0
      %826 = vmatpush1.bf16.msra.mxu0 %v779
      %827 = vmatprep.subr.bf16.mxu0 0
      %828 = vmatpush1.bf16.msra.mxu0 %v780
      %829 = vmatprep.mubr.bf16.mxu0 %v697
      %830 = vmatmul.mubr.bf16.gmra.mrb[0].mxu0 %v694
      %v831 = vpop.f32.mrb[0].mxu0
      %v832 = vadd.f32 0.0, %v831
      %v833 = vpop.f32.mrb[0].mxu0
      %v834 = vpop.f32.mrb[0].mxu0
      %v835 = vpop.f32.mrb[0].mxu0
      %836 = vdwg.mxu0
      %v837 = vadd.f32 %v659, %v832
      %s838 = scalar_lea.vmem %s3, 256
      %v839 = vld [vmem:[%s838] sm:$0xf]
      %v840 = vld [vmem:[%s838 + $0x4] sm:$0xf]
      %v841 = vld [vmem:[%s838 + $0x8] sm:$0xf]
      %v842 = vld [vmem:[%s838 + $0xc] sm:$0xf]
      %v843 = vld [vmem:[%s838 + $0x10] sm:$0xf]
      %v844 = vld [vmem:[%s838 + $0x14] sm:$0xf]
      %v845 = vld [vmem:[%s838 + $0x18] sm:$0xf]
      %v846 = vld [vmem:[%s838 + $0x1c] sm:$0xf]
      %v847 = vld [vmem:[%s838 + $0x20] sm:$0xf]
      %v848 = vld [vmem:[%s838 + $0x24] sm:$0xf]
      %v849 = vld [vmem:[%s838 + $0x28] sm:$0xf]
      %v850 = vld [vmem:[%s838 + $0x2c] sm:$0xf]
      %v851 = vld [vmem:[%s838 + $0x30] sm:$0xf]
      %v852 = vld [vmem:[%s838 + $0x34] sm:$0xf]
      %v853 = vld [vmem:[%s838 + $0x38] sm:$0xf]
      %v854 = vld [vmem:[%s838 + $0x3c] sm:$0xf]
      %v855 = vld [vmem:[%s838 + $0x40] sm:$0xf]
      %v856 = vld [vmem:[%s838 + $0x44] sm:$0xf]
      %v857 = vld [vmem:[%s838 + $0x48] sm:$0xf]
      %v858 = vld [vmem:[%s838 + $0x4c] sm:$0xf]
      %v859 = vld [vmem:[%s838 + $0x50] sm:$0xf]
      %v860 = vld [vmem:[%s838 + $0x54] sm:$0xf]
      %v861 = vld [vmem:[%s838 + $0x58] sm:$0xf]
      %v862 = vld [vmem:[%s838 + $0x5c] sm:$0xf]
      %v863 = vld [vmem:[%s838 + $0x60] sm:$0xf]
      %v864 = vld [vmem:[%s838 + $0x64] sm:$0xf]
      %v865 = vld [vmem:[%s838 + $0x68] sm:$0xf]
      %v866 = vld [vmem:[%s838 + $0x6c] sm:$0xf]
      %v867 = vld [vmem:[%s838 + $0x70] sm:$0xf]
      %v868 = vld [vmem:[%s838 + $0x74] sm:$0xf]
      %v869 = vld [vmem:[%s838 + $0x78] sm:$0xf]
      %v870 = vld [vmem:[%s838 + $0x7c] sm:$0xf]
      %v873 = vrot.slane %v489, 1
      %v874 = vrot.slane %v490, 1
      %v909 = vunpack.c.l.b16 %v839
      %v910 = vunpack.c.l.b16 %v840
      %v911 = vunpack.c.l.b16 %v841
      %v912 = vunpack.c.l.b16 %v842
      %v913 = vunpack.c.l.b16 %v843
      %v914 = vunpack.c.l.b16 %v844
      %v915 = vunpack.c.l.b16 %v845
      %v916 = vunpack.c.l.b16 %v846
      %v917 = vunpack.c.l.b16 %v847
      %v918 = vunpack.c.l.b16 %v848
      %v919 = vunpack.c.l.b16 %v849
      %v920 = vunpack.c.l.b16 %v850
      %v921 = vunpack.c.l.b16 %v851
      %v922 = vunpack.c.l.b16 %v852
      %v923 = vunpack.c.l.b16 %v853
      %v924 = vunpack.c.l.b16 %v854
      %v925 = vunpack.c.l.b16 %v855
      %v926 = vunpack.c.l.b16 %v856
      %v927 = vunpack.c.l.b16 %v857
      %v928 = vunpack.c.l.b16 %v858
      %v929 = vunpack.c.l.b16 %v859
      %v930 = vunpack.c.l.b16 %v860
      %v931 = vunpack.c.l.b16 %v861
      %v932 = vunpack.c.l.b16 %v862
      %v933 = vunpack.c.l.b16 %v863
      %v934 = vunpack.c.l.b16 %v864
      %v935 = vunpack.c.l.b16 %v865
      %v936 = vunpack.c.l.b16 %v866
      %v937 = vunpack.c.l.b16 %v867
      %v938 = vunpack.c.l.b16 %v868
      %v939 = vunpack.c.l.b16 %v869
      %v940 = vunpack.c.l.b16 %v870
      %v941 = vpack.c.b16 %v910, %v909
      %v942 = vpack.c.b16 %v912, %v911
      %v943 = vpack.c.b16 %v914, %v913
      %v944 = vpack.c.b16 %v916, %v915
      %v945 = vpack.c.b16 %v918, %v917
      %v946 = vpack.c.b16 %v920, %v919
      %v947 = vpack.c.b16 %v922, %v921
      %v948 = vpack.c.b16 %v924, %v923
      %v949 = vpack.c.b16 %v926, %v925
      %v950 = vpack.c.b16 %v928, %v927
      %v951 = vpack.c.b16 %v930, %v929
      %v952 = vpack.c.b16 %v932, %v931
      %v953 = vpack.c.b16 %v934, %v933
      %v954 = vpack.c.b16 %v936, %v935
      %v955 = vpack.c.b16 %v938, %v937
      %v956 = vpack.c.b16 %v940, %v939
      %973 = vmatprep.subr.bf16.mxu0 0
      %974 = vmatpush1.bf16.msra.mxu0 %v941
      %975 = vmatprep.subr.bf16.mxu0 0
      %976 = vmatpush1.bf16.msra.mxu0 %v942
      %977 = vmatprep.subr.bf16.mxu0 0
      %978 = vmatpush1.bf16.msra.mxu0 %v943
      %979 = vmatprep.subr.bf16.mxu0 0
      %980 = vmatpush1.bf16.msra.mxu0 %v944
      %981 = vmatprep.subr.bf16.mxu0 0
      %982 = vmatpush1.bf16.msra.mxu0 %v945
      %983 = vmatprep.subr.bf16.mxu0 0
      %984 = vmatpush1.bf16.msra.mxu0 %v946
      %985 = vmatprep.subr.bf16.mxu0 0
      %986 = vmatpush1.bf16.msra.mxu0 %v947
      %987 = vmatprep.subr.bf16.mxu0 0
      %988 = vmatpush1.bf16.msra.mxu0 %v948
      %989 = vmatprep.subr.bf16.mxu0 0
      %990 = vmatpush1.bf16.msra.mxu0 %v949
      %991 = vmatprep.subr.bf16.mxu0 0
      %992 = vmatpush1.bf16.msra.mxu0 %v950
      %993 = vmatprep.subr.bf16.mxu0 0
      %994 = vmatpush1.bf16.msra.mxu0 %v951
      %995 = vmatprep.subr.bf16.mxu0 0
      %996 = vmatpush1.bf16.msra.mxu0 %v952
      %997 = vmatprep.subr.bf16.mxu0 0
      %998 = vmatpush1.bf16.msra.mxu0 %v953
      %999 = vmatprep.subr.bf16.mxu0 0
      %1000 = vmatpush1.bf16.msra.mxu0 %v954
      %1001 = vmatprep.subr.bf16.mxu0 0
      %1002 = vmatpush1.bf16.msra.mxu0 %v955
      %1003 = vmatprep.subr.bf16.mxu0 0
      %1004 = vmatpush1.bf16.msra.mxu0 %v956
      %1005 = vmatprep.mubr.bf16.mxu0 %v874
      %1006 = vmatmul.mubr.bf16.gmra.mrb[0].mxu0 %v873
      %v1007 = vpop.f32.mrb[0].mxu0
      %v1008 = vadd.f32 0.0, %v1007
      %v1009 = vpop.f32.mrb[0].mxu0
      %v1010 = vpop.f32.mrb[0].mxu0
      %v1011 = vpop.f32.mrb[0].mxu0
      %1012 = vdwg.mxu0
      %v1013 = vadd.f32 %v837, %v1008
      %s1014 = scalar_lea.vmem %s3, 384
      %v1015 = vld [vmem:[%s1014] sm:$0xf]
      %v1016 = vld [vmem:[%s1014 + $0x4] sm:$0xf]
      %v1017 = vld [vmem:[%s1014 + $0x8] sm:$0xf]
      %v1018 = vld [vmem:[%s1014 + $0xc] sm:$0xf]
      %v1019 = vld [vmem:[%s1014 + $0x10] sm:$0xf]
      %v1020 = vld [vmem:[%s1014 + $0x14] sm:$0xf]
      %v1021 = vld [vmem:[%s1014 + $0x18] sm:$0xf]
      %v1022 = vld [vmem:[%s1014 + $0x1c] sm:$0xf]
      %v1023 = vld [vmem:[%s1014 + $0x20] sm:$0xf]
      %v1024 = vld [vmem:[%s1014 + $0x24] sm:$0xf]
      %v1025 = vld [vmem:[%s1014 + $0x28] sm:$0xf]
      %v1026 = vld [vmem:[%s1014 + $0x2c] sm:$0xf]
      %v1027 = vld [vmem:[%s1014 + $0x30] sm:$0xf]
      %v1028 = vld [vmem:[%s1014 + $0x34] sm:$0xf]
      %v1029 = vld [vmem:[%s1014 + $0x38] sm:$0xf]
      %v1030 = vld [vmem:[%s1014 + $0x3c] sm:$0xf]
      %v1031 = vld [vmem:[%s1014 + $0x40] sm:$0xf]
      %v1032 = vld [vmem:[%s1014 + $0x44] sm:$0xf]
      %v1033 = vld [vmem:[%s1014 + $0x48] sm:$0xf]
      %v1034 = vld [vmem:[%s1014 + $0x4c] sm:$0xf]
      %v1035 = vld [vmem:[%s1014 + $0x50] sm:$0xf]
      %v1036 = vld [vmem:[%s1014 + $0x54] sm:$0xf]
      %v1037 = vld [vmem:[%s1014 + $0x58] sm:$0xf]
      %v1038 = vld [vmem:[%s1014 + $0x5c] sm:$0xf]
      %v1039 = vld [vmem:[%s1014 + $0x60] sm:$0xf]
      %v1040 = vld [vmem:[%s1014 + $0x64] sm:$0xf]
      %v1041 = vld [vmem:[%s1014 + $0x68] sm:$0xf]
      %v1042 = vld [vmem:[%s1014 + $0x6c] sm:$0xf]
      %v1043 = vld [vmem:[%s1014 + $0x70] sm:$0xf]
      %v1044 = vld [vmem:[%s1014 + $0x74] sm:$0xf]
      %v1045 = vld [vmem:[%s1014 + $0x78] sm:$0xf]
      %v1046 = vld [vmem:[%s1014 + $0x7c] sm:$0xf]
      %v1047 = vrot.slane %v694, 1
      %v1048 = vrot.slane %v697, 1
      %v1083 = vunpack.c.l.b16 %v1015
      %v1084 = vunpack.c.l.b16 %v1016
      %v1085 = vunpack.c.l.b16 %v1017
      %v1086 = vunpack.c.l.b16 %v1018
      %v1087 = vunpack.c.l.b16 %v1019
      %v1088 = vunpack.c.l.b16 %v1020
      %v1089 = vunpack.c.l.b16 %v1021
      %v1090 = vunpack.c.l.b16 %v1022
      %v1091 = vunpack.c.l.b16 %v1023
      %v1092 = vunpack.c.l.b16 %v1024
      %v1093 = vunpack.c.l.b16 %v1025
      %v1094 = vunpack.c.l.b16 %v1026
      %v1095 = vunpack.c.l.b16 %v1027
      %v1096 = vunpack.c.l.b16 %v1028
      %v1097 = vunpack.c.l.b16 %v1029
      %v1098 = vunpack.c.l.b16 %v1030
      %v1099 = vunpack.c.l.b16 %v1031
      %v1100 = vunpack.c.l.b16 %v1032
      %v1101 = vunpack.c.l.b16 %v1033
      %v1102 = vunpack.c.l.b16 %v1034
      %v1103 = vunpack.c.l.b16 %v1035
      %v1104 = vunpack.c.l.b16 %v1036
      %v1105 = vunpack.c.l.b16 %v1037
      %v1106 = vunpack.c.l.b16 %v1038
      %v1107 = vunpack.c.l.b16 %v1039
      %v1108 = vunpack.c.l.b16 %v1040
      %v1109 = vunpack.c.l.b16 %v1041
      %v1110 = vunpack.c.l.b16 %v1042
      %v1111 = vunpack.c.l.b16 %v1043
      %v1112 = vunpack.c.l.b16 %v1044
      %v1113 = vunpack.c.l.b16 %v1045
      %v1114 = vunpack.c.l.b16 %v1046
      %v1115 = vpack.c.b16 %v1084, %v1083
      %v1116 = vpack.c.b16 %v1086, %v1085
      %v1117 = vpack.c.b16 %v1088, %v1087
      %v1118 = vpack.c.b16 %v1090, %v1089
      %v1119 = vpack.c.b16 %v1092, %v1091
      %v1120 = vpack.c.b16 %v1094, %v1093
      %v1121 = vpack.c.b16 %v1096, %v1095
      %v1122 = vpack.c.b16 %v1098, %v1097
      %v1123 = vpack.c.b16 %v1100, %v1099
      %v1124 = vpack.c.b16 %v1102, %v1101
      %v1125 = vpack.c.b16 %v1104, %v1103
      %v1126 = vpack.c.b16 %v1106, %v1105
      %v1127 = vpack.c.b16 %v1108, %v1107
      %v1128 = vpack.c.b16 %v1110, %v1109
      %v1129 = vpack.c.b16 %v1112, %v1111
      %v1130 = vpack.c.b16 %v1114, %v1113
      %1147 = vmatprep.subr.bf16.mxu0 0
      %1148 = vmatpush1.bf16.msra.mxu0 %v1115
      %1149 = vmatprep.subr.bf16.mxu0 0
      %1150 = vmatpush1.bf16.msra.mxu0 %v1116
      %1151 = vmatprep.subr.bf16.mxu0 0
      %1152 = vmatpush1.bf16.msra.mxu0 %v1117
      %1153 = vmatprep.subr.bf16.mxu0 0
      %1154 = vmatpush1.bf16.msra.mxu0 %v1118
      %1155 = vmatprep.subr.bf16.mxu0 0
      %1156 = vmatpush1.bf16.msra.mxu0 %v1119
      %1157 = vmatprep.subr.bf16.mxu0 0
      %1158 = vmatpush1.bf16.msra.mxu0 %v1120
      %1159 = vmatprep.subr.bf16.mxu0 0
      %1160 = vmatpush1.bf16.msra.mxu0 %v1121
      %1161 = vmatprep.subr.bf16.mxu0 0
      %1162 = vmatpush1.bf16.msra.mxu0 %v1122
      %1163 = vmatprep.subr.bf16.mxu0 0
      %1164 = vmatpush1.bf16.msra.mxu0 %v1123
      %1165 = vmatprep.subr.bf16.mxu0 0
      %1166 = vmatpush1.bf16.msra.mxu0 %v1124
      %1167 = vmatprep.subr.bf16.mxu0 0
      %1168 = vmatpush1.bf16.msra.mxu0 %v1125
      %1169 = vmatprep.subr.bf16.mxu0 0
      %1170 = vmatpush1.bf16.msra.mxu0 %v1126
      %1171 = vmatprep.subr.bf16.mxu0 0
      %1172 = vmatpush1.bf16.msra.mxu0 %v1127
      %1173 = vmatprep.subr.bf16.mxu0 0
      %1174 = vmatpush1.bf16.msra.mxu0 %v1128
      %1175 = vmatprep.subr.bf16.mxu0 0
      %1176 = vmatpush1.bf16.msra.mxu0 %v1129
      %1177 = vmatprep.subr.bf16.mxu0 0
      %1178 = vmatpush1.bf16.msra.mxu0 %v1130
      %1179 = vmatprep.mubr.bf16.mxu0 %v1048
      %1180 = vmatmul.mubr.bf16.gmra.mrb[0].mxu0 %v1047
      %v1181 = vpop.f32.mrb[0].mxu0
      %v1182 = vadd.f32 0.0, %v1181
      %v1183 = vpop.f32.mrb[0].mxu0
      %v1184 = vpop.f32.mrb[0].mxu0
      %v1185 = vpop.f32.mrb[0].mxu0
      %1186 = vdwg.mxu0
      %v1187 = vadd.f32 %v1013, %v1182
      %s1188 = scalar_lea.vmem %s3, 512
      %v1189 = vld [vmem:[%s1188] sm:$0xf]
      %v1190 = vld [vmem:[%s1188 + $0x4] sm:$0xf]
      %v1191 = vld [vmem:[%s1188 + $0x8] sm:$0xf]
      %v1192 = vld [vmem:[%s1188 + $0xc] sm:$0xf]
      %v1193 = vld [vmem:[%s1188 + $0x10] sm:$0xf]
      %v1194 = vld [vmem:[%s1188 + $0x14] sm:$0xf]
      %v1195 = vld [vmem:[%s1188 + $0x18] sm:$0xf]
      %v1196 = vld [vmem:[%s1188 + $0x1c] sm:$0xf]
      %v1197 = vld [vmem:[%s1188 + $0x20] sm:$0xf]
      %v1198 = vld [vmem:[%s1188 + $0x24] sm:$0xf]
      %v1199 = vld [vmem:[%s1188 + $0x28] sm:$0xf]
      %v1200 = vld [vmem:[%s1188 + $0x2c] sm:$0xf]
      %v1201 = vld [vmem:[%s1188 + $0x30] sm:$0xf]
      %v1202 = vld [vmem:[%s1188 + $0x34] sm:$0xf]
      %v1203 = vld [vmem:[%s1188 + $0x38] sm:$0xf]
      %v1204 = vld [vmem:[%s1188 + $0x3c] sm:$0xf]
      %v1205 = vld [vmem:[%s1188 + $0x40] sm:$0xf]
      %v1206 = vld [vmem:[%s1188 + $0x44] sm:$0xf]
      %v1207 = vld [vmem:[%s1188 + $0x48] sm:$0xf]
      %v1208 = vld [vmem:[%s1188 + $0x4c] sm:$0xf]
      %v1209 = vld [vmem:[%s1188 + $0x50] sm:$0xf]
      %v1210 = vld [vmem:[%s1188 + $0x54] sm:$0xf]
      %v1211 = vld [vmem:[%s1188 + $0x58] sm:$0xf]
      %v1212 = vld [vmem:[%s1188 + $0x5c] sm:$0xf]
      %v1213 = vld [vmem:[%s1188 + $0x60] sm:$0xf]
      %v1214 = vld [vmem:[%s1188 + $0x64] sm:$0xf]
      %v1215 = vld [vmem:[%s1188 + $0x68] sm:$0xf]
      %v1216 = vld [vmem:[%s1188 + $0x6c] sm:$0xf]
      %v1217 = vld [vmem:[%s1188 + $0x70] sm:$0xf]
      %v1218 = vld [vmem:[%s1188 + $0x74] sm:$0xf]
      %v1219 = vld [vmem:[%s1188 + $0x78] sm:$0xf]
      %v1220 = vld [vmem:[%s1188 + $0x7c] sm:$0xf]
      %v1221 = vrot.slane %v489, 2
      %v1222 = vrot.slane %v490, 2
      %v1257 = vunpack.c.l.b16 %v1189
      %v1258 = vunpack.c.l.b16 %v1190
      %v1259 = vunpack.c.l.b16 %v1191
      %v1260 = vunpack.c.l.b16 %v1192
      %v1261 = vunpack.c.l.b16 %v1193
      %v1262 = vunpack.c.l.b16 %v1194
      %v1263 = vunpack.c.l.b16 %v1195
      %v1264 = vunpack.c.l.b16 %v1196
      %v1265 = vunpack.c.l.b16 %v1197
      %v1266 = vunpack.c.l.b16 %v1198
      %v1267 = vunpack.c.l.b16 %v1199
      %v1268 = vunpack.c.l.b16 %v1200
      %v1269 = vunpack.c.l.b16 %v1201
      %v1270 = vunpack.c.l.b16 %v1202
      %v1271 = vunpack.c.l.b16 %v1203
      %v1272 = vunpack.c.l.b16 %v1204
      %v1273 = vunpack.c.l.b16 %v1205
      %v1274 = vunpack.c.l.b16 %v1206
      %v1275 = vunpack.c.l.b16 %v1207
      %v1276 = vunpack.c.l.b16 %v1208
      %v1277 = vunpack.c.l.b16 %v1209
      %v1278 = vunpack.c.l.b16 %v1210
      %v1279 = vunpack.c.l.b16 %v1211
      %v1280 = vunpack.c.l.b16 %v1212
      %v1281 = vunpack.c.l.b16 %v1213
      %v1282 = vunpack.c.l.b16 %v1214
      %v1283 = vunpack.c.l.b16 %v1215
      %v1284 = vunpack.c.l.b16 %v1216
      %v1285 = vunpack.c.l.b16 %v1217
      %v1286 = vunpack.c.l.b16 %v1218
      %v1287 = vunpack.c.l.b16 %v1219
      %v1288 = vunpack.c.l.b16 %v1220
      %v1289 = vpack.c.b16 %v1258, %v1257
      %v1290 = vpack.c.b16 %v1260, %v1259
      %v1291 = vpack.c.b16 %v1262, %v1261
      %v1292 = vpack.c.b16 %v1264, %v1263
      %v1293 = vpack.c.b16 %v1266, %v1265
      %v1294 = vpack.c.b16 %v1268, %v1267
      %v1295 = vpack.c.b16 %v1270, %v1269
      %v1296 = vpack.c.b16 %v1272, %v1271
      %v1297 = vpack.c.b16 %v1274, %v1273
      %v1298 = vpack.c.b16 %v1276, %v1275
      %v1299 = vpack.c.b16 %v1278, %v1277
      %v1300 = vpack.c.b16 %v1280, %v1279
      %v1301 = vpack.c.b16 %v1282, %v1281
      %v1302 = vpack.c.b16 %v1284, %v1283
      %v1303 = vpack.c.b16 %v1286, %v1285
      %v1304 = vpack.c.b16 %v1288, %v1287
      %1321 = vmatprep.subr.bf16.mxu0 0
      %1322 = vmatpush1.bf16.msra.mxu0 %v1289
      %1323 = vmatprep.subr.bf16.mxu0 0
      %1324 = vmatpush1.bf16.msra.mxu0 %v1290
      %1325 = vmatprep.subr.bf16.mxu0 0
      %1326 = vmatpush1.bf16.msra.mxu0 %v1291
      %1327 = vmatprep.subr.bf16.mxu0 0
      %1328 = vmatpush1.bf16.msra.mxu0 %v1292
      %1329 = vmatprep.subr.bf16.mxu0 0
      %1330 = vmatpush1.bf16.msra.mxu0 %v1293
      %1331 = vmatprep.subr.bf16.mxu0 0
      %1332 = vmatpush1.bf16.msra.mxu0 %v1294
      %1333 = vmatprep.subr.bf16.mxu0 0
      %1334 = vmatpush1.bf16.msra.mxu0 %v1295
      %1335 = vmatprep.subr.bf16.mxu0 0
      %1336 = vmatpush1.bf16.msra.mxu0 %v1296
      %1337 = vmatprep.subr.bf16.mxu0 0
      %1338 = vmatpush1.bf16.msra.mxu0 %v1297
      %1339 = vmatprep.subr.bf16.mxu0 0
      %1340 = vmatpush1.bf16.msra.mxu0 %v1298
      %1341 = vmatprep.subr.bf16.mxu0 0
      %1342 = vmatpush1.bf16.msra.mxu0 %v1299
      %1343 = vmatprep.subr.bf16.mxu0 0
      %1344 = vmatpush1.bf16.msra.mxu0 %v1300
      %1345 = vmatprep.subr.bf16.mxu0 0
      %1346 = vmatpush1.bf16.msra.mxu0 %v1301
      %1347 = vmatprep.subr.bf16.mxu0 0
      %1348 = vmatpush1.bf16.msra.mxu0 %v1302
      %1349 = vmatprep.subr.bf16.mxu0 0
      %1350 = vmatpush1.bf16.msra.mxu0 %v1303
      %1351 = vmatprep.subr.bf16.mxu0 0
      %1352 = vmatpush1.bf16.msra.mxu0 %v1304
      %1353 = vmatprep.mubr.bf16.mxu0 %v1222
      %1354 = vmatmul.mubr.bf16.gmra.mrb[0].mxu0 %v1221
      %v1355 = vpop.f32.mrb[0].mxu0
      %v1356 = vadd.f32 0.0, %v1355
      %v1357 = vpop.f32.mrb[0].mxu0
      %v1358 = vpop.f32.mrb[0].mxu0
      %v1359 = vpop.f32.mrb[0].mxu0
      %1360 = vdwg.mxu0
      %v1361 = vadd.f32 %v1187, %v1356
      %s1362 = scalar_lea.vmem %s3, 640
      %v1363 = vld [vmem:[%s1362] sm:$0xf]
      %v1364 = vld [vmem:[%s1362 + $0x4] sm:$0xf]
      %v1365 = vld [vmem:[%s1362 + $0x8] sm:$0xf]
      %v1366 = vld [vmem:[%s1362 + $0xc] sm:$0xf]
      %v1367 = vld [vmem:[%s1362 + $0x10] sm:$0xf]
      %v1368 = vld [vmem:[%s1362 + $0x14] sm:$0xf]
      %v1369 = vld [vmem:[%s1362 + $0x18] sm:$0xf]
      %v1370 = vld [vmem:[%s1362 + $0x1c] sm:$0xf]
      %v1371 = vld [vmem:[%s1362 + $0x20] sm:$0xf]
      %v1372 = vld [vmem:[%s1362 + $0x24] sm:$0xf]
      %v1373 = vld [vmem:[%s1362 + $0x28] sm:$0xf]
      %v1374 = vld [vmem:[%s1362 + $0x2c] sm:$0xf]
      %v1375 = vld [vmem:[%s1362 + $0x30] sm:$0xf]
      %v1376 = vld [vmem:[%s1362 + $0x34] sm:$0xf]
      %v1377 = vld [vmem:[%s1362 + $0x38] sm:$0xf]
      %v1378 = vld [vmem:[%s1362 + $0x3c] sm:$0xf]
      %v1379 = vld [vmem:[%s1362 + $0x40] sm:$0xf]
      %v1380 = vld [vmem:[%s1362 + $0x44] sm:$0xf]
      %v1381 = vld [vmem:[%s1362 + $0x48] sm:$0xf]
      %v1382 = vld [vmem:[%s1362 + $0x4c] sm:$0xf]
      %v1383 = vld [vmem:[%s1362 + $0x50] sm:$0xf]
      %v1384 = vld [vmem:[%s1362 + $0x54] sm:$0xf]
      %v1385 = vld [vmem:[%s1362 + $0x58] sm:$0xf]
      %v1386 = vld [vmem:[%s1362 + $0x5c] sm:$0xf]
      %v1387 = vld [vmem:[%s1362 + $0x60] sm:$0xf]
      %v1388 = vld [vmem:[%s1362 + $0x64] sm:$0xf]
      %v1389 = vld [vmem:[%s1362 + $0x68] sm:$0xf]
      %v1390 = vld [vmem:[%s1362 + $0x6c] sm:$0xf]
      %v1391 = vld [vmem:[%s1362 + $0x70] sm:$0xf]
      %v1392 = vld [vmem:[%s1362 + $0x74] sm:$0xf]
      %v1393 = vld [vmem:[%s1362 + $0x78] sm:$0xf]
      %v1394 = vld [vmem:[%s1362 + $0x7c] sm:$0xf]
      %v1395 = vrot.slane %v694, 2
      %v1396 = vrot.slane %v697, 2
      %v1431 = vunpack.c.l.b16 %v1363
      %v1432 = vunpack.c.l.b16 %v1364
      %v1433 = vunpack.c.l.b16 %v1365
      %v1434 = vunpack.c.l.b16 %v1366
      %v1435 = vunpack.c.l.b16 %v1367
      %v1436 = vunpack.c.l.b16 %v1368
      %v1437 = vunpack.c.l.b16 %v1369
      %v1438 = vunpack.c.l.b16 %v1370
      %v1439 = vunpack.c.l.b16 %v1371
      %v1440 = vunpack.c.l.b16 %v1372
      %v1441 = vunpack.c.l.b16 %v1373
      %v1442 = vunpack.c.l.b16 %v1374
      %v1443 = vunpack.c.l.b16 %v1375
      %v1444 = vunpack.c.l.b16 %v1376
      %v1445 = vunpack.c.l.b16 %v1377
      %v1446 = vunpack.c.l.b16 %v1378
      %v1447 = vunpack.c.l.b16 %v1379
      %v1448 = vunpack.c.l.b16 %v1380
      %v1449 = vunpack.c.l.b16 %v1381
      %v1450 = vunpack.c.l.b16 %v1382
      %v1451 = vunpack.c.l.b16 %v1383
      %v1452 = vunpack.c.l.b16 %v1384
      %v1453 = vunpack.c.l.b16 %v1385
      %v1454 = vunpack.c.l.b16 %v1386
      %v1455 = vunpack.c.l.b16 %v1387
      %v1456 = vunpack.c.l.b16 %v1388
      %v1457 = vunpack.c.l.b16 %v1389
      %v1458 = vunpack.c.l.b16 %v1390
      %v1459 = vunpack.c.l.b16 %v1391
      %v1460 = vunpack.c.l.b16 %v1392
      %v1461 = vunpack.c.l.b16 %v1393
      %v1462 = vunpack.c.l.b16 %v1394
      %v1463 = vpack.c.b16 %v1432, %v1431
      %v1464 = vpack.c.b16 %v1434, %v1433
      %v1465 = vpack.c.b16 %v1436, %v1435
      %v1466 = vpack.c.b16 %v1438, %v1437
      %v1467 = vpack.c.b16 %v1440, %v1439
      %v1468 = vpack.c.b16 %v1442, %v1441
      %v1469 = vpack.c.b16 %v1444, %v1443
      %v1470 = vpack.c.b16 %v1446, %v1445
      %v1471 = vpack.c.b16 %v1448, %v1447
      %v1472 = vpack.c.b16 %v1450, %v1449
      %v1473 = vpack.c.b16 %v1452, %v1451
      %v1474 = vpack.c.b16 %v1454, %v1453
      %v1475 = vpack.c.b16 %v1456, %v1455
      %v1476 = vpack.c.b16 %v1458, %v1457
      %v1477 = vpack.c.b16 %v1460, %v1459
      %v1478 = vpack.c.b16 %v1462, %v1461
      %1495 = vmatprep.subr.bf16.mxu0 0
      %1496 = vmatpush1.bf16.msra.mxu0 %v1463
      %1497 = vmatprep.subr.bf16.mxu0 0
      %1498 = vmatpush1.bf16.msra.mxu0 %v1464
      %1499 = vmatprep.subr.bf16.mxu0 0
      %1500 = vmatpush1.bf16.msra.mxu0 %v1465
      %1501 = vmatprep.subr.bf16.mxu0 0
      %1502 = vmatpush1.bf16.msra.mxu0 %v1466
      %1503 = vmatprep.subr.bf16.mxu0 0
      %1504 = vmatpush1.bf16.msra.mxu0 %v1467
      %1505 = vmatprep.subr.bf16.mxu0 0
      %1506 = vmatpush1.bf16.msra.mxu0 %v1468
      %1507 = vmatprep.subr.bf16.mxu0 0
      %1508 = vmatpush1.bf16.msra.mxu0 %v1469
      %1509 = vmatprep.subr.bf16.mxu0 0
      %1510 = vmatpush1.bf16.msra.mxu0 %v1470
      %1511 = vmatprep.subr.bf16.mxu0 0
      %1512 = vmatpush1.bf16.msra.mxu0 %v1471
      %1513 = vmatprep.subr.bf16.mxu0 0
      %1514 = vmatpush1.bf16.msra.mxu0 %v1472
      %1515 = vmatprep.subr.bf16.mxu0 0
      %1516 = vmatpush1.bf16.msra.mxu0 %v1473
      %1517 = vmatprep.subr.bf16.mxu0 0
      %1518 = vmatpush1.bf16.msra.mxu0 %v1474
      %1519 = vmatprep.subr.bf16.mxu0 0
      %1520 = vmatpush1.bf16.msra.mxu0 %v1475
      %1521 = vmatprep.subr.bf16.mxu0 0
      %1522 = vmatpush1.bf16.msra.mxu0 %v1476
      %1523 = vmatprep.subr.bf16.mxu0 0
      %1524 = vmatpush1.bf16.msra.mxu0 %v1477
      %1525 = vmatprep.subr.bf16.mxu0 0
      %1526 = vmatpush1.bf16.msra.mxu0 %v1478
      %1527 = vmatprep.mubr.bf16.mxu0 %v1396
      %1528 = vmatmul.mubr.bf16.gmra.mrb[0].mxu0 %v1395
      %v1529 = vpop.f32.mrb[0].mxu0
      %v1530 = vadd.f32 0.0, %v1529
      %v1531 = vpop.f32.mrb[0].mxu0
      %v1532 = vpop.f32.mrb[0].mxu0
      %v1533 = vpop.f32.mrb[0].mxu0
      %1534 = vdwg.mxu0
      %v1535 = vadd.f32 %v1361, %v1530
      %s1536 = scalar_lea.vmem %s3, 768
      %v1537 = vld [vmem:[%s1536] sm:$0xf]
      %v1538 = vld [vmem:[%s1536 + $0x4] sm:$0xf]
      %v1539 = vld [vmem:[%s1536 + $0x8] sm:$0xf]
      %v1540 = vld [vmem:[%s1536 + $0xc] sm:$0xf]
      %v1541 = vld [vmem:[%s1536 + $0x10] sm:$0xf]
      %v1542 = vld [vmem:[%s1536 + $0x14] sm:$0xf]
      %v1543 = vld [vmem:[%s1536 + $0x18] sm:$0xf]
      %v1544 = vld [vmem:[%s1536 + $0x1c] sm:$0xf]
      %v1545 = vld [vmem:[%s1536 + $0x20] sm:$0xf]
      %v1546 = vld [vmem:[%s1536 + $0x24] sm:$0xf]
      %v1547 = vld [vmem:[%s1536 + $0x28] sm:$0xf]
      %v1548 = vld [vmem:[%s1536 + $0x2c] sm:$0xf]
      %v1549 = vld [vmem:[%s1536 + $0x30] sm:$0xf]
      %v1550 = vld [vmem:[%s1536 + $0x34] sm:$0xf]
      %v1551 = vld [vmem:[%s1536 + $0x38] sm:$0xf]
      %v1552 = vld [vmem:[%s1536 + $0x3c] sm:$0xf]
      %v1553 = vld [vmem:[%s1536 + $0x40] sm:$0xf]
      %v1554 = vld [vmem:[%s1536 + $0x44] sm:$0xf]
      %v1555 = vld [vmem:[%s1536 + $0x48] sm:$0xf]
      %v1556 = vld [vmem:[%s1536 + $0x4c] sm:$0xf]
      %v1557 = vld [vmem:[%s1536 + $0x50] sm:$0xf]
      %v1558 = vld [vmem:[%s1536 + $0x54] sm:$0xf]
      %v1559 = vld [vmem:[%s1536 + $0x58] sm:$0xf]
      %v1560 = vld [vmem:[%s1536 + $0x5c] sm:$0xf]
      %v1561 = vld [vmem:[%s1536 + $0x60] sm:$0xf]
      %v1562 = vld [vmem:[%s1536 + $0x64] sm:$0xf]
      %v1563 = vld [vmem:[%s1536 + $0x68] sm:$0xf]
      %v1564 = vld [vmem:[%s1536 + $0x6c] sm:$0xf]
      %v1565 = vld [vmem:[%s1536 + $0x70] sm:$0xf]
      %v1566 = vld [vmem:[%s1536 + $0x74] sm:$0xf]
      %v1567 = vld [vmem:[%s1536 + $0x78] sm:$0xf]
      %v1568 = vld [vmem:[%s1536 + $0x7c] sm:$0xf]
      %v1569 = vrot.slane %v489, 3
      %v1570 = vrot.slane %v490, 3
      %v1605 = vunpack.c.l.b16 %v1537
      %v1606 = vunpack.c.l.b16 %v1538
      %v1607 = vunpack.c.l.b16 %v1539
      %v1608 = vunpack.c.l.b16 %v1540
      %v1609 = vunpack.c.l.b16 %v1541
      %v1610 = vunpack.c.l.b16 %v1542
      %v1611 = vunpack.c.l.b16 %v1543
      %v1612 = vunpack.c.l.b16 %v1544
      %v1613 = vunpack.c.l.b16 %v1545
      %v1614 = vunpack.c.l.b16 %v1546
      %v1615 = vunpack.c.l.b16 %v1547
      %v1616 = vunpack.c.l.b16 %v1548
      %v1617 = vunpack.c.l.b16 %v1549
      %v1618 = vunpack.c.l.b16 %v1550
      %v1619 = vunpack.c.l.b16 %v1551
      %v1620 = vunpack.c.l.b16 %v1552
      %v1621 = vunpack.c.l.b16 %v1553
      %v1622 = vunpack.c.l.b16 %v1554
      %v1623 = vunpack.c.l.b16 %v1555
      %v1624 = vunpack.c.l.b16 %v1556
      %v1625 = vunpack.c.l.b16 %v1557
      %v1626 = vunpack.c.l.b16 %v1558
      %v1627 = vunpack.c.l.b16 %v1559
      %v1628 = vunpack.c.l.b16 %v1560
      %v1629 = vunpack.c.l.b16 %v1561
      %v1630 = vunpack.c.l.b16 %v1562
      %v1631 = vunpack.c.l.b16 %v1563
      %v1632 = vunpack.c.l.b16 %v1564
      %v1633 = vunpack.c.l.b16 %v1565
      %v1634 = vunpack.c.l.b16 %v1566
      %v1635 = vunpack.c.l.b16 %v1567
      %v1636 = vunpack.c.l.b16 %v1568
      %v1637 = vpack.c.b16 %v1606, %v1605
      %v1638 = vpack.c.b16 %v1608, %v1607
      %v1639 = vpack.c.b16 %v1610, %v1609
      %v1640 = vpack.c.b16 %v1612, %v1611
      %v1641 = vpack.c.b16 %v1614, %v1613
      %v1642 = vpack.c.b16 %v1616, %v1615
      %v1643 = vpack.c.b16 %v1618, %v1617
      %v1644 = vpack.c.b16 %v1620, %v1619
      %v1645 = vpack.c.b16 %v1622, %v1621
      %v1646 = vpack.c.b16 %v1624, %v1623
      %v1647 = vpack.c.b16 %v1626, %v1625
      %v1648 = vpack.c.b16 %v1628, %v1627
      %v1649 = vpack.c.b16 %v1630, %v1629
      %v1650 = vpack.c.b16 %v1632, %v1631
      %v1651 = vpack.c.b16 %v1634, %v1633
      %v1652 = vpack.c.b16 %v1636, %v1635
      %1669 = vmatprep.subr.bf16.mxu0 0
      %1670 = vmatpush1.bf16.msra.mxu0 %v1637
      %1671 = vmatprep.subr.bf16.mxu0 0
      %1672 = vmatpush1.bf16.msra.mxu0 %v1638
      %1673 = vmatprep.subr.bf16.mxu0 0
      %1674 = vmatpush1.bf16.msra.mxu0 %v1639
      %1675 = vmatprep.subr.bf16.mxu0 0
      %1676 = vmatpush1.bf16.msra.mxu0 %v1640
      %1677 = vmatprep.subr.bf16.mxu0 0
      %1678 = vmatpush1.bf16.msra.mxu0 %v1641
      %1679 = vmatprep.subr.bf16.mxu0 0
      %1680 = vmatpush1.bf16.msra.mxu0 %v1642
      %1681 = vmatprep.subr.bf16.mxu0 0
      %1682 = vmatpush1.bf16.msra.mxu0 %v1643
      %1683 = vmatprep.subr.bf16.mxu0 0
      %1684 = vmatpush1.bf16.msra.mxu0 %v1644
      %1685 = vmatprep.subr.bf16.mxu0 0
      %1686 = vmatpush1.bf16.msra.mxu0 %v1645
      %1687 = vmatprep.subr.bf16.mxu0 0
      %1688 = vmatpush1.bf16.msra.mxu0 %v1646
      %1689 = vmatprep.subr.bf16.mxu0 0
      %1690 = vmatpush1.bf16.msra.mxu0 %v1647
      %1691 = vmatprep.subr.bf16.mxu0 0
      %1692 = vmatpush1.bf16.msra.mxu0 %v1648
      %1693 = vmatprep.subr.bf16.mxu0 0
      %1694 = vmatpush1.bf16.msra.mxu0 %v1649
      %1695 = vmatprep.subr.bf16.mxu0 0
      %1696 = vmatpush1.bf16.msra.mxu0 %v1650
      %1697 = vmatprep.subr.bf16.mxu0 0
      %1698 = vmatpush1.bf16.msra.mxu0 %v1651
      %1699 = vmatprep.subr.bf16.mxu0 0
      %1700 = vmatpush1.bf16.msra.mxu0 %v1652
      %1701 = vmatprep.mubr.bf16.mxu0 %v1570
      %1702 = vmatmul.mubr.bf16.gmra.mrb[0].mxu0 %v1569
      %v1703 = vpop.f32.mrb[0].mxu0
      %v1704 = vadd.f32 0.0, %v1703
      %v1705 = vpop.f32.mrb[0].mxu0
      %v1706 = vpop.f32.mrb[0].mxu0
      %v1707 = vpop.f32.mrb[0].mxu0
      %1708 = vdwg.mxu0
      %v1709 = vadd.f32 %v1535, %v1704
      %s1710 = scalar_lea.vmem %s3, 896
      %v1711 = vld [vmem:[%s1710] sm:$0xf]
      %v1712 = vld [vmem:[%s1710 + $0x4] sm:$0xf]
      %v1713 = vld [vmem:[%s1710 + $0x8] sm:$0xf]
      %v1714 = vld [vmem:[%s1710 + $0xc] sm:$0xf]
      %v1715 = vld [vmem:[%s1710 + $0x10] sm:$0xf]
      %v1716 = vld [vmem:[%s1710 + $0x14] sm:$0xf]
      %v1717 = vld [vmem:[%s1710 + $0x18] sm:$0xf]
      %v1718 = vld [vmem:[%s1710 + $0x1c] sm:$0xf]
      %v1719 = vld [vmem:[%s1710 + $0x20] sm:$0xf]
      %v1720 = vld [vmem:[%s1710 + $0x24] sm:$0xf]
      %v1721 = vld [vmem:[%s1710 + $0x28] sm:$0xf]
      %v1722 = vld [vmem:[%s1710 + $0x2c] sm:$0xf]
      %v1723 = vld [vmem:[%s1710 + $0x30] sm:$0xf]
      %v1724 = vld [vmem:[%s1710 + $0x34] sm:$0xf]
      %v1725 = vld [vmem:[%s1710 + $0x38] sm:$0xf]
      %v1726 = vld [vmem:[%s1710 + $0x3c] sm:$0xf]
      %v1727 = vld [vmem:[%s1710 + $0x40] sm:$0xf]
      %v1728 = vld [vmem:[%s1710 + $0x44] sm:$0xf]
      %v1729 = vld [vmem:[%s1710 + $0x48] sm:$0xf]
      %v1730 = vld [vmem:[%s1710 + $0x4c] sm:$0xf]
      %v1731 = vld [vmem:[%s1710 + $0x50] sm:$0xf]
      %v1732 = vld [vmem:[%s1710 + $0x54] sm:$0xf]
      %v1733 = vld [vmem:[%s1710 + $0x58] sm:$0xf]
      %v1734 = vld [vmem:[%s1710 + $0x5c] sm:$0xf]
      %v1735 = vld [vmem:[%s1710 + $0x60] sm:$0xf]
      %v1736 = vld [vmem:[%s1710 + $0x64] sm:$0xf]
      %v1737 = vld [vmem:[%s1710 + $0x68] sm:$0xf]
      %v1738 = vld [vmem:[%s1710 + $0x6c] sm:$0xf]
      %v1739 = vld [vmem:[%s1710 + $0x70] sm:$0xf]
      %v1740 = vld [vmem:[%s1710 + $0x74] sm:$0xf]
      %v1741 = vld [vmem:[%s1710 + $0x78] sm:$0xf]
      %v1742 = vld [vmem:[%s1710 + $0x7c] sm:$0xf]
      %v1743 = vrot.slane %v694, 3
      %v1744 = vrot.slane %v697, 3
      %v1779 = vunpack.c.l.b16 %v1711
      %v1780 = vunpack.c.l.b16 %v1712
      %v1781 = vunpack.c.l.b16 %v1713
      %v1782 = vunpack.c.l.b16 %v1714
      %v1783 = vunpack.c.l.b16 %v1715
      %v1784 = vunpack.c.l.b16 %v1716
      %v1785 = vunpack.c.l.b16 %v1717
      %v1786 = vunpack.c.l.b16 %v1718
      %v1787 = vunpack.c.l.b16 %v1719
      %v1788 = vunpack.c.l.b16 %v1720
      %v1789 = vunpack.c.l.b16 %v1721
      %v1790 = vunpack.c.l.b16 %v1722
      %v1791 = vunpack.c.l.b16 %v1723
      %v1792 = vunpack.c.l.b16 %v1724
      %v1793 = vunpack.c.l.b16 %v1725
      %v1794 = vunpack.c.l.b16 %v1726
      %v1795 = vunpack.c.l.b16 %v1727
      %v1796 = vunpack.c.l.b16 %v1728
      %v1797 = vunpack.c.l.b16 %v1729
      %v1798 = vunpack.c.l.b16 %v1730
      %v1799 = vunpack.c.l.b16 %v1731
      %v1800 = vunpack.c.l.b16 %v1732
      %v1801 = vunpack.c.l.b16 %v1733
      %v1802 = vunpack.c.l.b16 %v1734
      %v1803 = vunpack.c.l.b16 %v1735
      %v1804 = vunpack.c.l.b16 %v1736
      %v1805 = vunpack.c.l.b16 %v1737
      %v1806 = vunpack.c.l.b16 %v1738
      %v1807 = vunpack.c.l.b16 %v1739
      %v1808 = vunpack.c.l.b16 %v1740
      %v1809 = vunpack.c.l.b16 %v1741
      %v1810 = vunpack.c.l.b16 %v1742
      %v1811 = vpack.c.b16 %v1780, %v1779
      %v1812 = vpack.c.b16 %v1782, %v1781
      %v1813 = vpack.c.b16 %v1784, %v1783
      %v1814 = vpack.c.b16 %v1786, %v1785
      %v1815 = vpack.c.b16 %v1788, %v1787
      %v1816 = vpack.c.b16 %v1790, %v1789
      %v1817 = vpack.c.b16 %v1792, %v1791
      %v1818 = vpack.c.b16 %v1794, %v1793
      %v1819 = vpack.c.b16 %v1796, %v1795
      %v1820 = vpack.c.b16 %v1798, %v1797
      %v1821 = vpack.c.b16 %v1800, %v1799
      %v1822 = vpack.c.b16 %v1802, %v1801
      %v1823 = vpack.c.b16 %v1804, %v1803
      %v1824 = vpack.c.b16 %v1806, %v1805
      %v1825 = vpack.c.b16 %v1808, %v1807
      %v1826 = vpack.c.b16 %v1810, %v1809
      %1843 = vmatprep.subr.bf16.mxu0 0
      %1844 = vmatpush1.bf16.msra.mxu0 %v1811
      %1845 = vmatprep.subr.bf16.mxu0 0
      %1846 = vmatpush1.bf16.msra.mxu0 %v1812
      %1847 = vmatprep.subr.bf16.mxu0 0
      %1848 = vmatpush1.bf16.msra.mxu0 %v1813
      %1849 = vmatprep.subr.bf16.mxu0 0
      %1850 = vmatpush1.bf16.msra.mxu0 %v1814
      %1851 = vmatprep.subr.bf16.mxu0 0
      %1852 = vmatpush1.bf16.msra.mxu0 %v1815
      %1853 = vmatprep.subr.bf16.mxu0 0
      %1854 = vmatpush1.bf16.msra.mxu0 %v1816
      %1855 = vmatprep.subr.bf16.mxu0 0
      %1856 = vmatpush1.bf16.msra.mxu0 %v1817
      %1857 = vmatprep.subr.bf16.mxu0 0
      %1858 = vmatpush1.bf16.msra.mxu0 %v1818
      %1859 = vmatprep.subr.bf16.mxu0 0
      %1860 = vmatpush1.bf16.msra.mxu0 %v1819
      %1861 = vmatprep.subr.bf16.mxu0 0
      %1862 = vmatpush1.bf16.msra.mxu0 %v1820
      %1863 = vmatprep.subr.bf16.mxu0 0
      %1864 = vmatpush1.bf16.msra.mxu0 %v1821
      %1865 = vmatprep.subr.bf16.mxu0 0
      %1866 = vmatpush1.bf16.msra.mxu0 %v1822
      %1867 = vmatprep.subr.bf16.mxu0 0
      %1868 = vmatpush1.bf16.msra.mxu0 %v1823
      %1869 = vmatprep.subr.bf16.mxu0 0
      %1870 = vmatpush1.bf16.msra.mxu0 %v1824
      %1871 = vmatprep.subr.bf16.mxu0 0
      %1872 = vmatpush1.bf16.msra.mxu0 %v1825
      %1873 = vmatprep.subr.bf16.mxu0 0
      %1874 = vmatpush1.bf16.msra.mxu0 %v1826
      %1875 = vmatprep.mubr.bf16.mxu0 %v1744
      %1876 = vmatmul.mubr.bf16.gmra.mrb[0].mxu0 %v1743
      %v1877 = vpop.f32.mrb[0].mxu0
      %v1878 = vadd.f32 0.0, %v1877
      %v1879 = vpop.f32.mrb[0].mxu0
      %v1880 = vpop.f32.mrb[0].mxu0
      %v1881 = vpop.f32.mrb[0].mxu0
      %1882 = vdwg.mxu0
      %v1883 = vadd.f32 %v1709, %v1878
      %v1884 = vpack.c.bf16 %v486, %v486
      %v1885 = vpack.c.bf16 %v487, %v487
      %s1886 = scalar_lea.vmem %s3, 1024
      %v1887 = vld [vmem:[%s1886] sm:$0xf]
      %v1888 = vld [vmem:[%s1886 + $0x4] sm:$0xf]
      %v1889 = vld [vmem:[%s1886 + $0x8] sm:$0xf]
      %v1890 = vld [vmem:[%s1886 + $0xc] sm:$0xf]
      %v1891 = vld [vmem:[%s1886 + $0x10] sm:$0xf]
      %v1892 = vld [vmem:[%s1886 + $0x14] sm:$0xf]
      %v1893 = vld [vmem:[%s1886 + $0x18] sm:$0xf]
      %v1894 = vld [vmem:[%s1886 + $0x1c] sm:$0xf]
      %v1895 = vld [vmem:[%s1886 + $0x20] sm:$0xf]
      %v1896 = vld [vmem:[%s1886 + $0x24] sm:$0xf]
      %v1897 = vld [vmem:[%s1886 + $0x28] sm:$0xf]
      %v1898 = vld [vmem:[%s1886 + $0x2c] sm:$0xf]
      %v1899 = vld [vmem:[%s1886 + $0x30] sm:$0xf]
      %v1900 = vld [vmem:[%s1886 + $0x34] sm:$0xf]
      %v1901 = vld [vmem:[%s1886 + $0x38] sm:$0xf]
      %v1902 = vld [vmem:[%s1886 + $0x3c] sm:$0xf]
      %v1903 = vld [vmem:[%s1886 + $0x40] sm:$0xf]
      %v1904 = vld [vmem:[%s1886 + $0x44] sm:$0xf]
      %v1905 = vld [vmem:[%s1886 + $0x48] sm:$0xf]
      %v1906 = vld [vmem:[%s1886 + $0x4c] sm:$0xf]
      %v1907 = vld [vmem:[%s1886 + $0x50] sm:$0xf]
      %v1908 = vld [vmem:[%s1886 + $0x54] sm:$0xf]
      %v1909 = vld [vmem:[%s1886 + $0x58] sm:$0xf]
      %v1910 = vld [vmem:[%s1886 + $0x5c] sm:$0xf]
      %v1911 = vld [vmem:[%s1886 + $0x60] sm:$0xf]
      %v1912 = vld [vmem:[%s1886 + $0x64] sm:$0xf]
      %v1913 = vld [vmem:[%s1886 + $0x68] sm:$0xf]
      %v1914 = vld [vmem:[%s1886 + $0x6c] sm:$0xf]
      %v1915 = vld [vmem:[%s1886 + $0x70] sm:$0xf]
      %v1916 = vld [vmem:[%s1886 + $0x74] sm:$0xf]
      %v1917 = vld [vmem:[%s1886 + $0x78] sm:$0xf]
      %v1918 = vld [vmem:[%s1886 + $0x7c] sm:$0xf]
      %v1951 = vunpack.c.l.b16 %v1887
      %v1952 = vunpack.c.l.b16 %v1888
      %v1953 = vunpack.c.l.b16 %v1889
      %v1954 = vunpack.c.l.b16 %v1890
      %v1955 = vunpack.c.l.b16 %v1891
      %v1956 = vunpack.c.l.b16 %v1892
      %v1957 = vunpack.c.l.b16 %v1893
      %v1958 = vunpack.c.l.b16 %v1894
      %v1959 = vunpack.c.l.b16 %v1895
      %v1960 = vunpack.c.l.b16 %v1896
      %v1961 = vunpack.c.l.b16 %v1897
      %v1962 = vunpack.c.l.b16 %v1898
      %v1963 = vunpack.c.l.b16 %v1899
      %v1964 = vunpack.c.l.b16 %v1900
      %v1965 = vunpack.c.l.b16 %v1901
      %v1966 = vunpack.c.l.b16 %v1902
      %v1967 = vunpack.c.l.b16 %v1903
      %v1968 = vunpack.c.l.b16 %v1904
      %v1969 = vunpack.c.l.b16 %v1905
      %v1970 = vunpack.c.l.b16 %v1906
      %v1971 = vunpack.c.l.b16 %v1907
      %v1972 = vunpack.c.l.b16 %v1908
      %v1973 = vunpack.c.l.b16 %v1909
      %v1974 = vunpack.c.l.b16 %v1910
      %v1975 = vunpack.c.l.b16 %v1911
      %v1976 = vunpack.c.l.b16 %v1912
      %v1977 = vunpack.c.l.b16 %v1913
      %v1978 = vunpack.c.l.b16 %v1914
      %v1979 = vunpack.c.l.b16 %v1915
      %v1980 = vunpack.c.l.b16 %v1916
      %v1981 = vunpack.c.l.b16 %v1917
      %v1982 = vunpack.c.l.b16 %v1918
      %v1983 = vpack.c.b16 %v1952, %v1951
      %v1984 = vpack.c.b16 %v1954, %v1953
      %v1985 = vpack.c.b16 %v1956, %v1955
      %v1986 = vpack.c.b16 %v1958, %v1957
      %v1987 = vpack.c.b16 %v1960, %v1959
      %v1988 = vpack.c.b16 %v1962, %v1961
      %v1989 = vpack.c.b16 %v1964, %v1963
      %v1990 = vpack.c.b16 %v1966, %v1965
      %v1991 = vpack.c.b16 %v1968, %v1967
      %v1992 = vpack.c.b16 %v1970, %v1969
      %v1993 = vpack.c.b16 %v1972, %v1971
      %v1994 = vpack.c.b16 %v1974, %v1973
      %v1995 = vpack.c.b16 %v1976, %v1975
      %v1996 = vpack.c.b16 %v1978, %v1977
      %v1997 = vpack.c.b16 %v1980, %v1979
      %v1998 = vpack.c.b16 %v1982, %v1981
      %2015 = vmatprep.subr.bf16.mxu0 0
      %2016 = vmatpush1.bf16.msra.mxu0 %v1983
      %2017 = vmatprep.subr.bf16.mxu0 0
      %2018 = vmatpush1.bf16.msra.mxu0 %v1984
      %2019 = vmatprep.subr.bf16.mxu0 0
      %2020 = vmatpush1.bf16.msra.mxu0 %v1985
      %2021 = vmatprep.subr.bf16.mxu0 0
      %2022 = vmatpush1.bf16.msra.mxu0 %v1986
      %2023 = vmatprep.subr.bf16.mxu0 0
      %2024 = vmatpush1.bf16.msra.mxu0 %v1987
      %2025 = vmatprep.subr.bf16.mxu0 0
      %2026 = vmatpush1.bf16.msra.mxu0 %v1988
      %2027 = vmatprep.subr.bf16.mxu0 0
      %2028 = vmatpush1.bf16.msra.mxu0 %v1989
      %2029 = vmatprep.subr.bf16.mxu0 0
      %2030 = vmatpush1.bf16.msra.mxu0 %v1990
      %2031 = vmatprep.subr.bf16.mxu0 0
      %2032 = vmatpush1.bf16.msra.mxu0 %v1991
      %2033 = vmatprep.subr.bf16.mxu0 0
      %2034 = vmatpush1.bf16.msra.mxu0 %v1992
      %2035 = vmatprep.subr.bf16.mxu0 0
      %2036 = vmatpush1.bf16.msra.mxu0 %v1993
      %2037 = vmatprep.subr.bf16.mxu0 0
      %2038 = vmatpush1.bf16.msra.mxu0 %v1994
      %2039 = vmatprep.subr.bf16.mxu0 0
      %2040 = vmatpush1.bf16.msra.mxu0 %v1995
      %2041 = vmatprep.subr.bf16.mxu0 0
      %2042 = vmatpush1.bf16.msra.mxu0 %v1996
      %2043 = vmatprep.subr.bf16.mxu0 0
      %2044 = vmatpush1.bf16.msra.mxu0 %v1997
      %2045 = vmatprep.subr.bf16.mxu0 0
      %2046 = vmatpush1.bf16.msra.mxu0 %v1998
      %2047 = vmatprep.mubr.bf16.mxu0 %v1885
      %2048 = vmatmul.mubr.bf16.gmra.mrb[0].mxu0 %v1884
      %v2049 = vpop.f32.mrb[0].mxu0
      %v2050 = vadd.f32 0.0, %v2049
      %v2051 = vpop.f32.mrb[0].mxu0
      %v2052 = vpop.f32.mrb[0].mxu0
      %v2053 = vpop.f32.mrb[0].mxu0
      %2054 = vdwg.mxu0
      %v2055 = vadd.f32 %v1883, %v2050
      %s2056 = scalar_lea.vmem %s3, 1152
      %v2057 = vld [vmem:[%s2056] sm:$0xf]
      %v2058 = vld [vmem:[%s2056 + $0x4] sm:$0xf]
      %v2059 = vld [vmem:[%s2056 + $0x8] sm:$0xf]
      %v2060 = vld [vmem:[%s2056 + $0xc] sm:$0xf]
      %v2061 = vld [vmem:[%s2056 + $0x10] sm:$0xf]
      %v2062 = vld [vmem:[%s2056 + $0x14] sm:$0xf]
      %v2063 = vld [vmem:[%s2056 + $0x18] sm:$0xf]
      %v2064 = vld [vmem:[%s2056 + $0x1c] sm:$0xf]
      %v2065 = vld [vmem:[%s2056 + $0x20] sm:$0xf]
      %v2066 = vld [vmem:[%s2056 + $0x24] sm:$0xf]
      %v2067 = vld [vmem:[%s2056 + $0x28] sm:$0xf]
      %v2068 = vld [vmem:[%s2056 + $0x2c] sm:$0xf]
      %v2069 = vld [vmem:[%s2056 + $0x30] sm:$0xf]
      %v2070 = vld [vmem:[%s2056 + $0x34] sm:$0xf]
      %v2071 = vld [vmem:[%s2056 + $0x38] sm:$0xf]
      %v2072 = vld [vmem:[%s2056 + $0x3c] sm:$0xf]
      %v2073 = vld [vmem:[%s2056 + $0x40] sm:$0xf]
      %v2074 = vld [vmem:[%s2056 + $0x44] sm:$0xf]
      %v2075 = vld [vmem:[%s2056 + $0x48] sm:$0xf]
      %v2076 = vld [vmem:[%s2056 + $0x4c] sm:$0xf]
      %v2077 = vld [vmem:[%s2056 + $0x50] sm:$0xf]
      %v2078 = vld [vmem:[%s2056 + $0x54] sm:$0xf]
      %v2079 = vld [vmem:[%s2056 + $0x58] sm:$0xf]
      %v2080 = vld [vmem:[%s2056 + $0x5c] sm:$0xf]
      %v2081 = vld [vmem:[%s2056 + $0x60] sm:$0xf]
      %v2082 = vld [vmem:[%s2056 + $0x64] sm:$0xf]
      %v2083 = vld [vmem:[%s2056 + $0x68] sm:$0xf]
      %v2084 = vld [vmem:[%s2056 + $0x6c] sm:$0xf]
      %v2085 = vld [vmem:[%s2056 + $0x70] sm:$0xf]
      %v2086 = vld [vmem:[%s2056 + $0x74] sm:$0xf]
      %v2087 = vld [vmem:[%s2056 + $0x78] sm:$0xf]
      %v2088 = vld [vmem:[%s2056 + $0x7c] sm:$0xf]
      %v2090 = vshrl.u32 %v1884, 16
      %v2093 = vshrl.u32 %v1885, 16
      %v2129 = vunpack.c.l.b16 %v2057
      %v2130 = vunpack.c.l.b16 %v2058
      %v2131 = vunpack.c.l.b16 %v2059
      %v2132 = vunpack.c.l.b16 %v2060
      %v2133 = vunpack.c.l.b16 %v2061
      %v2134 = vunpack.c.l.b16 %v2062
      %v2135 = vunpack.c.l.b16 %v2063
      %v2136 = vunpack.c.l.b16 %v2064
      %v2137 = vunpack.c.l.b16 %v2065
      %v2138 = vunpack.c.l.b16 %v2066
      %v2139 = vunpack.c.l.b16 %v2067
      %v2140 = vunpack.c.l.b16 %v2068
      %v2141 = vunpack.c.l.b16 %v2069
      %v2142 = vunpack.c.l.b16 %v2070
      %v2143 = vunpack.c.l.b16 %v2071
      %v2144 = vunpack.c.l.b16 %v2072
      %v2145 = vunpack.c.l.b16 %v2073
      %v2146 = vunpack.c.l.b16 %v2074
      %v2147 = vunpack.c.l.b16 %v2075
      %v2148 = vunpack.c.l.b16 %v2076
      %v2149 = vunpack.c.l.b16 %v2077
      %v2150 = vunpack.c.l.b16 %v2078
      %v2151 = vunpack.c.l.b16 %v2079
      %v2152 = vunpack.c.l.b16 %v2080
      %v2153 = vunpack.c.l.b16 %v2081
      %v2154 = vunpack.c.l.b16 %v2082
      %v2155 = vunpack.c.l.b16 %v2083
      %v2156 = vunpack.c.l.b16 %v2084
      %v2157 = vunpack.c.l.b16 %v2085
      %v2158 = vunpack.c.l.b16 %v2086
      %v2159 = vunpack.c.l.b16 %v2087
      %v2160 = vunpack.c.l.b16 %v2088
      %v2161 = vpack.c.b16 %v2130, %v2129
      %v2162 = vpack.c.b16 %v2132, %v2131
      %v2163 = vpack.c.b16 %v2134, %v2133
      %v2164 = vpack.c.b16 %v2136, %v2135
      %v2165 = vpack.c.b16 %v2138, %v2137
      %v2166 = vpack.c.b16 %v2140, %v2139
      %v2167 = vpack.c.b16 %v2142, %v2141
      %v2168 = vpack.c.b16 %v2144, %v2143
      %v2169 = vpack.c.b16 %v2146, %v2145
      %v2170 = vpack.c.b16 %v2148, %v2147
      %v2171 = vpack.c.b16 %v2150, %v2149
      %v2172 = vpack.c.b16 %v2152, %v2151
      %v2173 = vpack.c.b16 %v2154, %v2153
      %v2174 = vpack.c.b16 %v2156, %v2155
      %v2175 = vpack.c.b16 %v2158, %v2157
      %v2176 = vpack.c.b16 %v2160, %v2159
      %2193 = vmatprep.subr.bf16.mxu0 0
      %2194 = vmatpush1.bf16.msra.mxu0 %v2161
      %2195 = vmatprep.subr.bf16.mxu0 0
      %2196 = vmatpush1.bf16.msra.mxu0 %v2162
      %2197 = vmatprep.subr.bf16.mxu0 0
      %2198 = vmatpush1.bf16.msra.mxu0 %v2163
      %2199 = vmatprep.subr.bf16.mxu0 0
      %2200 = vmatpush1.bf16.msra.mxu0 %v2164
      %2201 = vmatprep.subr.bf16.mxu0 0
      %2202 = vmatpush1.bf16.msra.mxu0 %v2165
      %2203 = vmatprep.subr.bf16.mxu0 0
      %2204 = vmatpush1.bf16.msra.mxu0 %v2166
      %2205 = vmatprep.subr.bf16.mxu0 0
      %2206 = vmatpush1.bf16.msra.mxu0 %v2167
      %2207 = vmatprep.subr.bf16.mxu0 0
      %2208 = vmatpush1.bf16.msra.mxu0 %v2168
      %2209 = vmatprep.subr.bf16.mxu0 0
      %2210 = vmatpush1.bf16.msra.mxu0 %v2169
      %2211 = vmatprep.subr.bf16.mxu0 0
      %2212 = vmatpush1.bf16.msra.mxu0 %v2170
      %2213 = vmatprep.subr.bf16.mxu0 0
      %2214 = vmatpush1.bf16.msra.mxu0 %v2171
      %2215 = vmatprep.subr.bf16.mxu0 0
      %2216 = vmatpush1.bf16.msra.mxu0 %v2172
      %2217 = vmatprep.subr.bf16.mxu0 0
      %2218 = vmatpush1.bf16.msra.mxu0 %v2173
      %2219 = vmatprep.subr.bf16.mxu0 0
      %2220 = vmatpush1.bf16.msra.mxu0 %v2174
      %2221 = vmatprep.subr.bf16.mxu0 0
      %2222 = vmatpush1.bf16.msra.mxu0 %v2175
      %2223 = vmatprep.subr.bf16.mxu0 0
      %2224 = vmatpush1.bf16.msra.mxu0 %v2176
      %2225 = vmatprep.mubr.bf16.mxu0 %v2093
      %2226 = vmatmul.mubr.bf16.gmra.mrb[0].mxu0 %v2090
      %v2227 = vpop.f32.mrb[0].mxu0
      %v2228 = vadd.f32 0.0, %v2227
      %v2229 = vpop.f32.mrb[0].mxu0
      %v2230 = vpop.f32.mrb[0].mxu0
      %v2231 = vpop.f32.mrb[0].mxu0
      %2232 = vdwg.mxu0
      %v2233 = vadd.f32 %v2055, %v2228
      %s2234 = scalar_lea.vmem %s3, 1280
      %v2235 = vld [vmem:[%s2234] sm:$0xf]
      %v2236 = vld [vmem:[%s2234 + $0x4] sm:$0xf]
      %v2237 = vld [vmem:[%s2234 + $0x8] sm:$0xf]
      %v2238 = vld [vmem:[%s2234 + $0xc] sm:$0xf]
      %v2239 = vld [vmem:[%s2234 + $0x10] sm:$0xf]
      %v2240 = vld [vmem:[%s2234 + $0x14] sm:$0xf]
      %v2241 = vld [vmem:[%s2234 + $0x18] sm:$0xf]
      %v2242 = vld [vmem:[%s2234 + $0x1c] sm:$0xf]
      %v2243 = vld [vmem:[%s2234 + $0x20] sm:$0xf]
      %v2244 = vld [vmem:[%s2234 + $0x24] sm:$0xf]
      %v2245 = vld [vmem:[%s2234 + $0x28] sm:$0xf]
      %v2246 = vld [vmem:[%s2234 + $0x2c] sm:$0xf]
      %v2247 = vld [vmem:[%s2234 + $0x30] sm:$0xf]
      %v2248 = vld [vmem:[%s2234 + $0x34] sm:$0xf]
      %v2249 = vld [vmem:[%s2234 + $0x38] sm:$0xf]
      %v2250 = vld [vmem:[%s2234 + $0x3c] sm:$0xf]
      %v2251 = vld [vmem:[%s2234 + $0x40] sm:$0xf]
      %v2252 = vld [vmem:[%s2234 + $0x44] sm:$0xf]
      %v2253 = vld [vmem:[%s2234 + $0x48] sm:$0xf]
      %v2254 = vld [vmem:[%s2234 + $0x4c] sm:$0xf]
      %v2255 = vld [vmem:[%s2234 + $0x50] sm:$0xf]
      %v2256 = vld [vmem:[%s2234 + $0x54] sm:$0xf]
      %v2257 = vld [vmem:[%s2234 + $0x58] sm:$0xf]
      %v2258 = vld [vmem:[%s2234 + $0x5c] sm:$0xf]
      %v2259 = vld [vmem:[%s2234 + $0x60] sm:$0xf]
      %v2260 = vld [vmem:[%s2234 + $0x64] sm:$0xf]
      %v2261 = vld [vmem:[%s2234 + $0x68] sm:$0xf]
      %v2262 = vld [vmem:[%s2234 + $0x6c] sm:$0xf]
      %v2263 = vld [vmem:[%s2234 + $0x70] sm:$0xf]
      %v2264 = vld [vmem:[%s2234 + $0x74] sm:$0xf]
      %v2265 = vld [vmem:[%s2234 + $0x78] sm:$0xf]
      %v2266 = vld [vmem:[%s2234 + $0x7c] sm:$0xf]
      %v2269 = vrot.slane %v1884, 1
      %v2270 = vrot.slane %v1885, 1
      %v2305 = vunpack.c.l.b16 %v2235
      %v2306 = vunpack.c.l.b16 %v2236
      %v2307 = vunpack.c.l.b16 %v2237
      %v2308 = vunpack.c.l.b16 %v2238
      %v2309 = vunpack.c.l.b16 %v2239
      %v2310 = vunpack.c.l.b16 %v2240
      %v2311 = vunpack.c.l.b16 %v2241
      %v2312 = vunpack.c.l.b16 %v2242
      %v2313 = vunpack.c.l.b16 %v2243
      %v2314 = vunpack.c.l.b16 %v2244
      %v2315 = vunpack.c.l.b16 %v2245
      %v2316 = vunpack.c.l.b16 %v2246
      %v2317 = vunpack.c.l.b16 %v2247
      %v2318 = vunpack.c.l.b16 %v2248
      %v2319 = vunpack.c.l.b16 %v2249
      %v2320 = vunpack.c.l.b16 %v2250
      %v2321 = vunpack.c.l.b16 %v2251
      %v2322 = vunpack.c.l.b16 %v2252
      %v2323 = vunpack.c.l.b16 %v2253
      %v2324 = vunpack.c.l.b16 %v2254
      %v2325 = vunpack.c.l.b16 %v2255
      %v2326 = vunpack.c.l.b16 %v2256
      %v2327 = vunpack.c.l.b16 %v2257
      %v2328 = vunpack.c.l.b16 %v2258
      %v2329 = vunpack.c.l.b16 %v2259
      %v2330 = vunpack.c.l.b16 %v2260
      %v2331 = vunpack.c.l.b16 %v2261
      %v2332 = vunpack.c.l.b16 %v2262
      %v2333 = vunpack.c.l.b16 %v2263
      %v2334 = vunpack.c.l.b16 %v2264
      %v2335 = vunpack.c.l.b16 %v2265
      %v2336 = vunpack.c.l.b16 %v2266
      %v2337 = vpack.c.b16 %v2306, %v2305
      %v2338 = vpack.c.b16 %v2308, %v2307
      %v2339 = vpack.c.b16 %v2310, %v2309
      %v2340 = vpack.c.b16 %v2312, %v2311
      %v2341 = vpack.c.b16 %v2314, %v2313
      %v2342 = vpack.c.b16 %v2316, %v2315
      %v2343 = vpack.c.b16 %v2318, %v2317
      %v2344 = vpack.c.b16 %v2320, %v2319
      %v2345 = vpack.c.b16 %v2322, %v2321
      %v2346 = vpack.c.b16 %v2324, %v2323
      %v2347 = vpack.c.b16 %v2326, %v2325
      %v2348 = vpack.c.b16 %v2328, %v2327
      %v2349 = vpack.c.b16 %v2330, %v2329
      %v2350 = vpack.c.b16 %v2332, %v2331
      %v2351 = vpack.c.b16 %v2334, %v2333
      %v2352 = vpack.c.b16 %v2336, %v2335
      %2369 = vmatprep.subr.bf16.mxu0 0
      %2370 = vmatpush1.bf16.msra.mxu0 %v2337
      %2371 = vmatprep.subr.bf16.mxu0 0
      %2372 = vmatpush1.bf16.msra.mxu0 %v2338
      %2373 = vmatprep.subr.bf16.mxu0 0
      %2374 = vmatpush1.bf16.msra.mxu0 %v2339
      %2375 = vmatprep.subr.bf16.mxu0 0
      %2376 = vmatpush1.bf16.msra.mxu0 %v2340
      %2377 = vmatprep.subr.bf16.mxu0 0
      %2378 = vmatpush1.bf16.msra.mxu0 %v2341
      %2379 = vmatprep.subr.bf16.mxu0 0
      %2380 = vmatpush1.bf16.msra.mxu0 %v2342
      %2381 = vmatprep.subr.bf16.mxu0 0
      %2382 = vmatpush1.bf16.msra.mxu0 %v2343
      %2383 = vmatprep.subr.bf16.mxu0 0
      %2384 = vmatpush1.bf16.msra.mxu0 %v2344
      %2385 = vmatprep.subr.bf16.mxu0 0
      %2386 = vmatpush1.bf16.msra.mxu0 %v2345
      %2387 = vmatprep.subr.bf16.mxu0 0
      %2388 = vmatpush1.bf16.msra.mxu0 %v2346
      %2389 = vmatprep.subr.bf16.mxu0 0
      %2390 = vmatpush1.bf16.msra.mxu0 %v2347
      %2391 = vmatprep.subr.bf16.mxu0 0
      %2392 = vmatpush1.bf16.msra.mxu0 %v2348
      %2393 = vmatprep.subr.bf16.mxu0 0
      %2394 = vmatpush1.bf16.msra.mxu0 %v2349
      %2395 = vmatprep.subr.bf16.mxu0 0
      %2396 = vmatpush1.bf16.msra.mxu0 %v2350
      %2397 = vmatprep.subr.bf16.mxu0 0
      %2398 = vmatpush1.bf16.msra.mxu0 %v2351
      %2399 = vmatprep.subr.bf16.mxu0 0
      %2400 = vmatpush1.bf16.msra.mxu0 %v2352
      %2401 = vmatprep.mubr.bf16.mxu0 %v2270
      %2402 = vmatmul.mubr.bf16.gmra.mrb[0].mxu0 %v2269
      %v2403 = vpop.f32.mrb[0].mxu0
      %v2404 = vadd.f32 0.0, %v2403
      %v2405 = vpop.f32.mrb[0].mxu0
      %v2406 = vpop.f32.mrb[0].mxu0
      %v2407 = vpop.f32.mrb[0].mxu0
      %2408 = vdwg.mxu0
      %v2409 = vadd.f32 %v2233, %v2404
      %s2410 = scalar_lea.vmem %s3, 1408
      %v2411 = vld [vmem:[%s2410] sm:$0xf]
      %v2412 = vld [vmem:[%s2410 + $0x4] sm:$0xf]
      %v2413 = vld [vmem:[%s2410 + $0x8] sm:$0xf]
      %v2414 = vld [vmem:[%s2410 + $0xc] sm:$0xf]
      %v2415 = vld [vmem:[%s2410 + $0x10] sm:$0xf]
      %v2416 = vld [vmem:[%s2410 + $0x14] sm:$0xf]
      %v2417 = vld [vmem:[%s2410 + $0x18] sm:$0xf]
      %v2418 = vld [vmem:[%s2410 + $0x1c] sm:$0xf]
      %v2419 = vld [vmem:[%s2410 + $0x20] sm:$0xf]
      %v2420 = vld [vmem:[%s2410 + $0x24] sm:$0xf]
      %v2421 = vld [vmem:[%s2410 + $0x28] sm:$0xf]
      %v2422 = vld [vmem:[%s2410 + $0x2c] sm:$0xf]
      %v2423 = vld [vmem:[%s2410 + $0x30] sm:$0xf]
      %v2424 = vld [vmem:[%s2410 + $0x34] sm:$0xf]
      %v2425 = vld [vmem:[%s2410 + $0x38] sm:$0xf]
      %v2426 = vld [vmem:[%s2410 + $0x3c] sm:$0xf]
      %v2427 = vld [vmem:[%s2410 + $0x40] sm:$0xf]
      %v2428 = vld [vmem:[%s2410 + $0x44] sm:$0xf]
      %v2429 = vld [vmem:[%s2410 + $0x48] sm:$0xf]
      %v2430 = vld [vmem:[%s2410 + $0x4c] sm:$0xf]
      %v2431 = vld [vmem:[%s2410 + $0x50] sm:$0xf]
      %v2432 = vld [vmem:[%s2410 + $0x54] sm:$0xf]
      %v2433 = vld [vmem:[%s2410 + $0x58] sm:$0xf]
      %v2434 = vld [vmem:[%s2410 + $0x5c] sm:$0xf]
      %v2435 = vld [vmem:[%s2410 + $0x60] sm:$0xf]
      %v2436 = vld [vmem:[%s2410 + $0x64] sm:$0xf]
      %v2437 = vld [vmem:[%s2410 + $0x68] sm:$0xf]
      %v2438 = vld [vmem:[%s2410 + $0x6c] sm:$0xf]
      %v2439 = vld [vmem:[%s2410 + $0x70] sm:$0xf]
      %v2440 = vld [vmem:[%s2410 + $0x74] sm:$0xf]
      %v2441 = vld [vmem:[%s2410 + $0x78] sm:$0xf]
      %v2442 = vld [vmem:[%s2410 + $0x7c] sm:$0xf]
      %v2443 = vrot.slane %v2090, 1
      %v2444 = vrot.slane %v2093, 1
      %v2479 = vunpack.c.l.b16 %v2411
      %v2480 = vunpack.c.l.b16 %v2412
      %v2481 = vunpack.c.l.b16 %v2413
      %v2482 = vunpack.c.l.b16 %v2414
      %v2483 = vunpack.c.l.b16 %v2415
      %v2484 = vunpack.c.l.b16 %v2416
      %v2485 = vunpack.c.l.b16 %v2417
      %v2486 = vunpack.c.l.b16 %v2418
      %v2487 = vunpack.c.l.b16 %v2419
      %v2488 = vunpack.c.l.b16 %v2420
      %v2489 = vunpack.c.l.b16 %v2421
      %v2490 = vunpack.c.l.b16 %v2422
      %v2491 = vunpack.c.l.b16 %v2423
      %v2492 = vunpack.c.l.b16 %v2424
      %v2493 = vunpack.c.l.b16 %v2425
      %v2494 = vunpack.c.l.b16 %v2426
      %v2495 = vunpack.c.l.b16 %v2427
      %v2496 = vunpack.c.l.b16 %v2428
      %v2497 = vunpack.c.l.b16 %v2429
      %v2498 = vunpack.c.l.b16 %v2430
      %v2499 = vunpack.c.l.b16 %v2431
      %v2500 = vunpack.c.l.b16 %v2432
      %v2501 = vunpack.c.l.b16 %v2433
      %v2502 = vunpack.c.l.b16 %v2434
      %v2503 = vunpack.c.l.b16 %v2435
      %v2504 = vunpack.c.l.b16 %v2436
      %v2505 = vunpack.c.l.b16 %v2437
      %v2506 = vunpack.c.l.b16 %v2438
      %v2507 = vunpack.c.l.b16 %v2439
      %v2508 = vunpack.c.l.b16 %v2440
      %v2509 = vunpack.c.l.b16 %v2441
      %v2510 = vunpack.c.l.b16 %v2442
      %v2511 = vpack.c.b16 %v2480, %v2479
      %v2512 = vpack.c.b16 %v2482, %v2481
      %v2513 = vpack.c.b16 %v2484, %v2483
      %v2514 = vpack.c.b16 %v2486, %v2485
      %v2515 = vpack.c.b16 %v2488, %v2487
      %v2516 = vpack.c.b16 %v2490, %v2489
      %v2517 = vpack.c.b16 %v2492, %v2491
      %v2518 = vpack.c.b16 %v2494, %v2493
      %v2519 = vpack.c.b16 %v2496, %v2495
      %v2520 = vpack.c.b16 %v2498, %v2497
      %v2521 = vpack.c.b16 %v2500, %v2499
      %v2522 = vpack.c.b16 %v2502, %v2501
      %v2523 = vpack.c.b16 %v2504, %v2503
      %v2524 = vpack.c.b16 %v2506, %v2505
      %v2525 = vpack.c.b16 %v2508, %v2507
      %v2526 = vpack.c.b16 %v2510, %v2509
      %2543 = vmatprep.subr.bf16.mxu0 0
      %2544 = vmatpush1.bf16.msra.mxu0 %v2511
      %2545 = vmatprep.subr.bf16.mxu0 0
      %2546 = vmatpush1.bf16.msra.mxu0 %v2512
      %2547 = vmatprep.subr.bf16.mxu0 0
      %2548 = vmatpush1.bf16.msra.mxu0 %v2513
      %2549 = vmatprep.subr.bf16.mxu0 0
      %2550 = vmatpush1.bf16.msra.mxu0 %v2514
      %2551 = vmatprep.subr.bf16.mxu0 0
      %2552 = vmatpush1.bf16.msra.mxu0 %v2515
      %2553 = vmatprep.subr.bf16.mxu0 0
      %2554 = vmatpush1.bf16.msra.mxu0 %v2516
      %2555 = vmatprep.subr.bf16.mxu0 0
      %2556 = vmatpush1.bf16.msra.mxu0 %v2517
      %2557 = vmatprep.subr.bf16.mxu0 0
      %2558 = vmatpush1.bf16.msra.mxu0 %v2518
      %2559 = vmatprep.subr.bf16.mxu0 0
      %2560 = vmatpush1.bf16.msra.mxu0 %v2519
      %2561 = vmatprep.subr.bf16.mxu0 0
      %2562 = vmatpush1.bf16.msra.mxu0 %v2520
      %2563 = vmatprep.subr.bf16.mxu0 0
      %2564 = vmatpush1.bf16.msra.mxu0 %v2521
      %2565 = vmatprep.subr.bf16.mxu0 0
      %2566 = vmatpush1.bf16.msra.mxu0 %v2522
      %2567 = vmatprep.subr.bf16.mxu0 0
      %2568 = vmatpush1.bf16.msra.mxu0 %v2523
      %2569 = vmatprep.subr.bf16.mxu0 0
      %2570 = vmatpush1.bf16.msra.mxu0 %v2524
      %2571 = vmatprep.subr.bf16.mxu0 0
      %2572 = vmatpush1.bf16.msra.mxu0 %v2525
      %2573 = vmatprep.subr.bf16.mxu0 0
      %2574 = vmatpush1.bf16.msra.mxu0 %v2526
      %2575 = vmatprep.mubr.bf16.mxu0 %v2444
      %2576 = vmatmul.mubr.bf16.gmra.mrb[0].mxu0 %v2443
      %v2577 = vpop.f32.mrb[0].mxu0
      %v2578 = vadd.f32 0.0, %v2577
      %v2579 = vpop.f32.mrb[0].mxu0
      %v2580 = vpop.f32.mrb[0].mxu0
      %v2581 = vpop.f32.mrb[0].mxu0
      %2582 = vdwg.mxu0
      %v2583 = vadd.f32 %v2409, %v2578
      %s2584 = scalar_lea.vmem %s3, 1536
      %v2585 = vld [vmem:[%s2584] sm:$0xf]
      %v2586 = vld [vmem:[%s2584 + $0x4] sm:$0xf]
      %v2587 = vld [vmem:[%s2584 + $0x8] sm:$0xf]
      %v2588 = vld [vmem:[%s2584 + $0xc] sm:$0xf]
      %v2589 = vld [vmem:[%s2584 + $0x10] sm:$0xf]
      %v2590 = vld [vmem:[%s2584 + $0x14] sm:$0xf]
      %v2591 = vld [vmem:[%s2584 + $0x18] sm:$0xf]
      %v2592 = vld [vmem:[%s2584 + $0x1c] sm:$0xf]
      %v2593 = vld [vmem:[%s2584 + $0x20] sm:$0xf]
      %v2594 = vld [vmem:[%s2584 + $0x24] sm:$0xf]
      %v2595 = vld [vmem:[%s2584 + $0x28] sm:$0xf]
      %v2596 = vld [vmem:[%s2584 + $0x2c] sm:$0xf]
      %v2597 = vld [vmem:[%s2584 + $0x30] sm:$0xf]
      %v2598 = vld [vmem:[%s2584 + $0x34] sm:$0xf]
      %v2599 = vld [vmem:[%s2584 + $0x38] sm:$0xf]
      %v2600 = vld [vmem:[%s2584 + $0x3c] sm:$0xf]
      %v2601 = vld [vmem:[%s2584 + $0x40] sm:$0xf]
      %v2602 = vld [vmem:[%s2584 + $0x44] sm:$0xf]
      %v2603 = vld [vmem:[%s2584 + $0x48] sm:$0xf]
      %v2604 = vld [vmem:[%s2584 + $0x4c] sm:$0xf]
      %v2605 = vld [vmem:[%s2584 + $0x50] sm:$0xf]
      %v2606 = vld [vmem:[%s2584 + $0x54] sm:$0xf]
      %v2607 = vld [vmem:[%s2584 + $0x58] sm:$0xf]
      %v2608 = vld [vmem:[%s2584 + $0x5c] sm:$0xf]
      %v2609 = vld [vmem:[%s2584 + $0x60] sm:$0xf]
      %v2610 = vld [vmem:[%s2584 + $0x64] sm:$0xf]
      %v2611 = vld [vmem:[%s2584 + $0x68] sm:$0xf]
      %v2612 = vld [vmem:[%s2584 + $0x6c] sm:$0xf]
      %v2613 = vld [vmem:[%s2584 + $0x70] sm:$0xf]
      %v2614 = vld [vmem:[%s2584 + $0x74] sm:$0xf]
      %v2615 = vld [vmem:[%s2584 + $0x78] sm:$0xf]
      %v2616 = vld [vmem:[%s2584 + $0x7c] sm:$0xf]
      %v2617 = vrot.slane %v1884, 2
      %v2618 = vrot.slane %v1885, 2
      %v2653 = vunpack.c.l.b16 %v2585
      %v2654 = vunpack.c.l.b16 %v2586
      %v2655 = vunpack.c.l.b16 %v2587
      %v2656 = vunpack.c.l.b16 %v2588
      %v2657 = vunpack.c.l.b16 %v2589
      %v2658 = vunpack.c.l.b16 %v2590
      %v2659 = vunpack.c.l.b16 %v2591
      %v2660 = vunpack.c.l.b16 %v2592
      %v2661 = vunpack.c.l.b16 %v2593
      %v2662 = vunpack.c.l.b16 %v2594
      %v2663 = vunpack.c.l.b16 %v2595
      %v2664 = vunpack.c.l.b16 %v2596
      %v2665 = vunpack.c.l.b16 %v2597
      %v2666 = vunpack.c.l.b16 %v2598
      %v2667 = vunpack.c.l.b16 %v2599
      %v2668 = vunpack.c.l.b16 %v2600
      %v2669 = vunpack.c.l.b16 %v2601
      %v2670 = vunpack.c.l.b16 %v2602
      %v2671 = vunpack.c.l.b16 %v2603
      %v2672 = vunpack.c.l.b16 %v2604
      %v2673 = vunpack.c.l.b16 %v2605
      %v2674 = vunpack.c.l.b16 %v2606
      %v2675 = vunpack.c.l.b16 %v2607
      %v2676 = vunpack.c.l.b16 %v2608
      %v2677 = vunpack.c.l.b16 %v2609
      %v2678 = vunpack.c.l.b16 %v2610
      %v2679 = vunpack.c.l.b16 %v2611
      %v2680 = vunpack.c.l.b16 %v2612
      %v2681 = vunpack.c.l.b16 %v2613
      %v2682 = vunpack.c.l.b16 %v2614
      %v2683 = vunpack.c.l.b16 %v2615
      %v2684 = vunpack.c.l.b16 %v2616
      %v2685 = vpack.c.b16 %v2654, %v2653
      %v2686 = vpack.c.b16 %v2656, %v2655
      %v2687 = vpack.c.b16 %v2658, %v2657
      %v2688 = vpack.c.b16 %v2660, %v2659
      %v2689 = vpack.c.b16 %v2662, %v2661
      %v2690 = vpack.c.b16 %v2664, %v2663
      %v2691 = vpack.c.b16 %v2666, %v2665
      %v2692 = vpack.c.b16 %v2668, %v2667
      %v2693 = vpack.c.b16 %v2670, %v2669
      %v2694 = vpack.c.b16 %v2672, %v2671
      %v2695 = vpack.c.b16 %v2674, %v2673
      %v2696 = vpack.c.b16 %v2676, %v2675
      %v2697 = vpack.c.b16 %v2678, %v2677
      %v2698 = vpack.c.b16 %v2680, %v2679
      %v2699 = vpack.c.b16 %v2682, %v2681
      %v2700 = vpack.c.b16 %v2684, %v2683
      %2717 = vmatprep.subr.bf16.mxu0 0
      %2718 = vmatpush1.bf16.msra.mxu0 %v2685
      %2719 = vmatprep.subr.bf16.mxu0 0
      %2720 = vmatpush1.bf16.msra.mxu0 %v2686
      %2721 = vmatprep.subr.bf16.mxu0 0
      %2722 = vmatpush1.bf16.msra.mxu0 %v2687
      %2723 = vmatprep.subr.bf16.mxu0 0
      %2724 = vmatpush1.bf16.msra.mxu0 %v2688
      %2725 = vmatprep.subr.bf16.mxu0 0
      %2726 = vmatpush1.bf16.msra.mxu0 %v2689
      %2727 = vmatprep.subr.bf16.mxu0 0
      %2728 = vmatpush1.bf16.msra.mxu0 %v2690
      %2729 = vmatprep.subr.bf16.mxu0 0
      %2730 = vmatpush1.bf16.msra.mxu0 %v2691
      %2731 = vmatprep.subr.bf16.mxu0 0
      %2732 = vmatpush1.bf16.msra.mxu0 %v2692
      %2733 = vmatprep.subr.bf16.mxu0 0
      %2734 = vmatpush1.bf16.msra.mxu0 %v2693
      %2735 = vmatprep.subr.bf16.mxu0 0
      %2736 = vmatpush1.bf16.msra.mxu0 %v2694
      %2737 = vmatprep.subr.bf16.mxu0 0
      %2738 = vmatpush1.bf16.msra.mxu0 %v2695
      %2739 = vmatprep.subr.bf16.mxu0 0
      %2740 = vmatpush1.bf16.msra.mxu0 %v2696
      %2741 = vmatprep.subr.bf16.mxu0 0
      %2742 = vmatpush1.bf16.msra.mxu0 %v2697
      %2743 = vmatprep.subr.bf16.mxu0 0
      %2744 = vmatpush1.bf16.msra.mxu0 %v2698
      %2745 = vmatprep.subr.bf16.mxu0 0
      %2746 = vmatpush1.bf16.msra.mxu0 %v2699
      %2747 = vmatprep.subr.bf16.mxu0 0
      %2748 = vmatpush1.bf16.msra.mxu0 %v2700
      %2749 = vmatprep.mubr.bf16.mxu0 %v2618
      %2750 = vmatmul.mubr.bf16.gmra.mrb[0].mxu0 %v2617
      %v2751 = vpop.f32.mrb[0].mxu0
      %v2752 = vadd.f32 0.0, %v2751
      %v2753 = vpop.f32.mrb[0].mxu0
      %v2754 = vpop.f32.mrb[0].mxu0
      %v2755 = vpop.f32.mrb[0].mxu0
      %2756 = vdwg.mxu0
      %v2757 = vadd.f32 %v2583, %v2752
      %s2758 = scalar_lea.vmem %s3, 1664
      %v2759 = vld [vmem:[%s2758] sm:$0xf]
      %v2760 = vld [vmem:[%s2758 + $0x4] sm:$0xf]
      %v2761 = vld [vmem:[%s2758 + $0x8] sm:$0xf]
      %v2762 = vld [vmem:[%s2758 + $0xc] sm:$0xf]
      %v2763 = vld [vmem:[%s2758 + $0x10] sm:$0xf]
      %v2764 = vld [vmem:[%s2758 + $0x14] sm:$0xf]
      %v2765 = vld [vmem:[%s2758 + $0x18] sm:$0xf]
      %v2766 = vld [vmem:[%s2758 + $0x1c] sm:$0xf]
      %v2767 = vld [vmem:[%s2758 + $0x20] sm:$0xf]
      %v2768 = vld [vmem:[%s2758 + $0x24] sm:$0xf]
      %v2769 = vld [vmem:[%s2758 + $0x28] sm:$0xf]
      %v2770 = vld [vmem:[%s2758 + $0x2c] sm:$0xf]
      %v2771 = vld [vmem:[%s2758 + $0x30] sm:$0xf]
      %v2772 = vld [vmem:[%s2758 + $0x34] sm:$0xf]
      %v2773 = vld [vmem:[%s2758 + $0x38] sm:$0xf]
      %v2774 = vld [vmem:[%s2758 + $0x3c] sm:$0xf]
      %v2775 = vld [vmem:[%s2758 + $0x40] sm:$0xf]
      %v2776 = vld [vmem:[%s2758 + $0x44] sm:$0xf]
      %v2777 = vld [vmem:[%s2758 + $0x48] sm:$0xf]
      %v2778 = vld [vmem:[%s2758 + $0x4c] sm:$0xf]
      %v2779 = vld [vmem:[%s2758 + $0x50] sm:$0xf]
      %v2780 = vld [vmem:[%s2758 + $0x54] sm:$0xf]
      %v2781 = vld [vmem:[%s2758 + $0x58] sm:$0xf]
      %v2782 = vld [vmem:[%s2758 + $0x5c] sm:$0xf]
      %v2783 = vld [vmem:[%s2758 + $0x60] sm:$0xf]
      %v2784 = vld [vmem:[%s2758 + $0x64] sm:$0xf]
      %v2785 = vld [vmem:[%s2758 + $0x68] sm:$0xf]
      %v2786 = vld [vmem:[%s2758 + $0x6c] sm:$0xf]
      %v2787 = vld [vmem:[%s2758 + $0x70] sm:$0xf]
      %v2788 = vld [vmem:[%s2758 + $0x74] sm:$0xf]
      %v2789 = vld [vmem:[%s2758 + $0x78] sm:$0xf]
      %v2790 = vld [vmem:[%s2758 + $0x7c] sm:$0xf]
      %v2791 = vrot.slane %v2090, 2
      %v2792 = vrot.slane %v2093, 2
      %v2827 = vunpack.c.l.b16 %v2759
      %v2828 = vunpack.c.l.b16 %v2760
      %v2829 = vunpack.c.l.b16 %v2761
      %v2830 = vunpack.c.l.b16 %v2762
      %v2831 = vunpack.c.l.b16 %v2763
      %v2832 = vunpack.c.l.b16 %v2764
      %v2833 = vunpack.c.l.b16 %v2765
      %v2834 = vunpack.c.l.b16 %v2766
      %v2835 = vunpack.c.l.b16 %v2767
      %v2836 = vunpack.c.l.b16 %v2768
      %v2837 = vunpack.c.l.b16 %v2769
      %v2838 = vunpack.c.l.b16 %v2770
      %v2839 = vunpack.c.l.b16 %v2771
      %v2840 = vunpack.c.l.b16 %v2772
      %v2841 = vunpack.c.l.b16 %v2773
      %v2842 = vunpack.c.l.b16 %v2774
      %v2843 = vunpack.c.l.b16 %v2775
      %v2844 = vunpack.c.l.b16 %v2776
      %v2845 = vunpack.c.l.b16 %v2777
      %v2846 = vunpack.c.l.b16 %v2778
      %v2847 = vunpack.c.l.b16 %v2779
      %v2848 = vunpack.c.l.b16 %v2780
      %v2849 = vunpack.c.l.b16 %v2781
      %v2850 = vunpack.c.l.b16 %v2782
      %v2851 = vunpack.c.l.b16 %v2783
      %v2852 = vunpack.c.l.b16 %v2784
      %v2853 = vunpack.c.l.b16 %v2785
      %v2854 = vunpack.c.l.b16 %v2786
      %v2855 = vunpack.c.l.b16 %v2787
      %v2856 = vunpack.c.l.b16 %v2788
      %v2857 = vunpack.c.l.b16 %v2789
      %v2858 = vunpack.c.l.b16 %v2790
      %v2859 = vpack.c.b16 %v2828, %v2827
      %v2860 = vpack.c.b16 %v2830, %v2829
      %v2861 = vpack.c.b16 %v2832, %v2831
      %v2862 = vpack.c.b16 %v2834, %v2833
      %v2863 = vpack.c.b16 %v2836, %v2835
      %v2864 = vpack.c.b16 %v2838, %v2837
      %v2865 = vpack.c.b16 %v2840, %v2839
      %v2866 = vpack.c.b16 %v2842, %v2841
      %v2867 = vpack.c.b16 %v2844, %v2843
      %v2868 = vpack.c.b16 %v2846, %v2845
      %v2869 = vpack.c.b16 %v2848, %v2847
      %v2870 = vpack.c.b16 %v2850, %v2849
      %v2871 = vpack.c.b16 %v2852, %v2851
      %v2872 = vpack.c.b16 %v2854, %v2853
      %v2873 = vpack.c.b16 %v2856, %v2855
      %v2874 = vpack.c.b16 %v2858, %v2857
      %2891 = vmatprep.subr.bf16.mxu0 0
      %2892 = vmatpush1.bf16.msra.mxu0 %v2859
      %2893 = vmatprep.subr.bf16.mxu0 0
      %2894 = vmatpush1.bf16.msra.mxu0 %v2860
      %2895 = vmatprep.subr.bf16.mxu0 0
      %2896 = vmatpush1.bf16.msra.mxu0 %v2861
      %2897 = vmatprep.subr.bf16.mxu0 0
      %2898 = vmatpush1.bf16.msra.mxu0 %v2862
      %2899 = vmatprep.subr.bf16.mxu0 0
      %2900 = vmatpush1.bf16.msra.mxu0 %v2863
      %2901 = vmatprep.subr.bf16.mxu0 0
      %2902 = vmatpush1.bf16.msra.mxu0 %v2864
      %2903 = vmatprep.subr.bf16.mxu0 0
      %2904 = vmatpush1.bf16.msra.mxu0 %v2865
      %2905 = vmatprep.subr.bf16.mxu0 0
      %2906 = vmatpush1.bf16.msra.mxu0 %v2866
      %2907 = vmatprep.subr.bf16.mxu0 0
      %2908 = vmatpush1.bf16.msra.mxu0 %v2867
      %2909 = vmatprep.subr.bf16.mxu0 0
      %2910 = vmatpush1.bf16.msra.mxu0 %v2868
      %2911 = vmatprep.subr.bf16.mxu0 0
      %2912 = vmatpush1.bf16.msra.mxu0 %v2869
      %2913 = vmatprep.subr.bf16.mxu0 0
      %2914 = vmatpush1.bf16.msra.mxu0 %v2870
      %2915 = vmatprep.subr.bf16.mxu0 0
      %2916 = vmatpush1.bf16.msra.mxu0 %v2871
      %2917 = vmatprep.subr.bf16.mxu0 0
      %2918 = vmatpush1.bf16.msra.mxu0 %v2872
      %2919 = vmatprep.subr.bf16.mxu0 0
      %2920 = vmatpush1.bf16.msra.mxu0 %v2873
      %2921 = vmatprep.subr.bf16.mxu0 0
      %2922 = vmatpush1.bf16.msra.mxu0 %v2874
      %2923 = vmatprep.mubr.bf16.mxu0 %v2792
      %2924 = vmatmul.mubr.bf16.gmra.mrb[0].mxu0 %v2791
      %v2925 = vpop.f32.mrb[0].mxu0
      %v2926 = vadd.f32 0.0, %v2925
      %v2927 = vpop.f32.mrb[0].mxu0
      %v2928 = vpop.f32.mrb[0].mxu0
      %v2929 = vpop.f32.mrb[0].mxu0
      %2930 = vdwg.mxu0
      %v2931 = vadd.f32 %v2757, %v2926
      %s2932 = scalar_lea.vmem %s3, 1792
      %v2933 = vld [vmem:[%s2932] sm:$0xf]
      %v2934 = vld [vmem:[%s2932 + $0x4] sm:$0xf]
      %v2935 = vld [vmem:[%s2932 + $0x8] sm:$0xf]
      %v2936 = vld [vmem:[%s2932 + $0xc] sm:$0xf]
      %v2937 = vld [vmem:[%s2932 + $0x10] sm:$0xf]
      %v2938 = vld [vmem:[%s2932 + $0x14] sm:$0xf]
      %v2939 = vld [vmem:[%s2932 + $0x18] sm:$0xf]
      %v2940 = vld [vmem:[%s2932 + $0x1c] sm:$0xf]
      %v2941 = vld [vmem:[%s2932 + $0x20] sm:$0xf]
      %v2942 = vld [vmem:[%s2932 + $0x24] sm:$0xf]
      %v2943 = vld [vmem:[%s2932 + $0x28] sm:$0xf]
      %v2944 = vld [vmem:[%s2932 + $0x2c] sm:$0xf]
      %v2945 = vld [vmem:[%s2932 + $0x30] sm:$0xf]
      %v2946 = vld [vmem:[%s2932 + $0x34] sm:$0xf]
      %v2947 = vld [vmem:[%s2932 + $0x38] sm:$0xf]
      %v2948 = vld [vmem:[%s2932 + $0x3c] sm:$0xf]
      %v2949 = vld [vmem:[%s2932 + $0x40] sm:$0xf]
      %v2950 = vld [vmem:[%s2932 + $0x44] sm:$0xf]
      %v2951 = vld [vmem:[%s2932 + $0x48] sm:$0xf]
      %v2952 = vld [vmem:[%s2932 + $0x4c] sm:$0xf]
      %v2953 = vld [vmem:[%s2932 + $0x50] sm:$0xf]
      %v2954 = vld [vmem:[%s2932 + $0x54] sm:$0xf]
      %v2955 = vld [vmem:[%s2932 + $0x58] sm:$0xf]
      %v2956 = vld [vmem:[%s2932 + $0x5c] sm:$0xf]
      %v2957 = vld [vmem:[%s2932 + $0x60] sm:$0xf]
      %v2958 = vld [vmem:[%s2932 + $0x64] sm:$0xf]
      %v2959 = vld [vmem:[%s2932 + $0x68] sm:$0xf]
      %v2960 = vld [vmem:[%s2932 + $0x6c] sm:$0xf]
      %v2961 = vld [vmem:[%s2932 + $0x70] sm:$0xf]
      %v2962 = vld [vmem:[%s2932 + $0x74] sm:$0xf]
      %v2963 = vld [vmem:[%s2932 + $0x78] sm:$0xf]
      %v2964 = vld [vmem:[%s2932 + $0x7c] sm:$0xf]
      %v2965 = vrot.slane %v1884, 3
      %v2966 = vrot.slane %v1885, 3
      %v3001 = vunpack.c.l.b16 %v2933
      %v3002 = vunpack.c.l.b16 %v2934
      %v3003 = vunpack.c.l.b16 %v2935
      %v3004 = vunpack.c.l.b16 %v2936
      %v3005 = vunpack.c.l.b16 %v2937
      %v3006 = vunpack.c.l.b16 %v2938
      %v3007 = vunpack.c.l.b16 %v2939
      %v3008 = vunpack.c.l.b16 %v2940
      %v3009 = vunpack.c.l.b16 %v2941
      %v3010 = vunpack.c.l.b16 %v2942
      %v3011 = vunpack.c.l.b16 %v2943
      %v3012 = vunpack.c.l.b16 %v2944
      %v3013 = vunpack.c.l.b16 %v2945
      %v3014 = vunpack.c.l.b16 %v2946
      %v3015 = vunpack.c.l.b16 %v2947
      %v3016 = vunpack.c.l.b16 %v2948
      %v3017 = vunpack.c.l.b16 %v2949
      %v3018 = vunpack.c.l.b16 %v2950
      %v3019 = vunpack.c.l.b16 %v2951
      %v3020 = vunpack.c.l.b16 %v2952
      %v3021 = vunpack.c.l.b16 %v2953
      %v3022 = vunpack.c.l.b16 %v2954
      %v3023 = vunpack.c.l.b16 %v2955
      %v3024 = vunpack.c.l.b16 %v2956
      %v3025 = vunpack.c.l.b16 %v2957
      %v3026 = vunpack.c.l.b16 %v2958
      %v3027 = vunpack.c.l.b16 %v2959
      %v3028 = vunpack.c.l.b16 %v2960
      %v3029 = vunpack.c.l.b16 %v2961
      %v3030 = vunpack.c.l.b16 %v2962
      %v3031 = vunpack.c.l.b16 %v2963
      %v3032 = vunpack.c.l.b16 %v2964
      %v3033 = vpack.c.b16 %v3002, %v3001
      %v3034 = vpack.c.b16 %v3004, %v3003
      %v3035 = vpack.c.b16 %v3006, %v3005
      %v3036 = vpack.c.b16 %v3008, %v3007
      %v3037 = vpack.c.b16 %v3010, %v3009
      %v3038 = vpack.c.b16 %v3012, %v3011
      %v3039 = vpack.c.b16 %v3014, %v3013
      %v3040 = vpack.c.b16 %v3016, %v3015
      %v3041 = vpack.c.b16 %v3018, %v3017
      %v3042 = vpack.c.b16 %v3020, %v3019
      %v3043 = vpack.c.b16 %v3022, %v3021
      %v3044 = vpack.c.b16 %v3024, %v3023
      %v3045 = vpack.c.b16 %v3026, %v3025
      %v3046 = vpack.c.b16 %v3028, %v3027
      %v3047 = vpack.c.b16 %v3030, %v3029
      %v3048 = vpack.c.b16 %v3032, %v3031
      %3065 = vmatprep.subr.bf16.mxu0 0
      %3066 = vmatpush1.bf16.msra.mxu0 %v3033
      %3067 = vmatprep.subr.bf16.mxu0 0
      %3068 = vmatpush1.bf16.msra.mxu0 %v3034
      %3069 = vmatprep.subr.bf16.mxu0 0
      %3070 = vmatpush1.bf16.msra.mxu0 %v3035
      %3071 = vmatprep.subr.bf16.mxu0 0
      %3072 = vmatpush1.bf16.msra.mxu0 %v3036
      %3073 = vmatprep.subr.bf16.mxu0 0
      %3074 = vmatpush1.bf16.msra.mxu0 %v3037
      %3075 = vmatprep.subr.bf16.mxu0 0
      %3076 = vmatpush1.bf16.msra.mxu0 %v3038
      %3077 = vmatprep.subr.bf16.mxu0 0
      %3078 = vmatpush1.bf16.msra.mxu0 %v3039
      %3079 = vmatprep.subr.bf16.mxu0 0
      %3080 = vmatpush1.bf16.msra.mxu0 %v3040
      %3081 = vmatprep.subr.bf16.mxu0 0
      %3082 = vmatpush1.bf16.msra.mxu0 %v3041
      %3083 = vmatprep.subr.bf16.mxu0 0
      %3084 = vmatpush1.bf16.msra.mxu0 %v3042
      %3085 = vmatprep.subr.bf16.mxu0 0
      %3086 = vmatpush1.bf16.msra.mxu0 %v3043
      %3087 = vmatprep.subr.bf16.mxu0 0
      %3088 = vmatpush1.bf16.msra.mxu0 %v3044
      %3089 = vmatprep.subr.bf16.mxu0 0
      %3090 = vmatpush1.bf16.msra.mxu0 %v3045
      %3091 = vmatprep.subr.bf16.mxu0 0
      %3092 = vmatpush1.bf16.msra.mxu0 %v3046
      %3093 = vmatprep.subr.bf16.mxu0 0
      %3094 = vmatpush1.bf16.msra.mxu0 %v3047
      %3095 = vmatprep.subr.bf16.mxu0 0
      %3096 = vmatpush1.bf16.msra.mxu0 %v3048
      %3097 = vmatprep.mubr.bf16.mxu0 %v2966
      %3098 = vmatmul.mubr.bf16.gmra.mrb[0].mxu0 %v2965
      %v3099 = vpop.f32.mrb[0].mxu0
      %v3100 = vadd.f32 0.0, %v3099
      %v3101 = vpop.f32.mrb[0].mxu0
      %v3102 = vpop.f32.mrb[0].mxu0
      %v3103 = vpop.f32.mrb[0].mxu0
      %3104 = vdwg.mxu0
      %v3105 = vadd.f32 %v2931, %v3100
      %s3106 = scalar_lea.vmem %s3, 1920
      %v3107 = vld [vmem:[%s3106] sm:$0xf]
      %v3108 = vld [vmem:[%s3106 + $0x4] sm:$0xf]
      %v3109 = vld [vmem:[%s3106 + $0x8] sm:$0xf]
      %v3110 = vld [vmem:[%s3106 + $0xc] sm:$0xf]
      %v3111 = vld [vmem:[%s3106 + $0x10] sm:$0xf]
      %v3112 = vld [vmem:[%s3106 + $0x14] sm:$0xf]
      %v3113 = vld [vmem:[%s3106 + $0x18] sm:$0xf]
      %v3114 = vld [vmem:[%s3106 + $0x1c] sm:$0xf]
      %v3115 = vld [vmem:[%s3106 + $0x20] sm:$0xf]
      %v3116 = vld [vmem:[%s3106 + $0x24] sm:$0xf]
      %v3117 = vld [vmem:[%s3106 + $0x28] sm:$0xf]
      %v3118 = vld [vmem:[%s3106 + $0x2c] sm:$0xf]
      %v3119 = vld [vmem:[%s3106 + $0x30] sm:$0xf]
      %v3120 = vld [vmem:[%s3106 + $0x34] sm:$0xf]
      %v3121 = vld [vmem:[%s3106 + $0x38] sm:$0xf]
      %v3122 = vld [vmem:[%s3106 + $0x3c] sm:$0xf]
      %v3123 = vld [vmem:[%s3106 + $0x40] sm:$0xf]
      %v3124 = vld [vmem:[%s3106 + $0x44] sm:$0xf]
      %v3125 = vld [vmem:[%s3106 + $0x48] sm:$0xf]
      %v3126 = vld [vmem:[%s3106 + $0x4c] sm:$0xf]
      %v3127 = vld [vmem:[%s3106 + $0x50] sm:$0xf]
      %v3128 = vld [vmem:[%s3106 + $0x54] sm:$0xf]
      %v3129 = vld [vmem:[%s3106 + $0x58] sm:$0xf]
      %v3130 = vld [vmem:[%s3106 + $0x5c] sm:$0xf]
      %v3131 = vld [vmem:[%s3106 + $0x60] sm:$0xf]
      %v3132 = vld [vmem:[%s3106 + $0x64] sm:$0xf]
      %v3133 = vld [vmem:[%s3106 + $0x68] sm:$0xf]
      %v3134 = vld [vmem:[%s3106 + $0x6c] sm:$0xf]
      %v3135 = vld [vmem:[%s3106 + $0x70] sm:$0xf]
      %v3136 = vld [vmem:[%s3106 + $0x74] sm:$0xf]
      %v3137 = vld [vmem:[%s3106 + $0x78] sm:$0xf]
      %v3138 = vld [vmem:[%s3106 + $0x7c] sm:$0xf]
      %v3139 = vrot.slane %v2090, 3
      %v3140 = vrot.slane %v2093, 3
      %v3175 = vunpack.c.l.b16 %v3107
      %v3176 = vunpack.c.l.b16 %v3108
      %v3177 = vunpack.c.l.b16 %v3109
      %v3178 = vunpack.c.l.b16 %v3110
      %v3179 = vunpack.c.l.b16 %v3111
      %v3180 = vunpack.c.l.b16 %v3112
      %v3181 = vunpack.c.l.b16 %v3113
      %v3182 = vunpack.c.l.b16 %v3114
      %v3183 = vunpack.c.l.b16 %v3115
      %v3184 = vunpack.c.l.b16 %v3116
      %v3185 = vunpack.c.l.b16 %v3117
      %v3186 = vunpack.c.l.b16 %v3118
      %v3187 = vunpack.c.l.b16 %v3119
      %v3188 = vunpack.c.l.b16 %v3120
      %v3189 = vunpack.c.l.b16 %v3121
      %v3190 = vunpack.c.l.b16 %v3122
      %v3191 = vunpack.c.l.b16 %v3123
      %v3192 = vunpack.c.l.b16 %v3124
      %v3193 = vunpack.c.l.b16 %v3125
      %v3194 = vunpack.c.l.b16 %v3126
      %v3195 = vunpack.c.l.b16 %v3127
      %v3196 = vunpack.c.l.b16 %v3128
      %v3197 = vunpack.c.l.b16 %v3129
      %v3198 = vunpack.c.l.b16 %v3130
      %v3199 = vunpack.c.l.b16 %v3131
      %v3200 = vunpack.c.l.b16 %v3132
      %v3201 = vunpack.c.l.b16 %v3133
      %v3202 = vunpack.c.l.b16 %v3134
      %v3203 = vunpack.c.l.b16 %v3135
      %v3204 = vunpack.c.l.b16 %v3136
      %v3205 = vunpack.c.l.b16 %v3137
      %v3206 = vunpack.c.l.b16 %v3138
      %v3207 = vpack.c.b16 %v3176, %v3175
      %v3208 = vpack.c.b16 %v3178, %v3177
      %v3209 = vpack.c.b16 %v3180, %v3179
      %v3210 = vpack.c.b16 %v3182, %v3181
      %v3211 = vpack.c.b16 %v3184, %v3183
      %v3212 = vpack.c.b16 %v3186, %v3185
      %v3213 = vpack.c.b16 %v3188, %v3187
      %v3214 = vpack.c.b16 %v3190, %v3189
      %v3215 = vpack.c.b16 %v3192, %v3191
      %v3216 = vpack.c.b16 %v3194, %v3193
      %v3217 = vpack.c.b16 %v3196, %v3195
      %v3218 = vpack.c.b16 %v3198, %v3197
      %v3219 = vpack.c.b16 %v3200, %v3199
      %v3220 = vpack.c.b16 %v3202, %v3201
      %v3221 = vpack.c.b16 %v3204, %v3203
      %v3222 = vpack.c.b16 %v3206, %v3205
      %3239 = vmatprep.subr.bf16.mxu0 0
      %3240 = vmatpush1.bf16.msra.mxu0 %v3207
      %3241 = vmatprep.subr.bf16.mxu0 0
      %3242 = vmatpush1.bf16.msra.mxu0 %v3208
      %3243 = vmatprep.subr.bf16.mxu0 0
      %3244 = vmatpush1.bf16.msra.mxu0 %v3209
      %3245 = vmatprep.subr.bf16.mxu0 0
      %3246 = vmatpush1.bf16.msra.mxu0 %v3210
      %3247 = vmatprep.subr.bf16.mxu0 0
      %3248 = vmatpush1.bf16.msra.mxu0 %v3211
      %3249 = vmatprep.subr.bf16.mxu0 0
      %3250 = vmatpush1.bf16.msra.mxu0 %v3212
      %3251 = vmatprep.subr.bf16.mxu0 0
      %3252 = vmatpush1.bf16.msra.mxu0 %v3213
      %3253 = vmatprep.subr.bf16.mxu0 0
      %3254 = vmatpush1.bf16.msra.mxu0 %v3214
      %3255 = vmatprep.subr.bf16.mxu0 0
      %3256 = vmatpush1.bf16.msra.mxu0 %v3215
      %3257 = vmatprep.subr.bf16.mxu0 0
      %3258 = vmatpush1.bf16.msra.mxu0 %v3216
      %3259 = vmatprep.subr.bf16.mxu0 0
      %3260 = vmatpush1.bf16.msra.mxu0 %v3217
      %3261 = vmatprep.subr.bf16.mxu0 0
      %3262 = vmatpush1.bf16.msra.mxu0 %v3218
      %3263 = vmatprep.subr.bf16.mxu0 0
      %3264 = vmatpush1.bf16.msra.mxu0 %v3219
      %3265 = vmatprep.subr.bf16.mxu0 0
      %3266 = vmatpush1.bf16.msra.mxu0 %v3220
      %3267 = vmatprep.subr.bf16.mxu0 0
      %3268 = vmatpush1.bf16.msra.mxu0 %v3221
      %3269 = vmatprep.subr.bf16.mxu0 0
      %3270 = vmatpush1.bf16.msra.mxu0 %v3222
      %3271 = vmatprep.mubr.bf16.mxu0 %v3140
      %3272 = vmatmul.mubr.bf16.gmra.mrb[0].mxu0 %v3139
      %v3273 = vpop.f32.mrb[0].mxu0
      %v3274 = vadd.f32 0.0, %v3273
      %v3275 = vpop.f32.mrb[0].mxu0
      %v3276 = vpop.f32.mrb[0].mxu0
      %v3277 = vpop.f32.mrb[0].mxu0
      %3278 = vdwg.mxu0
      %v3279 = vadd.f32 %v3105, %v3274
      %v3280 = vld [vmem:[%s5] sm:$0x1]
      %v3281 = vtanh.pop %v3279
      %v3282 = vmul.f32 %v3280, %v3281
      %v3283 = vpack.c.bf16 %v3282, %v3282
      %v3284 = vld [vmem:[%s6] sm:$0xff]
      %v3285 = vld [vmem:[%s6 + $0x8] sm:$0xf]
      %v3286 = vld [vmem:[%s6 + $0xc] sm:$0xff]
      %v3287 = vld [vmem:[%s6 + $0x14] sm:$0xf]
      %v3288 = vld [vmem:[%s6 + $0x18] sm:$0xff]
      %v3289 = vld [vmem:[%s6 + $0x20] sm:$0xf]
      %v3290 = vld [vmem:[%s6 + $0x24] sm:$0xff]
      %v3291 = vld [vmem:[%s6 + $0x2c] sm:$0xf]
      %v3292 = vld [vmem:[%s6 + $0x30] sm:$0xff]
      %v3293 = vld [vmem:[%s6 + $0x38] sm:$0xf]
      %v3294 = vld [vmem:[%s6 + $0x3c] sm:$0xff]
      %v3295 = vld [vmem:[%s6 + $0x44] sm:$0xf]
      %v3296 = vld [vmem:[%s6 + $0x48] sm:$0xff]
      %v3297 = vld [vmem:[%s6 + $0x50] sm:$0xf]
      %v3298 = vld [vmem:[%s6 + $0x54] sm:$0xff]
      %v3299 = vld [vmem:[%s6 + $0x5c] sm:$0xf]
      %v3300 = vld [vmem:[%s6 + $0x60] sm:$0xff]
      %v3301 = vld [vmem:[%s6 + $0x68] sm:$0xf]
      %v3302 = vld [vmem:[%s6 + $0x6c] sm:$0xff]
      %v3303 = vld [vmem:[%s6 + $0x74] sm:$0xf]
      %v3304 = vld [vmem:[%s6 + $0x78] sm:$0xff]
      %v3305 = vld [vmem:[%s6 + $0x80] sm:$0xf]
      %v3306 = vld [vmem:[%s6 + $0x84] sm:$0xff]
      %v3307 = vld [vmem:[%s6 + $0x8c] sm:$0xf]
      %v3308 = vld [vmem:[%s6 + $0x90] sm:$0xff]
      %v3309 = vld [vmem:[%s6 + $0x98] sm:$0xf]
      %v3310 = vld [vmem:[%s6 + $0x9c] sm:$0xff]
      %v3311 = vld [vmem:[%s6 + $0xa4] sm:$0xf]
      %v3312 = vld [vmem:[%s6 + $0xa8] sm:$0xff]
      %v3313 = vld [vmem:[%s6 + $0xb0] sm:$0xf]
      %v3314 = vld [vmem:[%s6 + $0xb4] sm:$0xff]
      %v3315 = vld [vmem:[%s6 + $0xbc] sm:$0xf]
      %v3316 = vld [vmem:[%s7] sm:$0x7]
      %v3349 = vunpack.c.l.b16 %v3284
      %v3350 = vunpack.c.h.b16 %v3284
      %v3351 = vunpack.c.l.b16 %v3285
      %v3352 = vunpack.c.l.b16 %v3286
      %v3353 = vunpack.c.h.b16 %v3286
      %v3354 = vunpack.c.l.b16 %v3287
      %v3355 = vunpack.c.l.b16 %v3288
      %v3356 = vunpack.c.h.b16 %v3288
      %v3357 = vunpack.c.l.b16 %v3289
      %v3358 = vunpack.c.l.b16 %v3290
      %v3359 = vunpack.c.h.b16 %v3290
      %v3360 = vunpack.c.l.b16 %v3291
      %v3361 = vunpack.c.l.b16 %v3292
      %v3362 = vunpack.c.h.b16 %v3292
      %v3363 = vunpack.c.l.b16 %v3293
      %v3364 = vunpack.c.l.b16 %v3294
      %v3365 = vunpack.c.h.b16 %v3294
      %v3366 = vunpack.c.l.b16 %v3295
      %v3367 = vunpack.c.l.b16 %v3296
      %v3368 = vunpack.c.h.b16 %v3296
      %v3369 = vunpack.c.l.b16 %v3297
      %v3370 = vunpack.c.l.b16 %v3298
      %v3371 = vunpack.c.h.b16 %v3298
      %v3372 = vunpack.c.l.b16 %v3299
      %v3373 = vunpack.c.l.b16 %v3300
      %v3374 = vunpack.c.h.b16 %v3300
      %v3375 = vunpack.c.l.b16 %v3301
      %v3376 = vunpack.c.l.b16 %v3302
      %v3377 = vunpack.c.h.b16 %v3302
      %v3378 = vunpack.c.l.b16 %v3303
      %v3379 = vunpack.c.l.b16 %v3304
      %v3380 = vunpack.c.h.b16 %v3304
      %v3381 = vunpack.c.l.b16 %v3305
      %v3382 = vunpack.c.l.b16 %v3306
      %v3383 = vunpack.c.h.b16 %v3306
      %v3384 = vunpack.c.l.b16 %v3307
      %v3385 = vunpack.c.l.b16 %v3308
      %v3386 = vunpack.c.h.b16 %v3308
      %v3387 = vunpack.c.l.b16 %v3309
      %v3388 = vunpack.c.l.b16 %v3310
      %v3389 = vunpack.c.h.b16 %v3310
      %v3390 = vunpack.c.l.b16 %v3311
      %v3391 = vunpack.c.l.b16 %v3312
      %v3392 = vunpack.c.h.b16 %v3312
      %v3393 = vunpack.c.l.b16 %v3313
      %v3394 = vunpack.c.l.b16 %v3314
      %v3395 = vunpack.c.h.b16 %v3314
      %v3396 = vunpack.c.l.b16 %v3315
      %v3397 = vpack.c.b16 %v3352, %v3349
      %v3398 = vpack.c.b16 %v3353, %v3350
      %v3399 = vpack.c.b16 %v3354, %v3351
      %v3400 = vpack.c.b16 %v3358, %v3355
      %v3401 = vpack.c.b16 %v3359, %v3356
      %v3402 = vpack.c.b16 %v3360, %v3357
      %v3403 = vpack.c.b16 %v3364, %v3361
      %v3404 = vpack.c.b16 %v3365, %v3362
      %v3405 = vpack.c.b16 %v3366, %v3363
      %v3406 = vpack.c.b16 %v3370, %v3367
      %v3407 = vpack.c.b16 %v3371, %v3368
      %v3408 = vpack.c.b16 %v3372, %v3369
      %v3409 = vpack.c.b16 %v3376, %v3373
      %v3410 = vpack.c.b16 %v3377, %v3374
      %v3411 = vpack.c.b16 %v3378, %v3375
      %v3412 = vpack.c.b16 %v3382, %v3379
      %v3413 = vpack.c.b16 %v3383, %v3380
      %v3414 = vpack.c.b16 %v3384, %v3381
      %v3415 = vpack.c.b16 %v3388, %v3385
      %v3416 = vpack.c.b16 %v3389, %v3386
      %v3417 = vpack.c.b16 %v3390, %v3387
      %v3418 = vpack.c.b16 %v3394, %v3391
      %v3419 = vpack.c.b16 %v3395, %v3392
      %v3420 = vpack.c.b16 %v3396, %v3393
      %v3446 = vlaneseq
      %v3447 = vshrl.u32 %v3446, 7
      %v3448 = vsub.s32 0, %v3447
      %v3449 = vrot.slane %v3316, %v3448
      %v3450 = vlaneseq
      %v3451 = vshrl.u32 %v3450, 7
      %v3452 = vsub.s32 1, %v3451
      %v3453 = vrot.slane %v3316, %v3452
      %v3454 = vlaneseq
      %v3455 = vshrl.u32 %v3454, 7
      %v3456 = vsub.s32 2, %v3455
      %v3457 = vrot.slane %v3316, %v3456
      %3461 = vmatprep.subr.bf16.mxu0 %v3398
      %3462 = vmatpush1.bf16.msra.mxu0 %v3397
      %3463 = vmatprep.subr.bf16.mxu0 %v3401
      %3464 = vmatpush1.bf16.msra.mxu0 %v3400
      %3465 = vmatprep.subr.bf16.mxu0 %v3404
      %3466 = vmatpush1.bf16.msra.mxu0 %v3403
      %3467 = vmatprep.subr.bf16.mxu0 %v3407
      %3468 = vmatpush1.bf16.msra.mxu0 %v3406
      %3469 = vmatprep.subr.bf16.mxu0 %v3410
      %3470 = vmatpush1.bf16.msra.mxu0 %v3409
      %3471 = vmatprep.subr.bf16.mxu0 %v3413
      %3472 = vmatpush1.bf16.msra.mxu0 %v3412
      %3473 = vmatprep.subr.bf16.mxu0 %v3416
      %3474 = vmatpush1.bf16.msra.mxu0 %v3415
      %3475 = vmatprep.subr.bf16.mxu0 %v3419
      %3476 = vmatpush1.bf16.msra.mxu0 %v3418
      %3477 = vmatprep.subr.bf16.mxu0 0
      %3478 = vmatpush1.bf16.msra.mxu0 0
      %3479 = vmatprep.subr.bf16.mxu0 0
      %3480 = vmatpush1.bf16.msra.mxu0 0
      %3481 = vmatprep.subr.bf16.mxu0 0
      %3482 = vmatpush1.bf16.msra.mxu0 0
      %3483 = vmatprep.subr.bf16.mxu0 0
      %3484 = vmatpush1.bf16.msra.mxu0 0
      %3485 = vmatprep.subr.bf16.mxu0 0
      %3486 = vmatpush1.bf16.msra.mxu0 0
      %3487 = vmatprep.subr.bf16.mxu0 0
      %3488 = vmatpush1.bf16.msra.mxu0 0
      %3489 = vmatprep.subr.bf16.mxu0 0
      %3490 = vmatpush1.bf16.msra.mxu0 0
      %3491 = vmatprep.subr.bf16.mxu0 0
      %3492 = vmatpush1.bf16.msra.mxu0 0
      %3493 = vmatprep.mubr.bf16.mxu0 0
      %3494 = vmatmul.mubr.bf16.gmra.mrb[0].mxu0 %v3283
      %v3495 = vpop.f32.mrb[0].mxu0
      %v3496 = vadd.f32 %v3449, %v3495
      %v3497 = vpop.f32.mrb[0].mxu0
      %v3498 = vadd.f32 %v3453, %v3497
      %v3499 = vpop.f32.mrb[0].mxu0
      %v3500 = vpop.f32.mrb[0].mxu0
      %3501 = vdwg.mxu0
      %3502 = vmatprep.subr.bf16.mxu0 0
      %3503 = vmatpush1.bf16.msra.mxu0 %v3399
      %3504 = vmatprep.subr.bf16.mxu0 0
      %3505 = vmatpush1.bf16.msra.mxu0 %v3402
      %3506 = vmatprep.subr.bf16.mxu0 0
      %3507 = vmatpush1.bf16.msra.mxu0 %v3405
      %3508 = vmatprep.subr.bf16.mxu0 0
      %3509 = vmatpush1.bf16.msra.mxu0 %v3408
      %3510 = vmatprep.subr.bf16.mxu0 0
      %3511 = vmatpush1.bf16.msra.mxu0 %v3411
      %3512 = vmatprep.subr.bf16.mxu0 0
      %3513 = vmatpush1.bf16.msra.mxu0 %v3414
      %3514 = vmatprep.subr.bf16.mxu0 0
      %3515 = vmatpush1.bf16.msra.mxu0 %v3417
      %3516 = vmatprep.subr.bf16.mxu0 0
      %3517 = vmatpush1.bf16.msra.mxu0 %v3420
      %3518 = vmatprep.subr.bf16.mxu0 0
      %3519 = vmatpush1.bf16.msra.mxu0 0
      %3520 = vmatprep.subr.bf16.mxu0 0
      %3521 = vmatpush1.bf16.msra.mxu0 0
      %3522 = vmatprep.subr.bf16.mxu0 0
      %3523 = vmatpush1.bf16.msra.mxu0 0
      %3524 = vmatprep.subr.bf16.mxu0 0
      %3525 = vmatpush1.bf16.msra.mxu0 0
      %3526 = vmatprep.subr.bf16.mxu0 0
      %3527 = vmatpush1.bf16.msra.mxu0 0
      %3528 = vmatprep.subr.bf16.mxu0 0
      %3529 = vmatpush1.bf16.msra.mxu0 0
      %3530 = vmatprep.subr.bf16.mxu0 0
      %3531 = vmatpush1.bf16.msra.mxu0 0
      %3532 = vmatprep.subr.bf16.mxu0 0
      %3533 = vmatpush1.bf16.msra.mxu0 0
      %3534 = vmatprep.mubr.bf16.mxu0 0
      %3535 = vmatmul.mubr.bf16.gmra.mrb[0].mxu0 %v3283
      %v3536 = vpop.f32.mrb[0].mxu0
      %v3537 = vadd.f32 %v3457, %v3536
      %v3538 = vpop.f32.mrb[0].mxu0
      %v3539 = vpop.f32.mrb[0].mxu0
      %v3540 = vpop.f32.mrb[0].mxu0
      %3541 = vdwg.mxu0
      %v3544 = vcombine.low %v3496, %v3498
      %v3546 = vunpack.c.l.s4 1966171168
      %v3547 = vunpack.c.0.s8 %v3546
      %v3548 = vlaneseq
      %v3549 = vshrl.u32 %v3548, 7
      %v3550 = vsub.s32 %v3547, %v3549
      %v3551 = vrot.slane %v3544, %v3550
      %v3553 = vunpack.c.l.s4 1966171168
      %v3554 = vunpack.c.0.s8 %v3553
      %v3555 = vlaneseq
      %v3556 = vshrl.u32 %v3555, 7
      %v3557 = vsub.s32 %v3554, %v3556
      %v3558 = vrot.slane %v3551, %v3557
      %v3560 = vlaneseq
      %vm3561 = vcmp.ge.s32.totalorder %v3560, 0
      %vm3562 = vcmp.lt.s32.totalorder %v3560, 256
      %vm3563 = vmand %vm3561, %vm3562
      %3564 = vst.msk [vmem:[%s336] sm:$0x3] %vm3563, %v3558
      %v3565 = vtanh.pop %v3537
      %vm3566 = vcmask 0
      %3567 = vst.msk [vmem:[%s339] sm:$0x1] %vm3566, %v3565
      %p3568 = scmp.lt.s32.totalorder %s21, 1
      %s3569 = scalar_select %p3568, %s21, 1
      %s3570 = smul.addr %s3569, 2
      %s3571 = scalar_lea.vmem %s8, %s3570
      %p3572 = scmp.lt.s32.totalorder %s21, 1
      %s3573 = scalar_select %p3572, %s21, 1
      %s3574 = scalar_lea.vmem %s9, %s3573
      // Predicated region
      $region53: #{go_model_forward.1} parent=51 // pred_check
        %p3575 = pneg %p212
      $region54: #{go_model_forward.1} parent=51 // pred_check_branch
        %3577 = sbr.rel (%p3575) target = $region56
      $region55: #{go_model_forward.1} parent=51 // pred_region
        _
      $region56: #{go_model_forward.1} parent=51 // pred_fallthru
        _
      // Predicated region
      $region57: #{go_model_forward.1} parent=51 // pred_check
        %p3578 = pneg %p238
      $region58: #{go_model_forward.1} parent=51 // pred_check_branch
        %3580 = sbr.rel (%p3578) target = $region60
      $region59: #{go_model_forward.1} parent=51 // pred_region
        _
      $region60: #{go_model_forward.1} parent=51 // pred_fallthru
        _
    $region52: #{go_model_forward.1} parent=5 // pred_fallthru
      _
    %p3581 = scmp.le.s32.totalorder 2, %s16
    // Predicated region
    $region61: #{go_model_forward.1} parent=5 // pred_check
      %p3582 = pneg %p3581
    $region62: #{go_model_forward.1} parent=5 // pred_check_branch
      %3584 = sbr.rel (%p3582) target = $region64
    $region63: #{go_model_forward.1} parent=5 // pred_region
      %s3585 = ssub.s32 %s16, 2
      // Predicated region
      $region65: #{go_model_forward.1} parent=63 // pred_check
        %p3586 = pneg %p218
      $region66: #{go_model_forward.1} parent=63 // pred_check_branch
        %3588 = sbr.rel (%p3586) target = $region68
      $region67: #{go_model_forward.1} parent=63 // pred_region
        %p3589 = scmp.lt.s32.totalorder %s22, 1
        %s3590 = scalar_select %p3589, %s22, 1
        %s3591 = smul.addr %s3590, 2
        %s3592 = scalar_lea.vmem %s8, %s3591
      $region68: #{go_model_forward.1} parent=63 // pred_fallthru
        _
      // Predicated region
      $region69: #{go_model_forward.1} parent=63 // pred_check
        %p3593 = pneg %p244
      $region70: #{go_model_forward.1} parent=63 // pred_check_branch
        %3595 = sbr.rel (%p3593) target = $region72
      $region71: #{go_model_forward.1} parent=63 // pred_region
        %p3596 = scmp.lt.s32.totalorder %s22, 1
        %s3597 = scalar_select %p3596, %s22, 1
        %s3598 = scalar_lea.vmem %s9, %s3597
      $region72: #{go_model_forward.1} parent=63 // pred_fallthru
        _
    $region64: #{go_model_forward.1} parent=5 // pred_fallthru
      _
  $region6: #{go_model_forward.1} parent=0 // loop_footer
    %s20 = sadd.s32 1, %s16
  $region7: #{go_model_forward.1} parent=0 // loop_footer_branch
    %15 = sbr.rel target = $region3
  $region8: #{go_model_forward.1} parent=0 // loop_exit
    _

</llo_original>
